<compile_context>
chip_gen: v7x
topology: tpu7x:2x2x1
jax: 0.10.0
libtpu: 0.0.40
codegen_flags: <defaults>
</compile_context>

<pallas_src>
import math
import functools

import jax
import jax.numpy as jnp
from jax.experimental import pallas as pl
from jax.experimental.pallas import tpu as pltpu


# ------------------------------ Pallas kernel -------------------------------

def _make_isab_kernel(num_heads):
    def kernel(x_ref, q0_ref, wx_ref, bx_ref, wh_ref, bh_ref, o_ref):
        Bt, N, dim_in = x_ref.shape
        num_inds, dim_V = q0_ref.shape
        ds = dim_V // num_heads
        scale = 1.0 / math.sqrt(dim_V)

        def softmax_last(s):
            s = s - jnp.max(s, axis=-1, keepdims=True)
            e = jnp.exp(s)
            # approx=False keeps full accuracy (approx=True risks the 2e-3 test
            # tolerance for only a marginal EUP win at this size).
            return e * pl.reciprocal(jnp.sum(e, axis=-1, keepdims=True),
                                     approx=False)

        def attend(qh, kh, vh):
            # qh: (Bt, Lq, ds), kh/vh: (Bt, Lk, ds) -- Bt-batched MXU matmuls.
            s = jnp.einsum("bqd,bkd->bqk", qh, kh,
                           preferred_element_type=jnp.float32) * scale
            a = softmax_last(s)
            return qh + jnp.einsum("bqk,bkd->bqd", a, vh,
                                   preferred_element_type=jnp.float32)

        # ---- fused input projections: X @ [Wk0 | Wv0 | Wq1] -----------------
        x = x_ref[...].astype(jnp.float32).reshape(Bt * N, dim_in)
        px = jnp.dot(x, wx_ref[...],
                     preferred_element_type=jnp.float32) + bx_ref[...]
        px = px.reshape(Bt, N, 3 * dim_V)
        k0 = px[:, :, 0 * dim_V:1 * dim_V]
        v0 = px[:, :, 1 * dim_V:2 * dim_V]
        q1 = px[:, :, 2 * dim_V:3 * dim_V]

        # Packed weight slab: [Wo0 | Wk1 | Wv1 | Wo1] and matching biases.
        wh = wh_ref[...]
        bh = bh_ref[...]
        wo0 = wh[:, 0 * dim_V:1 * dim_V]
        bo0 = bh[:, 0 * dim_V:1 * dim_V]
        wkv1 = wh[:, 1 * dim_V:3 * dim_V]
        bkv1 = bh[:, 1 * dim_V:3 * dim_V]
        wo1 = wh[:, 3 * dim_V:4 * dim_V]
        bo1 = bh[:, 3 * dim_V:4 * dim_V]

        # ---- MAB0: H = MAB(I, X); Q0 = I@Wq0 + bq0 precomputed in wrapper ---
        q0 = q0_ref[...]
        heads0 = []
        for h in range(num_heads):
            lo = h * ds
            q0h = jnp.broadcast_to(q0[None, :, lo:lo + ds],
                                   (Bt, num_inds, ds))
            heads0.append(attend(q0h,
                                 k0[:, :, lo:lo + ds],
                                 v0[:, :, lo:lo + ds]))
        o0 = jnp.concatenate(heads0, axis=-1).reshape(Bt * num_inds, dim_V)
        hmat = o0 + jnp.maximum(
            jnp.dot(o0, wo0, preferred_element_type=jnp.float32) + bo0, 0.0)

        # ---- MAB1: Y = MAB(X, H) ---------------------------------------------
        kv1 = jnp.dot(hmat, wkv1,
                      preferred_element_type=jnp.float32) + bkv1
        kv1 = kv1.reshape(Bt, num_inds, 2 * dim_V)
        k1 = kv1[:, :, :dim_V]
        v1 = kv1[:, :, dim_V:]
        heads1 = []
        for h in range(num_heads):
            lo = h * ds
            heads1.append(attend(q1[:, :, lo:lo + ds],
                                 k1[:, :, lo:lo + ds],
                                 v1[:, :, lo:lo + ds]))
        o1 = jnp.concatenate(heads1, axis=-1).reshape(Bt * N, dim_V)
        y = o1 + jnp.maximum(
            jnp.dot(o1, wo1, preferred_element_type=jnp.float32) + bo1, 0.0)

        o_ref[...] = y.reshape(Bt, N, dim_V).astype(o_ref.dtype)

    return kernel


# ------------------------------ Module wrapper -------------------------------

def init_isab_params(key, dim_in, dim_out, num_heads, num_inds,
                     dtype=jnp.float32):
    """Deterministic parameters. Linear weights stored as (in, out) so the
    kernel computes x @ W + b (equivalent to PyTorch's x @ W^T + b)."""
    del num_heads  # head count does not change parameter shapes

    def linear(k, fan_in, fan_out):
        kw, kb = jax.random.split(k)
        bound = 1.0 / math.sqrt(fan_in)
        w = jax.random.uniform(kw, (fan_in, fan_out),
                               minval=-bound, maxval=bound, dtype=dtype)
        b = jax.random.uniform(kb, (1, fan_out),
                               minval=-bound, maxval=bound, dtype=dtype)
        return w, b

    def mab_params(k, dim_Q, dim_K, dim_V):
        kq, kk, kv, ko = jax.random.split(k, 4)
        wq, bq = linear(kq, dim_Q, dim_V)
        wk, bk = linear(kk, dim_K, dim_V)
        wv, bv = linear(kv, dim_K, dim_V)
        wo, bo = linear(ko, dim_V, dim_V)
        return dict(wq=wq, bq=bq, wk=wk, bk=bk, wv=wv, bv=bv, wo=wo, bo=bo)

    k_i, k0, k1 = jax.random.split(key, 3)
    a = math.sqrt(6.0 / (num_inds + dim_out))  # xavier_uniform for I
    I = jax.random.uniform(k_i, (num_inds, dim_out), minval=-a, maxval=a,
                           dtype=dtype)
    return dict(I=I,
                mab0=mab_params(k0, dim_out, dim_in, dim_out),
                mab1=mab_params(k1, dim_in, dim_out, dim_out))


def _pick_batch_block(B, N, target_rows=256):
    """Largest divisor of B such that Bt*N <= target_rows (M fill for the MXU)."""
    cap = max(1, target_rows // max(N, 1))
    bt = 1
    for d in range(1, B + 1):
        if B % d == 0 and d <= cap:
            bt = d
    return bt


@functools.partial(jax.jit, static_argnames=("num_heads",))
def isab_forward(x, params, *, num_heads):
    """ISAB.forward. x: (B, N, dim_in) -> (B, N, dim_out)."""
    B, N, dim_in = x.shape
    I = params["I"]
    num_inds, dim_V = I.shape
    m0, m1 = params["mab0"], params["mab1"]

    f32 = jnp.float32
    hi = jax.lax.Precision.HIGHEST
    # Batch-invariant Q projection of the inducing points (hoisted out of kernel).
    q0 = (jnp.dot(I.astype(f32), m0["wq"].astype(f32), precision=hi)
          + m0["bq"].astype(f32))                                   # (num_inds, dim_V)
    # Packed weight slabs (fewer kernel inputs / DMA descriptors, fused matmuls).
    wx = jnp.concatenate([m0["wk"], m0["wv"], m1["wq"]], axis=1).astype(f32)
    bx = jnp.concatenate([m0["bk"], m0["bv"], m1["bq"]], axis=1).astype(f32)
    wh = jnp.concatenate([m0["wo"], m1["wk"], m1["wv"], m1["wo"]],
                         axis=1).astype(f32)
    bh = jnp.concatenate([m0["bo"], m1["bk"], m1["bv"], m1["bo"]],
                         axis=1).astype(f32)

    Bt = _pick_batch_block(B, N)
    grid = (B // Bt,)
    kernel = _make_isab_kernel(num_heads)

    def full(arr):
        return pl.BlockSpec(arr.shape, lambda g: (0,) * arr.ndim)

    return pl.pallas_call(
        kernel,
        out_shape=jax.ShapeDtypeStruct((B, N, dim_V), x.dtype),
        grid_spec=pltpu.PrefetchScalarGridSpec(
            num_scalar_prefetch=0,
            grid=grid,
            in_specs=[pl.BlockSpec((Bt, N, dim_in), lambda g: (g, 0, 0)),
                      full(q0), full(wx), full(bx), full(wh), full(bh)],
            out_specs=pl.BlockSpec((Bt, N, dim_V), lambda g: (g, 0, 0)),
        ),
        compiler_params=pltpu.CompilerParams(
            dimension_semantics=("parallel",)),
    )(x, q0, wx, bx, wh, bh)


# ------------------------------ Pure-JAX reference ---------------------------

_HIGHEST = jax.lax.Precision.HIGHEST


def _mab_ref(Qin, Kin, p, num_heads, dim_V):
    Q = jnp.einsum("bnd,dk->bnk", Qin, p["wq"], precision=_HIGHEST) + p["bq"]
    K = jnp.einsum("bnd,dk->bnk", Kin, p["wk"], precision=_HIGHEST) + p["bk"]
    V = jnp.einsum("bnd,dk->bnk", Kin, p["wv"], precision=_HIGHEST) + p["bv"]
    Q_ = jnp.concatenate(jnp.split(Q, num_heads, axis=2), axis=0)
    K_ = jnp.concatenate(jnp.split(K, num_heads, axis=2), axis=0)
    V_ = jnp.concatenate(jnp.split(V, num_heads, axis=2), axis=0)
    A = jax.nn.softmax(
        jnp.einsum("bqd,bkd->bqk", Q_, K_, precision=_HIGHEST)
        / math.sqrt(dim_V), axis=2)
    O = jnp.concatenate(
        jnp.split(Q_ + jnp.einsum("bqk,bkd->bqd", A, V_, precision=_HIGHEST),
                  num_heads, axis=0), axis=2)
    return O + jax.nn.relu(
        jnp.einsum("bnd,dk->bnk", O, p["wo"], precision=_HIGHEST) + p["bo"])


def isab_ref(x, params, num_heads):
    I = params["I"]
    B = x.shape[0]
    Ib = jnp.broadcast_to(I[None], (B,) + I.shape)
    H = _mab_ref(Ib, x, params["mab0"], num_heads, I.shape[-1])
    return _mab_ref(x, H, params["mab1"], num_heads, I.shape[-1])


# ----------------------------------- main ------------------------------------

if __name__ == "__main__":
    key = jax.random.PRNGKey(0)
    k_x, k_p = jax.random.split(key)

    # Small shapes consistent with the module: batch=2, set size=8,
    # dim_in=4, dim_out(=dim_V)=32, num_heads=4, num_inds=16.
    B, N, dim_in = 2, 8, 4
    dim_out, num_heads, num_inds = 32, 4, 16

    x = jax.random.normal(k_x, (B, N, dim_in), dtype=jnp.float32)
    params = init_isab_params(k_p, dim_in, dim_out, num_heads, num_inds)

    out = isab_forward(x, params, num_heads=num_heads)
    out = jax.block_until_ready(out)

    ref = isab_ref(x, params, num_heads)
    assert out.shape == (B, N, dim_out)
    max_err = float(jnp.max(jnp.abs(out - ref)))
    assert jnp.allclose(out, ref, atol=2e-3, rtol=2e-3), max_err

    print("KERNEL_OK")
</pallas_src>

<mosaic_0001>
module attributes {stable_mosaic.version = 11 : i64} {
  func.func @kernel(%arg0: i32, %arg1: memref<2x8x4xf32, #tpu.memory_space<vmem>>, %arg2: memref<16x32xf32, #tpu.memory_space<vmem>>, %arg3: memref<4x96xf32, #tpu.memory_space<vmem>>, %arg4: memref<1x96xf32, #tpu.memory_space<vmem>>, %arg5: memref<32x128xf32, #tpu.memory_space<vmem>>, %arg6: memref<1x128xf32, #tpu.memory_space<vmem>>, %arg7: memref<2x8x32xf32, #tpu.memory_space<vmem>>) attributes {dimension_semantics = [#tpu.dimension_semantics<parallel>], iteration_bounds = array<i64: 1>, scalar_prefetch = 0 : i64, scratch_operands = 0 : i64, tpu.core_type = #tpu.core_type<tc>, window_params = [{transform_indices = @transform_0, window_bounds = array<i64: 2, 8, 4>}, {pipeline_mode = #tpu.pipeline_mode<synchronous>, transform_indices = @transform_1, window_bounds = array<i64: 16, 32>}, {pipeline_mode = #tpu.pipeline_mode<synchronous>, transform_indices = @transform_2, window_bounds = array<i64: 4, 96>}, {pipeline_mode = #tpu.pipeline_mode<synchronous>, transform_indices = @transform_3, window_bounds = array<i64: 1, 96>}, {pipeline_mode = #tpu.pipeline_mode<synchronous>, transform_indices = @transform_4, window_bounds = array<i64: 32, 128>}, {pipeline_mode = #tpu.pipeline_mode<synchronous>, transform_indices = @transform_5, window_bounds = array<i64: 1, 128>}, {transform_indices = @transform_6, window_bounds = array<i64: 2, 8, 32>}]} {
    %c0 = arith.constant 0 : index
    %c0_0 = arith.constant 0 : index
    %c0_1 = arith.constant 0 : index
    %0 = vector.load %arg1[%c0, %c0_0, %c0_1] : memref<2x8x4xf32, #tpu.memory_space<vmem>>, vector<2x8x4xf32>
    %1 = vector.shape_cast %0 : vector<2x8x4xf32> to vector<16x4xf32>
    %c0_2 = arith.constant 0 : index
    %c0_3 = arith.constant 0 : index
    %2 = vector.load %arg3[%c0_2, %c0_3] : memref<4x96xf32, #tpu.memory_space<vmem>>, vector<4x96xf32>
    %cst = arith.constant dense<0.000000e+00> : vector<16x96xf32>
    %3 = tpu.matmul %1, %2, %cst {dimension_numbers = #tpu.dot_dimension_numbers<[1], [0], [0], [1], [0, 0, 1, 1], [], []>} : vector<16x4xf32>, vector<4x96xf32>, vector<16x96xf32> -> vector<16x96xf32>
    %c0_4 = arith.constant 0 : index
    %c0_5 = arith.constant 0 : index
    %4 = vector.load %arg4[%c0_4, %c0_5] : memref<1x96xf32, #tpu.memory_space<vmem>>, vector<1x96xf32>
    %5 = vector.broadcast %4 : vector<1x96xf32> to vector<16x96xf32>
    %6 = arith.addf %3, %5 : vector<16x96xf32>
    %7 = vector.shape_cast %6 : vector<16x96xf32> to vector<2x8x96xf32>
    %8 = vector.extract_strided_slice %7 {offsets = [0, 0, 0], sizes = [2, 8, 32], strides = [1, 1, 1]} : vector<2x8x96xf32> to vector<2x8x32xf32>
    %9 = vector.extract_strided_slice %7 {offsets = [0, 0, 32], sizes = [2, 8, 32], strides = [1, 1, 1]} : vector<2x8x96xf32> to vector<2x8x32xf32>
    %10 = vector.extract_strided_slice %7 {offsets = [0, 0, 64], sizes = [2, 8, 32], strides = [1, 1, 1]} : vector<2x8x96xf32> to vector<2x8x32xf32>
    %c0_6 = arith.constant 0 : index
    %c0_7 = arith.constant 0 : index
    %11 = vector.load %arg5[%c0_6, %c0_7] : memref<32x128xf32, #tpu.memory_space<vmem>>, vector<32x128xf32>
    %c0_8 = arith.constant 0 : index
    %c0_9 = arith.constant 0 : index
    %12 = vector.load %arg6[%c0_8, %c0_9] : memref<1x128xf32, #tpu.memory_space<vmem>>, vector<1x128xf32>
    %13 = vector.extract_strided_slice %11 {offsets = [0, 0], sizes = [32, 32], strides = [1, 1]} : vector<32x128xf32> to vector<32x32xf32>
    %14 = vector.extract_strided_slice %12 {offsets = [0, 0], sizes = [1, 32], strides = [1, 1]} : vector<1x128xf32> to vector<1x32xf32>
    %15 = vector.extract_strided_slice %11 {offsets = [0, 32], sizes = [32, 64], strides = [1, 1]} : vector<32x128xf32> to vector<32x64xf32>
    %16 = vector.extract_strided_slice %12 {offsets = [0, 32], sizes = [1, 64], strides = [1, 1]} : vector<1x128xf32> to vector<1x64xf32>
    %17 = vector.extract_strided_slice %11 {offsets = [0, 96], sizes = [32, 32], strides = [1, 1]} : vector<32x128xf32> to vector<32x32xf32>
    %18 = vector.extract_strided_slice %12 {offsets = [0, 96], sizes = [1, 32], strides = [1, 1]} : vector<1x128xf32> to vector<1x32xf32>
    %c0_10 = arith.constant 0 : index
    %c0_11 = arith.constant 0 : index
    %19 = vector.load %arg2[%c0_10, %c0_11] : memref<16x32xf32, #tpu.memory_space<vmem>>, vector<16x32xf32>
    %20 = vector.extract_strided_slice %19 {offsets = [0, 0], sizes = [16, 8], strides = [1, 1]} : vector<16x32xf32> to vector<16x8xf32>
    %21 = vector.shape_cast %20 : vector<16x8xf32> to vector<1x16x8xf32>
    %22 = vector.shape_cast %21 : vector<1x16x8xf32> to vector<1x16x8xf32>
    %23 = vector.broadcast %22 : vector<1x16x8xf32> to vector<2x16x8xf32>
    %24 = vector.extract_strided_slice %8 {offsets = [0, 0, 0], sizes = [2, 8, 8], strides = [1, 1, 1]} : vector<2x8x32xf32> to vector<2x8x8xf32>
    %25 = vector.extract_strided_slice %9 {offsets = [0, 0, 0], sizes = [2, 8, 8], strides = [1, 1, 1]} : vector<2x8x32xf32> to vector<2x8x8xf32>
    "tpu.trace_start"() <{level = 10 : i32, message = "bqd,bkd->bqk"}> : () -> ()
    %cst_12 = arith.constant dense<0.000000e+00> : vector<2x16x8xf32>
    %26 = tpu.matmul %23, %24, %cst_12 {dimension_numbers = #tpu.dot_dimension_numbers<[2], [2], [1], [1], [0, 0, 0, 1, 1, 1], [0], [0]>} : vector<2x16x8xf32>, vector<2x8x8xf32>, vector<2x16x8xf32> -> vector<2x16x8xf32>
    "tpu.trace_stop"() : () -> ()
    %cst_13 = arith.constant 0.176776692 : f32
    %27 = vector.broadcast %cst_13 : f32 to vector<2x16x8xf32>
    %28 = arith.mulf %26, %27 : vector<2x16x8xf32>
    %cst_14 = arith.constant dense<0xFF800000> : vector<2x16xf32>
    %29 = vector.multi_reduction <maximumf>, %28, %cst_14 [2] : vector<2x16x8xf32> to vector<2x16xf32>
    %30 = vector.shape_cast %29 : vector<2x16xf32> to vector<2x16x1xf32>
    %31 = vector.broadcast %30 : vector<2x16x1xf32> to vector<2x16x8xf32>
    %32 = arith.subf %28, %31 : vector<2x16x8xf32>
    %33 = math.exp %32 : vector<2x16x8xf32>
    %cst_15 = arith.constant dense<0.000000e+00> : vector<2x16xf32>
    %34 = vector.multi_reduction <add>, %33, %cst_15 [2] : vector<2x16x8xf32> to vector<2x16xf32>
    %35 = vector.shape_cast %34 : vector<2x16xf32> to vector<2x16x1xf32>
    %36 = tpu.reciprocal %35 : vector<2x16x1xf32> -> vector<2x16x1xf32>
    %37 = vector.broadcast %36 : vector<2x16x1xf32> to vector<2x16x8xf32>
    %38 = arith.mulf %33, %37 : vector<2x16x8xf32>
    "tpu.trace_start"() <{level = 10 : i32, message = "bqk,bkd->bqd"}> : () -> ()
    %cst_16 = arith.constant dense<0.000000e+00> : vector<2x16x8xf32>
    %39 = tpu.matmul %38, %25, %cst_16 {dimension_numbers = #tpu.dot_dimension_numbers<[2], [1], [1], [2], [0, 0, 0, 1, 1, 2], [0], [0]>} : vector<2x16x8xf32>, vector<2x8x8xf32>, vector<2x16x8xf32> -> vector<2x16x8xf32>
    "tpu.trace_stop"() : () -> ()
    %40 = arith.addf %23, %39 : vector<2x16x8xf32>
    %41 = vector.extract_strided_slice %19 {offsets = [0, 8], sizes = [16, 8], strides = [1, 1]} : vector<16x32xf32> to vector<16x8xf32>
    %42 = vector.shape_cast %41 : vector<16x8xf32> to vector<1x16x8xf32>
    %43 = vector.shape_cast %42 : vector<1x16x8xf32> to vector<1x16x8xf32>
    %44 = vector.broadcast %43 : vector<1x16x8xf32> to vector<2x16x8xf32>
    %45 = vector.extract_strided_slice %8 {offsets = [0, 0, 8], sizes = [2, 8, 8], strides = [1, 1, 1]} : vector<2x8x32xf32> to vector<2x8x8xf32>
    %46 = vector.extract_strided_slice %9 {offsets = [0, 0, 8], sizes = [2, 8, 8], strides = [1, 1, 1]} : vector<2x8x32xf32> to vector<2x8x8xf32>
    "tpu.trace_start"() <{level = 10 : i32, message = "bqd,bkd->bqk"}> : () -> ()
    %cst_17 = arith.constant dense<0.000000e+00> : vector<2x16x8xf32>
    %47 = tpu.matmul %44, %45, %cst_17 {dimension_numbers = #tpu.dot_dimension_numbers<[2], [2], [1], [1], [0, 0, 0, 1, 1, 1], [0], [0]>} : vector<2x16x8xf32>, vector<2x8x8xf32>, vector<2x16x8xf32> -> vector<2x16x8xf32>
    "tpu.trace_stop"() : () -> ()
    %cst_18 = arith.constant 0.176776692 : f32
    %48 = vector.broadcast %cst_18 : f32 to vector<2x16x8xf32>
    %49 = arith.mulf %47, %48 : vector<2x16x8xf32>
    %cst_19 = arith.constant dense<0xFF800000> : vector<2x16xf32>
    %50 = vector.multi_reduction <maximumf>, %49, %cst_19 [2] : vector<2x16x8xf32> to vector<2x16xf32>
    %51 = vector.shape_cast %50 : vector<2x16xf32> to vector<2x16x1xf32>
    %52 = vector.broadcast %51 : vector<2x16x1xf32> to vector<2x16x8xf32>
    %53 = arith.subf %49, %52 : vector<2x16x8xf32>
    %54 = math.exp %53 : vector<2x16x8xf32>
    %cst_20 = arith.constant dense<0.000000e+00> : vector<2x16xf32>
    %55 = vector.multi_reduction <add>, %54, %cst_20 [2] : vector<2x16x8xf32> to vector<2x16xf32>
    %56 = vector.shape_cast %55 : vector<2x16xf32> to vector<2x16x1xf32>
    %57 = tpu.reciprocal %56 : vector<2x16x1xf32> -> vector<2x16x1xf32>
    %58 = vector.broadcast %57 : vector<2x16x1xf32> to vector<2x16x8xf32>
    %59 = arith.mulf %54, %58 : vector<2x16x8xf32>
    "tpu.trace_start"() <{level = 10 : i32, message = "bqk,bkd->bqd"}> : () -> ()
    %cst_21 = arith.constant dense<0.000000e+00> : vector<2x16x8xf32>
    %60 = tpu.matmul %59, %46, %cst_21 {dimension_numbers = #tpu.dot_dimension_numbers<[2], [1], [1], [2], [0, 0, 0, 1, 1, 2], [0], [0]>} : vector<2x16x8xf32>, vector<2x8x8xf32>, vector<2x16x8xf32> -> vector<2x16x8xf32>
    "tpu.trace_stop"() : () -> ()
    %61 = arith.addf %44, %60 : vector<2x16x8xf32>
    %62 = vector.extract_strided_slice %19 {offsets = [0, 16], sizes = [16, 8], strides = [1, 1]} : vector<16x32xf32> to vector<16x8xf32>
    %63 = vector.shape_cast %62 : vector<16x8xf32> to vector<1x16x8xf32>
    %64 = vector.shape_cast %63 : vector<1x16x8xf32> to vector<1x16x8xf32>
    %65 = vector.broadcast %64 : vector<1x16x8xf32> to vector<2x16x8xf32>
    %66 = vector.extract_strided_slice %8 {offsets = [0, 0, 16], sizes = [2, 8, 8], strides = [1, 1, 1]} : vector<2x8x32xf32> to vector<2x8x8xf32>
    %67 = vector.extract_strided_slice %9 {offsets = [0, 0, 16], sizes = [2, 8, 8], strides = [1, 1, 1]} : vector<2x8x32xf32> to vector<2x8x8xf32>
    "tpu.trace_start"() <{level = 10 : i32, message = "bqd,bkd->bqk"}> : () -> ()
    %cst_22 = arith.constant dense<0.000000e+00> : vector<2x16x8xf32>
    %68 = tpu.matmul %65, %66, %cst_22 {dimension_numbers = #tpu.dot_dimension_numbers<[2], [2], [1], [1], [0, 0, 0, 1, 1, 1], [0], [0]>} : vector<2x16x8xf32>, vector<2x8x8xf32>, vector<2x16x8xf32> -> vector<2x16x8xf32>
    "tpu.trace_stop"() : () -> ()
    %cst_23 = arith.constant 0.176776692 : f32
    %69 = vector.broadcast %cst_23 : f32 to vector<2x16x8xf32>
    %70 = arith.mulf %68, %69 : vector<2x16x8xf32>
    %cst_24 = arith.constant dense<0xFF800000> : vector<2x16xf32>
    %71 = vector.multi_reduction <maximumf>, %70, %cst_24 [2] : vector<2x16x8xf32> to vector<2x16xf32>
    %72 = vector.shape_cast %71 : vector<2x16xf32> to vector<2x16x1xf32>
    %73 = vector.broadcast %72 : vector<2x16x1xf32> to vector<2x16x8xf32>
    %74 = arith.subf %70, %73 : vector<2x16x8xf32>
    %75 = math.exp %74 : vector<2x16x8xf32>
    %cst_25 = arith.constant dense<0.000000e+00> : vector<2x16xf32>
    %76 = vector.multi_reduction <add>, %75, %cst_25 [2] : vector<2x16x8xf32> to vector<2x16xf32>
    %77 = vector.shape_cast %76 : vector<2x16xf32> to vector<2x16x1xf32>
    %78 = tpu.reciprocal %77 : vector<2x16x1xf32> -> vector<2x16x1xf32>
    %79 = vector.broadcast %78 : vector<2x16x1xf32> to vector<2x16x8xf32>
    %80 = arith.mulf %75, %79 : vector<2x16x8xf32>
    "tpu.trace_start"() <{level = 10 : i32, message = "bqk,bkd->bqd"}> : () -> ()
    %cst_26 = arith.constant dense<0.000000e+00> : vector<2x16x8xf32>
    %81 = tpu.matmul %80, %67, %cst_26 {dimension_numbers = #tpu.dot_dimension_numbers<[2], [1], [1], [2], [0, 0, 0, 1, 1, 2], [0], [0]>} : vector<2x16x8xf32>, vector<2x8x8xf32>, vector<2x16x8xf32> -> vector<2x16x8xf32>
    "tpu.trace_stop"() : () -> ()
    %82 = arith.addf %65, %81 : vector<2x16x8xf32>
    %83 = vector.extract_strided_slice %19 {offsets = [0, 24], sizes = [16, 8], strides = [1, 1]} : vector<16x32xf32> to vector<16x8xf32>
    %84 = vector.shape_cast %83 : vector<16x8xf32> to vector<1x16x8xf32>
    %85 = vector.shape_cast %84 : vector<1x16x8xf32> to vector<1x16x8xf32>
    %86 = vector.broadcast %85 : vector<1x16x8xf32> to vector<2x16x8xf32>
    %87 = vector.extract_strided_slice %8 {offsets = [0, 0, 24], sizes = [2, 8, 8], strides = [1, 1, 1]} : vector<2x8x32xf32> to vector<2x8x8xf32>
    %88 = vector.extract_strided_slice %9 {offsets = [0, 0, 24], sizes = [2, 8, 8], strides = [1, 1, 1]} : vector<2x8x32xf32> to vector<2x8x8xf32>
    "tpu.trace_start"() <{level = 10 : i32, message = "bqd,bkd->bqk"}> : () -> ()
    %cst_27 = arith.constant dense<0.000000e+00> : vector<2x16x8xf32>
    %89 = tpu.matmul %86, %87, %cst_27 {dimension_numbers = #tpu.dot_dimension_numbers<[2], [2], [1], [1], [0, 0, 0, 1, 1, 1], [0], [0]>} : vector<2x16x8xf32>, vector<2x8x8xf32>, vector<2x16x8xf32> -> vector<2x16x8xf32>
    "tpu.trace_stop"() : () -> ()
    %cst_28 = arith.constant 0.176776692 : f32
    %90 = vector.broadcast %cst_28 : f32 to vector<2x16x8xf32>
    %91 = arith.mulf %89, %90 : vector<2x16x8xf32>
    %cst_29 = arith.constant dense<0xFF800000> : vector<2x16xf32>
    %92 = vector.multi_reduction <maximumf>, %91, %cst_29 [2] : vector<2x16x8xf32> to vector<2x16xf32>
    %93 = vector.shape_cast %92 : vector<2x16xf32> to vector<2x16x1xf32>
    %94 = vector.broadcast %93 : vector<2x16x1xf32> to vector<2x16x8xf32>
    %95 = arith.subf %91, %94 : vector<2x16x8xf32>
    %96 = math.exp %95 : vector<2x16x8xf32>
    %cst_30 = arith.constant dense<0.000000e+00> : vector<2x16xf32>
    %97 = vector.multi_reduction <add>, %96, %cst_30 [2] : vector<2x16x8xf32> to vector<2x16xf32>
    %98 = vector.shape_cast %97 : vector<2x16xf32> to vector<2x16x1xf32>
    %99 = tpu.reciprocal %98 : vector<2x16x1xf32> -> vector<2x16x1xf32>
    %100 = vector.broadcast %99 : vector<2x16x1xf32> to vector<2x16x8xf32>
    %101 = arith.mulf %96, %100 : vector<2x16x8xf32>
    "tpu.trace_start"() <{level = 10 : i32, message = "bqk,bkd->bqd"}> : () -> ()
    %cst_31 = arith.constant dense<0.000000e+00> : vector<2x16x8xf32>
    %102 = tpu.matmul %101, %88, %cst_31 {dimension_numbers = #tpu.dot_dimension_numbers<[2], [1], [1], [2], [0, 0, 0, 1, 1, 2], [0], [0]>} : vector<2x16x8xf32>, vector<2x8x8xf32>, vector<2x16x8xf32> -> vector<2x16x8xf32>
    "tpu.trace_stop"() : () -> ()
    %103 = arith.addf %86, %102 : vector<2x16x8xf32>
    %104 = tpu.concatenate %40, %61, %82, %103 in 2 : vector<2x16x8xf32>, vector<2x16x8xf32>, vector<2x16x8xf32>, vector<2x16x8xf32> -> vector<2x16x32xf32>
    %105 = vector.shape_cast %104 : vector<2x16x32xf32> to vector<32x32xf32>
    %cst_32 = arith.constant dense<0.000000e+00> : vector<32x32xf32>
    %106 = tpu.matmul %105, %13, %cst_32 {dimension_numbers = #tpu.dot_dimension_numbers<[1], [0], [0], [1], [0, 0, 1, 1], [], []>} : vector<32x32xf32>, vector<32x32xf32>, vector<32x32xf32> -> vector<32x32xf32>
    %107 = vector.broadcast %14 : vector<1x32xf32> to vector<32x32xf32>
    %108 = arith.addf %106, %107 : vector<32x32xf32>
    %cst_33 = arith.constant 0.000000e+00 : f32
    %109 = vector.broadcast %cst_33 : f32 to vector<32x32xf32>
    %110 = arith.maximumf %108, %109 : vector<32x32xf32>
    %111 = arith.addf %105, %110 : vector<32x32xf32>
    %cst_34 = arith.constant dense<0.000000e+00> : vector<32x64xf32>
    %112 = tpu.matmul %111, %15, %cst_34 {dimension_numbers = #tpu.dot_dimension_numbers<[1], [0], [0], [1], [0, 0, 1, 1], [], []>} : vector<32x32xf32>, vector<32x64xf32>, vector<32x64xf32> -> vector<32x64xf32>
    %113 = vector.broadcast %16 : vector<1x64xf32> to vector<32x64xf32>
    %114 = arith.addf %112, %113 : vector<32x64xf32>
    %115 = vector.shape_cast %114 : vector<32x64xf32> to vector<2x16x64xf32>
    %116 = vector.extract_strided_slice %115 {offsets = [0, 0, 0], sizes = [2, 16, 32], strides = [1, 1, 1]} : vector<2x16x64xf32> to vector<2x16x32xf32>
    %117 = vector.extract_strided_slice %115 {offsets = [0, 0, 32], sizes = [2, 16, 32], strides = [1, 1, 1]} : vector<2x16x64xf32> to vector<2x16x32xf32>
    %118 = vector.extract_strided_slice %10 {offsets = [0, 0, 0], sizes = [2, 8, 8], strides = [1, 1, 1]} : vector<2x8x32xf32> to vector<2x8x8xf32>
    %119 = vector.extract_strided_slice %116 {offsets = [0, 0, 0], sizes = [2, 16, 8], strides = [1, 1, 1]} : vector<2x16x32xf32> to vector<2x16x8xf32>
    %120 = vector.extract_strided_slice %117 {offsets = [0, 0, 0], sizes = [2, 16, 8], strides = [1, 1, 1]} : vector<2x16x32xf32> to vector<2x16x8xf32>
    "tpu.trace_start"() <{level = 10 : i32, message = "bqd,bkd->bqk"}> : () -> ()
    %cst_35 = arith.constant dense<0.000000e+00> : vector<2x8x16xf32>
    %121 = tpu.matmul %118, %119, %cst_35 {dimension_numbers = #tpu.dot_dimension_numbers<[2], [2], [1], [1], [0, 0, 0, 1, 1, 1], [0], [0]>} : vector<2x8x8xf32>, vector<2x16x8xf32>, vector<2x8x16xf32> -> vector<2x8x16xf32>
    "tpu.trace_stop"() : () -> ()
    %cst_36 = arith.constant 0.176776692 : f32
    %122 = vector.broadcast %cst_36 : f32 to vector<2x8x16xf32>
    %123 = arith.mulf %121, %122 : vector<2x8x16xf32>
    %cst_37 = arith.constant dense<0xFF800000> : vector<2x8xf32>
    %124 = vector.multi_reduction <maximumf>, %123, %cst_37 [2] : vector<2x8x16xf32> to vector<2x8xf32>
    %125 = vector.shape_cast %124 : vector<2x8xf32> to vector<2x8x1xf32>
    %126 = vector.broadcast %125 : vector<2x8x1xf32> to vector<2x8x16xf32>
    %127 = arith.subf %123, %126 : vector<2x8x16xf32>
    %128 = math.exp %127 : vector<2x8x16xf32>
    %cst_38 = arith.constant dense<0.000000e+00> : vector<2x8xf32>
    %129 = vector.multi_reduction <add>, %128, %cst_38 [2] : vector<2x8x16xf32> to vector<2x8xf32>
    %130 = vector.shape_cast %129 : vector<2x8xf32> to vector<2x8x1xf32>
    %131 = tpu.reciprocal %130 : vector<2x8x1xf32> -> vector<2x8x1xf32>
    %132 = vector.broadcast %131 : vector<2x8x1xf32> to vector<2x8x16xf32>
    %133 = arith.mulf %128, %132 : vector<2x8x16xf32>
    "tpu.trace_start"() <{level = 10 : i32, message = "bqk,bkd->bqd"}> : () -> ()
    %cst_39 = arith.constant dense<0.000000e+00> : vector<2x8x8xf32>
    %134 = tpu.matmul %133, %120, %cst_39 {dimension_numbers = #tpu.dot_dimension_numbers<[2], [1], [1], [2], [0, 0, 0, 1, 1, 2], [0], [0]>} : vector<2x8x16xf32>, vector<2x16x8xf32>, vector<2x8x8xf32> -> vector<2x8x8xf32>
    "tpu.trace_stop"() : () -> ()
    %135 = arith.addf %118, %134 : vector<2x8x8xf32>
    %136 = vector.extract_strided_slice %10 {offsets = [0, 0, 8], sizes = [2, 8, 8], strides = [1, 1, 1]} : vector<2x8x32xf32> to vector<2x8x8xf32>
    %137 = vector.extract_strided_slice %116 {offsets = [0, 0, 8], sizes = [2, 16, 8], strides = [1, 1, 1]} : vector<2x16x32xf32> to vector<2x16x8xf32>
    %138 = vector.extract_strided_slice %117 {offsets = [0, 0, 8], sizes = [2, 16, 8], strides = [1, 1, 1]} : vector<2x16x32xf32> to vector<2x16x8xf32>
    "tpu.trace_start"() <{level = 10 : i32, message = "bqd,bkd->bqk"}> : () -> ()
    %cst_40 = arith.constant dense<0.000000e+00> : vector<2x8x16xf32>
    %139 = tpu.matmul %136, %137, %cst_40 {dimension_numbers = #tpu.dot_dimension_numbers<[2], [2], [1], [1], [0, 0, 0, 1, 1, 1], [0], [0]>} : vector<2x8x8xf32>, vector<2x16x8xf32>, vector<2x8x16xf32> -> vector<2x8x16xf32>
    "tpu.trace_stop"() : () -> ()
    %cst_41 = arith.constant 0.176776692 : f32
    %140 = vector.broadcast %cst_41 : f32 to vector<2x8x16xf32>
    %141 = arith.mulf %139, %140 : vector<2x8x16xf32>
    %cst_42 = arith.constant dense<0xFF800000> : vector<2x8xf32>
    %142 = vector.multi_reduction <maximumf>, %141, %cst_42 [2] : vector<2x8x16xf32> to vector<2x8xf32>
    %143 = vector.shape_cast %142 : vector<2x8xf32> to vector<2x8x1xf32>
    %144 = vector.broadcast %143 : vector<2x8x1xf32> to vector<2x8x16xf32>
    %145 = arith.subf %141, %144 : vector<2x8x16xf32>
    %146 = math.exp %145 : vector<2x8x16xf32>
    %cst_43 = arith.constant dense<0.000000e+00> : vector<2x8xf32>
    %147 = vector.multi_reduction <add>, %146, %cst_43 [2] : vector<2x8x16xf32> to vector<2x8xf32>
    %148 = vector.shape_cast %147 : vector<2x8xf32> to vector<2x8x1xf32>
    %149 = tpu.reciprocal %148 : vector<2x8x1xf32> -> vector<2x8x1xf32>
    %150 = vector.broadcast %149 : vector<2x8x1xf32> to vector<2x8x16xf32>
    %151 = arith.mulf %146, %150 : vector<2x8x16xf32>
    "tpu.trace_start"() <{level = 10 : i32, message = "bqk,bkd->bqd"}> : () -> ()
    %cst_44 = arith.constant dense<0.000000e+00> : vector<2x8x8xf32>
    %152 = tpu.matmul %151, %138, %cst_44 {dimension_numbers = #tpu.dot_dimension_numbers<[2], [1], [1], [2], [0, 0, 0, 1, 1, 2], [0], [0]>} : vector<2x8x16xf32>, vector<2x16x8xf32>, vector<2x8x8xf32> -> vector<2x8x8xf32>
    "tpu.trace_stop"() : () -> ()
    %153 = arith.addf %136, %152 : vector<2x8x8xf32>
    %154 = vector.extract_strided_slice %10 {offsets = [0, 0, 16], sizes = [2, 8, 8], strides = [1, 1, 1]} : vector<2x8x32xf32> to vector<2x8x8xf32>
    %155 = vector.extract_strided_slice %116 {offsets = [0, 0, 16], sizes = [2, 16, 8], strides = [1, 1, 1]} : vector<2x16x32xf32> to vector<2x16x8xf32>
    %156 = vector.extract_strided_slice %117 {offsets = [0, 0, 16], sizes = [2, 16, 8], strides = [1, 1, 1]} : vector<2x16x32xf32> to vector<2x16x8xf32>
    "tpu.trace_start"() <{level = 10 : i32, message = "bqd,bkd->bqk"}> : () -> ()
    %cst_45 = arith.constant dense<0.000000e+00> : vector<2x8x16xf32>
    %157 = tpu.matmul %154, %155, %cst_45 {dimension_numbers = #tpu.dot_dimension_numbers<[2], [2], [1], [1], [0, 0, 0, 1, 1, 1], [0], [0]>} : vector<2x8x8xf32>, vector<2x16x8xf32>, vector<2x8x16xf32> -> vector<2x8x16xf32>
    "tpu.trace_stop"() : () -> ()
    %cst_46 = arith.constant 0.176776692 : f32
    %158 = vector.broadcast %cst_46 : f32 to vector<2x8x16xf32>
    %159 = arith.mulf %157, %158 : vector<2x8x16xf32>
    %cst_47 = arith.constant dense<0xFF800000> : vector<2x8xf32>
    %160 = vector.multi_reduction <maximumf>, %159, %cst_47 [2] : vector<2x8x16xf32> to vector<2x8xf32>
    %161 = vector.shape_cast %160 : vector<2x8xf32> to vector<2x8x1xf32>
    %162 = vector.broadcast %161 : vector<2x8x1xf32> to vector<2x8x16xf32>
    %163 = arith.subf %159, %162 : vector<2x8x16xf32>
    %164 = math.exp %163 : vector<2x8x16xf32>
    %cst_48 = arith.constant dense<0.000000e+00> : vector<2x8xf32>
    %165 = vector.multi_reduction <add>, %164, %cst_48 [2] : vector<2x8x16xf32> to vector<2x8xf32>
    %166 = vector.shape_cast %165 : vector<2x8xf32> to vector<2x8x1xf32>
    %167 = tpu.reciprocal %166 : vector<2x8x1xf32> -> vector<2x8x1xf32>
    %168 = vector.broadcast %167 : vector<2x8x1xf32> to vector<2x8x16xf32>
    %169 = arith.mulf %164, %168 : vector<2x8x16xf32>
    "tpu.trace_start"() <{level = 10 : i32, message = "bqk,bkd->bqd"}> : () -> ()
    %cst_49 = arith.constant dense<0.000000e+00> : vector<2x8x8xf32>
    %170 = tpu.matmul %169, %156, %cst_49 {dimension_numbers = #tpu.dot_dimension_numbers<[2], [1], [1], [2], [0, 0, 0, 1, 1, 2], [0], [0]>} : vector<2x8x16xf32>, vector<2x16x8xf32>, vector<2x8x8xf32> -> vector<2x8x8xf32>
    "tpu.trace_stop"() : () -> ()
    %171 = arith.addf %154, %170 : vector<2x8x8xf32>
    %172 = vector.extract_strided_slice %10 {offsets = [0, 0, 24], sizes = [2, 8, 8], strides = [1, 1, 1]} : vector<2x8x32xf32> to vector<2x8x8xf32>
    %173 = vector.extract_strided_slice %116 {offsets = [0, 0, 24], sizes = [2, 16, 8], strides = [1, 1, 1]} : vector<2x16x32xf32> to vector<2x16x8xf32>
    %174 = vector.extract_strided_slice %117 {offsets = [0, 0, 24], sizes = [2, 16, 8], strides = [1, 1, 1]} : vector<2x16x32xf32> to vector<2x16x8xf32>
    "tpu.trace_start"() <{level = 10 : i32, message = "bqd,bkd->bqk"}> : () -> ()
    %cst_50 = arith.constant dense<0.000000e+00> : vector<2x8x16xf32>
    %175 = tpu.matmul %172, %173, %cst_50 {dimension_numbers = #tpu.dot_dimension_numbers<[2], [2], [1], [1], [0, 0, 0, 1, 1, 1], [0], [0]>} : vector<2x8x8xf32>, vector<2x16x8xf32>, vector<2x8x16xf32> -> vector<2x8x16xf32>
    "tpu.trace_stop"() : () -> ()
    %cst_51 = arith.constant 0.176776692 : f32
    %176 = vector.broadcast %cst_51 : f32 to vector<2x8x16xf32>
    %177 = arith.mulf %175, %176 : vector<2x8x16xf32>
    %cst_52 = arith.constant dense<0xFF800000> : vector<2x8xf32>
    %178 = vector.multi_reduction <maximumf>, %177, %cst_52 [2] : vector<2x8x16xf32> to vector<2x8xf32>
    %179 = vector.shape_cast %178 : vector<2x8xf32> to vector<2x8x1xf32>
    %180 = vector.broadcast %179 : vector<2x8x1xf32> to vector<2x8x16xf32>
    %181 = arith.subf %177, %180 : vector<2x8x16xf32>
    %182 = math.exp %181 : vector<2x8x16xf32>
    %cst_53 = arith.constant dense<0.000000e+00> : vector<2x8xf32>
    %183 = vector.multi_reduction <add>, %182, %cst_53 [2] : vector<2x8x16xf32> to vector<2x8xf32>
    %184 = vector.shape_cast %183 : vector<2x8xf32> to vector<2x8x1xf32>
    %185 = tpu.reciprocal %184 : vector<2x8x1xf32> -> vector<2x8x1xf32>
    %186 = vector.broadcast %185 : vector<2x8x1xf32> to vector<2x8x16xf32>
    %187 = arith.mulf %182, %186 : vector<2x8x16xf32>
    "tpu.trace_start"() <{level = 10 : i32, message = "bqk,bkd->bqd"}> : () -> ()
    %cst_54 = arith.constant dense<0.000000e+00> : vector<2x8x8xf32>
    %188 = tpu.matmul %187, %174, %cst_54 {dimension_numbers = #tpu.dot_dimension_numbers<[2], [1], [1], [2], [0, 0, 0, 1, 1, 2], [0], [0]>} : vector<2x8x16xf32>, vector<2x16x8xf32>, vector<2x8x8xf32> -> vector<2x8x8xf32>
    "tpu.trace_stop"() : () -> ()
    %189 = arith.addf %172, %188 : vector<2x8x8xf32>
    %190 = tpu.concatenate %135, %153, %171, %189 in 2 : vector<2x8x8xf32>, vector<2x8x8xf32>, vector<2x8x8xf32>, vector<2x8x8xf32> -> vector<2x8x32xf32>
    %191 = vector.shape_cast %190 : vector<2x8x32xf32> to vector<16x32xf32>
    %cst_55 = arith.constant dense<0.000000e+00> : vector<16x32xf32>
    %192 = tpu.matmul %191, %17, %cst_55 {dimension_numbers = #tpu.dot_dimension_numbers<[1], [0], [0], [1], [0, 0, 1, 1], [], []>} : vector<16x32xf32>, vector<32x32xf32>, vector<16x32xf32> -> vector<16x32xf32>
    %193 = vector.broadcast %18 : vector<1x32xf32> to vector<16x32xf32>
    %194 = arith.addf %192, %193 : vector<16x32xf32>
    %cst_56 = arith.constant 0.000000e+00 : f32
    %195 = vector.broadcast %cst_56 : f32 to vector<16x32xf32>
    %196 = arith.maximumf %194, %195 : vector<16x32xf32>
    %197 = arith.addf %191, %196 : vector<16x32xf32>
    %198 = vector.shape_cast %197 : vector<16x32xf32> to vector<2x8x32xf32>
    %c0_57 = arith.constant 0 : index
    %c0_58 = arith.constant 0 : index
    %c0_59 = arith.constant 0 : index
    %199 = vector.load %arg7[%c0_57, %c0_58, %c0_59] : memref<2x8x32xf32, #tpu.memory_space<vmem>>, vector<2x8x32xf32>
    tpu.vector_store %arg7[%c0_57, %c0_58, %c0_59], %198 {strides = array<i32>} : memref<2x8x32xf32, #tpu.memory_space<vmem>>, vector<2x8x32xf32>,
    return
  }
  func.func @transform_0(%arg0: i32) -> (i32, i32, i32) {
    %c0_i32 = arith.constant 0 : i32
    %c0_i32_0 = arith.constant 0 : i32
    %c0_i32_1 = arith.constant 0 : i32
    return %arg0, %c0_i32, %c0_i32_0 : i32, i32, i32
  }
  func.func @transform_1(%arg0: i32) -> (i32, i32) {
    %c0_i32 = arith.constant 0 : i32
    %c0_i32_0 = arith.constant 0 : i32
    %c0_i32_1 = arith.constant 0 : i32
    return %c0_i32, %c0_i32_0 : i32, i32
  }
  func.func @transform_2(%arg0: i32) -> (i32, i32) {
    %c0_i32 = arith.constant 0 : i32
    %c0_i32_0 = arith.constant 0 : i32
    %c0_i32_1 = arith.constant 0 : i32
    return %c0_i32, %c0_i32_0 : i32, i32
  }
  func.func @transform_3(%arg0: i32) -> (i32, i32) {
    %c0_i32 = arith.constant 0 : i32
    %c0_i32_0 = arith.constant 0 : i32
    %c0_i32_1 = arith.constant 0 : i32
    return %c0_i32, %c0_i32_0 : i32, i32
  }
  func.func @transform_4(%arg0: i32) -> (i32, i32) {
    %c0_i32 = arith.constant 0 : i32
    %c0_i32_0 = arith.constant 0 : i32
    %c0_i32_1 = arith.constant 0 : i32
    return %c0_i32, %c0_i32_0 : i32, i32
  }
  func.func @transform_5(%arg0: i32) -> (i32, i32) {
    %c0_i32 = arith.constant 0 : i32
    %c0_i32_0 = arith.constant 0 : i32
    %c0_i32_1 = arith.constant 0 : i32
    return %c0_i32, %c0_i32_0 : i32, i32
  }
  func.func @transform_6(%arg0: i32) -> (i32, i32, i32) {
    %c0_i32 = arith.constant 0 : i32
    %c0_i32_0 = arith.constant 0 : i32
    %c0_i32_1 = arith.constant 0 : i32
    return %arg0, %c0_i32, %c0_i32_0 : i32, i32, i32
  }
}

</mosaic_0001>

<llo_original>
// kernel: isab_forward.1
$region0: #{isab_forward.1}
  #allocation0 [shape = 'u32[]', space=smem, size = 0x4, offset = 0x4, fixed_abs, tag = 'smem constant byte address 0x4 - core index']
  #allocation1 [shape = 'u32[144,128]{1,0:T(1,128)}', space=vmem, size = 0x12000, scoped, tag = 'internal scratch']
  %s0 = inlined_call_operand.vmem [shape: f32[2,8,4], index: 0, kind: input, shape index: {}]
  %s1 = inlined_call_operand.vmem [shape: f32[16,32], index: 1, kind: input, shape index: {}]
  %s2 = inlined_call_operand.vmem [shape: f32[4,96], index: 2, kind: input, shape index: {}]
  %s3 = inlined_call_operand.vmem [shape: f32[1,96], index: 3, kind: input, shape index: {}]
  %s4 = inlined_call_operand.vmem [shape: f32[32,128], index: 4, kind: input, shape index: {}]
  %s5 = inlined_call_operand.vmem [shape: f32[1,128], index: 5, kind: input, shape index: {}]
  %s6 = inlined_call_operand.hbm [shape: f32[2,8,32], index: 6, kind: output, shape index: {}]
  %s7 = sld [smem:[#allocation0]]
  $region34: #{isab_forward.1} parent=0
    _
  %s9 = ssub.s32 1, %s7
  %s10 = scalar_select 0, %s9, %s7
  $region1: #{isab_forward.1} parent=0
    #allocation2 [shape = 'u8[8192]{0}', space=vmem, size = 0x2000, scoped, tag = 'output window, operand 0, single buffered']
    #allocation3 [shape = 's32[1]{0}', space=sflag, size = 0x4, scoped, tag = 'scoped memory for isab_forward.1']
    %11 = vsyncpa [#allocation3], 0
    // Predicated region
    $region2: #{isab_forward.1} parent=1 // pred_check
      _
    $region3: #{isab_forward.1} parent=1 // pred_check_branch
      %13 = sbr.rel (0) target = $region5
    $region4: #{isab_forward.1} parent=1 // pred_region
      _
    $region5: #{isab_forward.1} parent=1 // pred_fallthru
      _
    // Predicated region
    $region6: #{isab_forward.1} parent=1 // pred_check
      _
    $region7: #{isab_forward.1} parent=1 // pred_check_branch
      %15 = sbr.rel (0) target = $region9
    $region8: #{isab_forward.1} parent=1 // pred_region
      _
    $region9: #{isab_forward.1} parent=1 // pred_fallthru
      _
    // Predicated region
    $region10: #{isab_forward.1} parent=1 // pred_check
      _
    $region11: #{isab_forward.1} parent=1 // pred_check_branch
      %17 = sbr.rel (0) target = $region13
    $region12: #{isab_forward.1} parent=1 // pred_region
      _
    $region13: #{isab_forward.1} parent=1 // pred_fallthru
      _
    // Predicated region
    $region14: #{isab_forward.1} parent=1 // pred_check
      _
    $region15: #{isab_forward.1} parent=1 // pred_check_branch
      %19 = sbr.rel (0) target = $region17
    $region16: #{isab_forward.1} parent=1 // pred_region
      _
    $region17: #{isab_forward.1} parent=1 // pred_fallthru
      _
    // Predicated region
    $region18: #{isab_forward.1} parent=1 // pred_check
      _
    $region19: #{isab_forward.1} parent=1 // pred_check_branch
      %21 = sbr.rel (0) target = $region21
    $region20: #{isab_forward.1} parent=1 // pred_region
      _
    $region21: #{isab_forward.1} parent=1 // pred_fallthru
      _
    // Predicated region
    $region22: #{isab_forward.1} parent=1 // pred_check
      _
    $region23: #{isab_forward.1} parent=1 // pred_check_branch
      %23 = sbr.rel (0) target = $region25
    $region24: #{isab_forward.1} parent=1 // pred_region
      _
    $region25: #{isab_forward.1} parent=1 // pred_fallthru
      _
    %v24 = vld [vmem:[%s0] sm:$0xff]
    %v25 = vld [vmem:[%s0 + $0x8] sm:$0xff]
    %v26 = vld [vmem:[%s2] sm:$0xf]
    %v27 = vld [vmem:[%s3] sm:$0x1]
    %v29 = vlaneseq
    %v30 = vshrl.u32 %v29, 7
    %v31 = vsub.s32 0, %v30
    %v32 = vrot.slane %v27, %v31
    %vm34 = vcmask 31744
    %v36 = vsel %vm34, %v24, 0
    %v39 = vsel %vm34, %v25, 0
    %vm41 = vcmask 1043456
    %v43 = vsel %vm41, %v26, 0
    %45 = vmatprep.subr.mxu0 0.0
    %46 = vmatpush1.msra.mxu0 %v43
    %47 = vmatprep.subr.mxu0 0.0
    %48 = vmatpush1.msra.mxu0 0.0
    %49 = vmatprep.subr.mxu0 0.0
    %50 = vmatpush1.msra.mxu0 0.0
    %51 = vmatprep.subr.mxu0 0.0
    %52 = vmatpush1.msra.mxu0 0.0
    %53 = vmatprep.subr.mxu0 0.0
    %54 = vmatpush1.msra.mxu0 0.0
    %55 = vmatprep.subr.mxu0 0.0
    %56 = vmatpush1.msra.mxu0 0.0
    %57 = vmatprep.subr.mxu0 0.0
    %58 = vmatpush1.msra.mxu0 0.0
    %59 = vmatprep.subr.mxu0 0.0
    %60 = vmatpush1.msra.mxu0 0.0
    %61 = vmatprep.subr.mxu0 0.0
    %62 = vmatpush1.msra.mxu0 0.0
    %63 = vmatprep.subr.mxu0 0.0
    %64 = vmatpush1.msra.mxu0 0.0
    %65 = vmatprep.subr.mxu0 0.0
    %66 = vmatpush1.msra.mxu0 0.0
    %67 = vmatprep.subr.mxu0 0.0
    %68 = vmatpush1.msra.mxu0 0.0
    %69 = vmatprep.subr.mxu0 0.0
    %70 = vmatpush1.msra.mxu0 0.0
    %71 = vmatprep.subr.mxu0 0.0
    %72 = vmatpush1.msra.mxu0 0.0
    %73 = vmatprep.subr.mxu0 0.0
    %74 = vmatpush1.msra.mxu0 0.0
    %75 = vmatprep.subr.mxu0 0.0
    %76 = vmatpush1.msra.mxu0 0.0
    %77 = vmatprep.subr.mxu0 0.0
    %78 = vmatpush1.msra.mxu0 0.0
    %79 = vmatprep.subr.mxu0 0.0
    %80 = vmatpush1.msra.mxu0 0.0
    %81 = vmatprep.subr.mxu0 0.0
    %82 = vmatpush1.msra.mxu0 0.0
    %83 = vmatprep.subr.mxu0 0.0
    %84 = vmatpush1.msra.mxu0 0.0
    %85 = vmatprep.subr.mxu0 0.0
    %86 = vmatpush1.msra.mxu0 0.0
    %87 = vmatprep.subr.mxu0 0.0
    %88 = vmatpush1.msra.mxu0 0.0
    %89 = vmatprep.subr.mxu0 0.0
    %90 = vmatpush1.msra.mxu0 0.0
    %91 = vmatprep.subr.mxu0 0.0
    %92 = vmatpush1.msra.mxu0 0.0
    %93 = vmatprep.subr.mxu0 0.0
    %94 = vmatpush1.msra.mxu0 0.0
    %95 = vmatprep.subr.mxu0 0.0
    %96 = vmatpush1.msra.mxu0 0.0
    %97 = vmatprep.subr.mxu0 0.0
    %98 = vmatpush1.msra.mxu0 0.0
    %99 = vmatprep.subr.mxu0 0.0
    %100 = vmatpush1.msra.mxu0 0.0
    %101 = vmatprep.subr.mxu0 0.0
    %102 = vmatpush1.msra.mxu0 0.0
    %103 = vmatprep.subr.mxu0 0.0
    %104 = vmatpush1.msra.mxu0 0.0
    %105 = vmatprep.subr.mxu0 0.0
    %106 = vmatpush1.msra.mxu0 0.0
    %107 = vmatprep.subr.mxu0 0.0
    %108 = vmatpush1.msra.mxu0 0.0
    %109 = vmatprep.mubr.f32.mxu0 0.0
    %110 = vmatmul.mubr.f32.gmra.mrb[0].mxu0 %v36
    %v111 = vpop.f32.mrb[0].mxu0
    %v112 = vadd.f32 %v32, %v111
    %v113 = vpop.f32.mrb[0].mxu0
    %114 = vmatprep.mubr.f32.mxu0 0.0
    %115 = vmatmul.mubr.f32.gmra.mrb[0].mxu0 %v39
    %v116 = vpop.f32.mrb[0].mxu0
    %v117 = vadd.f32 %v32, %v116
    %v118 = vpop.f32.mrb[0].mxu0
    %119 = vdwg.mxu0
    %v120 = vld [vmem:[%s4] sm:$0xff]
    %v121 = vld [vmem:[%s4 + $0x8] sm:$0xff]
    %v122 = vld [vmem:[%s4 + $0x10] sm:$0xff]
    %v123 = vld [vmem:[%s4 + $0x18] sm:$0xff]
    %v124 = vld [vmem:[%s5] sm:$0x1]
    %v125 = vld [vmem:[%s1] sm:$0xff]
    %v126 = vld [vmem:[%s1 + $0x8] sm:$0xff]
    %vm127 = vcmask 64512
    %v129 = vsel %vm127, %v125, 0
    %v132 = vsel %vm127, %v126, 0
    %v135 = vsel %vm127, %v112, 0
    %137 = vmatprep.subr.mxu0 0.0
    %138 = vmatpush1.xpose.msra.mxu0 %v135
    %139 = vmatprep.subr.mxu0 0.0
    %140 = vmatpush1.xpose.msra.mxu0 0.0
    %141 = vmatprep.subr.mxu0 0.0
    %142 = vmatpush1.xpose.msra.mxu0 0.0
    %143 = vmatprep.subr.mxu0 0.0
    %144 = vmatpush1.xpose.msra.mxu0 0.0
    %145 = vmatprep.subr.mxu0 0.0
    %146 = vmatpush1.xpose.msra.mxu0 0.0
    %147 = vmatprep.subr.mxu0 0.0
    %148 = vmatpush1.xpose.msra.mxu0 0.0
    %149 = vmatprep.subr.mxu0 0.0
    %150 = vmatpush1.xpose.msra.mxu0 0.0
    %151 = vmatprep.subr.mxu0 0.0
    %152 = vmatpush1.xpose.msra.mxu0 0.0
    %153 = vmatprep.subr.mxu0 0.0
    %154 = vmatpush1.xpose.msra.mxu0 0.0
    %155 = vmatprep.subr.mxu0 0.0
    %156 = vmatpush1.xpose.msra.mxu0 0.0
    %157 = vmatprep.subr.mxu0 0.0
    %158 = vmatpush1.xpose.msra.mxu0 0.0
    %159 = vmatprep.subr.mxu0 0.0
    %160 = vmatpush1.xpose.msra.mxu0 0.0
    %161 = vmatprep.subr.mxu0 0.0
    %162 = vmatpush1.xpose.msra.mxu0 0.0
    %163 = vmatprep.subr.mxu0 0.0
    %164 = vmatpush1.xpose.msra.mxu0 0.0
    %165 = vmatprep.subr.mxu0 0.0
    %166 = vmatpush1.xpose.msra.mxu0 0.0
    %167 = vmatprep.subr.mxu0 0.0
    %168 = vmatpush1.xpose.msra.mxu0 0.0
    %169 = vmatprep.subr.mxu0 0.0
    %170 = vmatpush1.xpose.msra.mxu0 0.0
    %171 = vmatprep.subr.mxu0 0.0
    %172 = vmatpush1.xpose.msra.mxu0 0.0
    %173 = vmatprep.subr.mxu0 0.0
    %174 = vmatpush1.xpose.msra.mxu0 0.0
    %175 = vmatprep.subr.mxu0 0.0
    %176 = vmatpush1.xpose.msra.mxu0 0.0
    %177 = vmatprep.subr.mxu0 0.0
    %178 = vmatpush1.xpose.msra.mxu0 0.0
    %179 = vmatprep.subr.mxu0 0.0
    %180 = vmatpush1.xpose.msra.mxu0 0.0
    %181 = vmatprep.subr.mxu0 0.0
    %182 = vmatpush1.xpose.msra.mxu0 0.0
    %183 = vmatprep.subr.mxu0 0.0
    %184 = vmatpush1.xpose.msra.mxu0 0.0
    %185 = vmatprep.subr.mxu0 0.0
    %186 = vmatpush1.xpose.msra.mxu0 0.0
    %187 = vmatprep.subr.mxu0 0.0
    %188 = vmatpush1.xpose.msra.mxu0 0.0
    %189 = vmatprep.subr.mxu0 0.0
    %190 = vmatpush1.xpose.msra.mxu0 0.0
    %191 = vmatprep.subr.mxu0 0.0
    %192 = vmatpush1.xpose.msra.mxu0 0.0
    %193 = vmatprep.subr.mxu0 0.0
    %194 = vmatpush1.xpose.msra.mxu0 0.0
    %195 = vmatprep.subr.mxu0 0.0
    %196 = vmatpush1.xpose.msra.mxu0 0.0
    %197 = vmatprep.subr.mxu0 0.0
    %198 = vmatpush1.xpose.msra.mxu0 0.0
    %199 = vmatprep.subr.mxu0 0.0
    %200 = vmatpush1.xpose.msra.mxu0 0.0
    %201 = vmatprep.mubr.f32.mxu0 0.0
    %202 = vmatmul.mubr.f32.gmra.mrb[0].mxu0 %v129
    %v203 = vpop.f32.mrb[0].mxu0
    %v204 = vadd.f32 0.0, %v203
    %v205 = vpop.f32.mrb[0].mxu0
    %206 = vmatprep.mubr.f32.mxu0 0.0
    %207 = vmatmul.mubr.f32.gmra.mrb[0].mxu0 %v132
    %v208 = vpop.f32.mrb[0].mxu0
    %v209 = vadd.f32 0.0, %v208
    %v210 = vpop.f32.mrb[0].mxu0
    %211 = vdwg.mxu0
    %v213 = vsel %vm127, %v117, 0
    %215 = vmatprep.subr.mxu0 0.0
    %216 = vmatpush1.xpose.msra.mxu0 %v213
    %217 = vmatprep.subr.mxu0 0.0
    %218 = vmatpush1.xpose.msra.mxu0 0.0
    %219 = vmatprep.subr.mxu0 0.0
    %220 = vmatpush1.xpose.msra.mxu0 0.0
    %221 = vmatprep.subr.mxu0 0.0
    %222 = vmatpush1.xpose.msra.mxu0 0.0
    %223 = vmatprep.subr.mxu0 0.0
    %224 = vmatpush1.xpose.msra.mxu0 0.0
    %225 = vmatprep.subr.mxu0 0.0
    %226 = vmatpush1.xpose.msra.mxu0 0.0
    %227 = vmatprep.subr.mxu0 0.0
    %228 = vmatpush1.xpose.msra.mxu0 0.0
    %229 = vmatprep.subr.mxu0 0.0
    %230 = vmatpush1.xpose.msra.mxu0 0.0
    %231 = vmatprep.subr.mxu0 0.0
    %232 = vmatpush1.xpose.msra.mxu0 0.0
    %233 = vmatprep.subr.mxu0 0.0
    %234 = vmatpush1.xpose.msra.mxu0 0.0
    %235 = vmatprep.subr.mxu0 0.0
    %236 = vmatpush1.xpose.msra.mxu0 0.0
    %237 = vmatprep.subr.mxu0 0.0
    %238 = vmatpush1.xpose.msra.mxu0 0.0
    %239 = vmatprep.subr.mxu0 0.0
    %240 = vmatpush1.xpose.msra.mxu0 0.0
    %241 = vmatprep.subr.mxu0 0.0
    %242 = vmatpush1.xpose.msra.mxu0 0.0
    %243 = vmatprep.subr.mxu0 0.0
    %244 = vmatpush1.xpose.msra.mxu0 0.0
    %245 = vmatprep.subr.mxu0 0.0
    %246 = vmatpush1.xpose.msra.mxu0 0.0
    %247 = vmatprep.subr.mxu0 0.0
    %248 = vmatpush1.xpose.msra.mxu0 0.0
    %249 = vmatprep.subr.mxu0 0.0
    %250 = vmatpush1.xpose.msra.mxu0 0.0
    %251 = vmatprep.subr.mxu0 0.0
    %252 = vmatpush1.xpose.msra.mxu0 0.0
    %253 = vmatprep.subr.mxu0 0.0
    %254 = vmatpush1.xpose.msra.mxu0 0.0
    %255 = vmatprep.subr.mxu0 0.0
    %256 = vmatpush1.xpose.msra.mxu0 0.0
    %257 = vmatprep.subr.mxu0 0.0
    %258 = vmatpush1.xpose.msra.mxu0 0.0
    %259 = vmatprep.subr.mxu0 0.0
    %260 = vmatpush1.xpose.msra.mxu0 0.0
    %261 = vmatprep.subr.mxu0 0.0
    %262 = vmatpush1.xpose.msra.mxu0 0.0
    %263 = vmatprep.subr.mxu0 0.0
    %264 = vmatpush1.xpose.msra.mxu0 0.0
    %265 = vmatprep.subr.mxu0 0.0
    %266 = vmatpush1.xpose.msra.mxu0 0.0
    %267 = vmatprep.subr.mxu0 0.0
    %268 = vmatpush1.xpose.msra.mxu0 0.0
    %269 = vmatprep.subr.mxu0 0.0
    %270 = vmatpush1.xpose.msra.mxu0 0.0
    %271 = vmatprep.subr.mxu0 0.0
    %272 = vmatpush1.xpose.msra.mxu0 0.0
    %273 = vmatprep.subr.mxu0 0.0
    %274 = vmatpush1.xpose.msra.mxu0 0.0
    %275 = vmatprep.subr.mxu0 0.0
    %276 = vmatpush1.xpose.msra.mxu0 0.0
    %277 = vmatprep.subr.mxu0 0.0
    %278 = vmatpush1.xpose.msra.mxu0 0.0
    %279 = vmatprep.mubr.f32.mxu0 0.0
    %280 = vmatmul.mubr.f32.gmra.mrb[0].mxu0 %v129
    %v281 = vpop.f32.mrb[0].mxu0
    %v282 = vadd.f32 0.0, %v281
    %v283 = vpop.f32.mrb[0].mxu0
    %284 = vmatprep.mubr.f32.mxu0 0.0
    %285 = vmatmul.mubr.f32.gmra.mrb[0].mxu0 %v132
    %v286 = vpop.f32.mrb[0].mxu0
    %v287 = vadd.f32 0.0, %v286
    %v288 = vpop.f32.mrb[0].mxu0
    %289 = vdwg.mxu0
    %v290 = vmul.f32 %v204, 0.17677669
    %v291 = vmul.f32 %v209, 0.17677669
    %v292 = vmul.f32 %v282, 0.17677669
    %v293 = vmul.f32 %v287, 0.17677669
    %v294 = vsel %vm127, %v290, -inf
    %295 = vmax.xlane.f32.xlu0 %v294
    %v296 = vpop.xlane.xlu0 %295
    %v297 = vsel %vm127, %v291, -inf
    %298 = vmax.xlane.f32.xlu0 %v297
    %v299 = vpop.xlane.xlu0 %298
    %v300 = vsel %vm127, %v292, -inf
    %301 = vmax.xlane.f32.xlu0 %v300
    %v302 = vpop.xlane.xlu0 %301
    %v303 = vsel %vm127, %v293, -inf
    %304 = vmax.xlane.f32.xlu0 %v303
    %v305 = vpop.xlane.xlu0 %304
    %v306 = vsub.f32 %v290, %v296
    %v307 = vsub.f32 %v291, %v299
    %v308 = vsub.f32 %v292, %v302
    %v309 = vsub.f32 %v293, %v305
    %v310 = vmul.f32 %v306, 1.442695
    %v311 = vpow.pop %v310
    %v312 = vmul.f32 %v307, 1.442695
    %v313 = vpow.pop %v312
    %v314 = vmul.f32 %v308, 1.442695
    %v315 = vpow.pop %v314
    %v316 = vmul.f32 %v309, 1.442695
    %v317 = vpow.pop %v316
    %v318 = vsel %vm127, %v311, 0.0
    %319 = vadd.xlane.f32.xlu0 %v318
    %v320 = vpop.xlane.xlu0 %319
    %v321 = vsel %vm127, %v313, 0.0
    %322 = vadd.xlane.f32.xlu0 %v321
    %v323 = vpop.xlane.xlu0 %322
    %v324 = vsel %vm127, %v315, 0.0
    %325 = vadd.xlane.f32.xlu0 %v324
    %v326 = vpop.xlane.xlu0 %325
    %v327 = vsel %vm127, %v317, 0.0
    %328 = vadd.xlane.f32.xlu0 %v327
    %v329 = vpop.xlane.xlu0 %328
    %v330 = vrcp.pop %v320
    %v331 = vrcp.pop %v323
    %v332 = vrcp.pop %v326
    %v333 = vrcp.pop %v329
    %v334 = vmul.f32 %v311, %v330
    %v335 = vmul.f32 %v313, %v331
    %v336 = vmul.f32 %v315, %v332
    %v337 = vmul.f32 %v317, %v333
    %338 = vrot.lane.b32.xlu0 %v112, 96
    %v339 = vpop.permute.xlu0 %338
    %v342 = vsel %vm127, %v334, 0
    %v345 = vsel %vm127, %v335, 0
    %347 = vmatprep.subr.mxu0 0.0
    %348 = vmatpush1.msra.mxu0 %v339
    %349 = vmatprep.subr.mxu0 0.0
    %350 = vmatpush1.msra.mxu0 0.0
    %351 = vmatprep.subr.mxu0 0.0
    %352 = vmatpush1.msra.mxu0 0.0
    %353 = vmatprep.subr.mxu0 0.0
    %354 = vmatpush1.msra.mxu0 0.0
    %355 = vmatprep.subr.mxu0 0.0
    %356 = vmatpush1.msra.mxu0 0.0
    %357 = vmatprep.subr.mxu0 0.0
    %358 = vmatpush1.msra.mxu0 0.0
    %359 = vmatprep.subr.mxu0 0.0
    %360 = vmatpush1.msra.mxu0 0.0
    %361 = vmatprep.subr.mxu0 0.0
    %362 = vmatpush1.msra.mxu0 0.0
    %363 = vmatprep.subr.mxu0 0.0
    %364 = vmatpush1.msra.mxu0 0.0
    %365 = vmatprep.subr.mxu0 0.0
    %366 = vmatpush1.msra.mxu0 0.0
    %367 = vmatprep.subr.mxu0 0.0
    %368 = vmatpush1.msra.mxu0 0.0
    %369 = vmatprep.subr.mxu0 0.0
    %370 = vmatpush1.msra.mxu0 0.0
    %371 = vmatprep.subr.mxu0 0.0
    %372 = vmatpush1.msra.mxu0 0.0
    %373 = vmatprep.subr.mxu0 0.0
    %374 = vmatpush1.msra.mxu0 0.0
    %375 = vmatprep.subr.mxu0 0.0
    %376 = vmatpush1.msra.mxu0 0.0
    %377 = vmatprep.subr.mxu0 0.0
    %378 = vmatpush1.msra.mxu0 0.0
    %379 = vmatprep.subr.mxu0 0.0
    %380 = vmatpush1.msra.mxu0 0.0
    %381 = vmatprep.subr.mxu0 0.0
    %382 = vmatpush1.msra.mxu0 0.0
    %383 = vmatprep.subr.mxu0 0.0
    %384 = vmatpush1.msra.mxu0 0.0
    %385 = vmatprep.subr.mxu0 0.0
    %386 = vmatpush1.msra.mxu0 0.0
    %387 = vmatprep.subr.mxu0 0.0
    %388 = vmatpush1.msra.mxu0 0.0
    %389 = vmatprep.subr.mxu0 0.0
    %390 = vmatpush1.msra.mxu0 0.0
    %391 = vmatprep.subr.mxu0 0.0
    %392 = vmatpush1.msra.mxu0 0.0
    %393 = vmatprep.subr.mxu0 0.0
    %394 = vmatpush1.msra.mxu0 0.0
    %395 = vmatprep.subr.mxu0 0.0
    %396 = vmatpush1.msra.mxu0 0.0
    %397 = vmatprep.subr.mxu0 0.0
    %398 = vmatpush1.msra.mxu0 0.0
    %399 = vmatprep.subr.mxu0 0.0
    %400 = vmatpush1.msra.mxu0 0.0
    %401 = vmatprep.subr.mxu0 0.0
    %402 = vmatpush1.msra.mxu0 0.0
    %403 = vmatprep.subr.mxu0 0.0
    %404 = vmatpush1.msra.mxu0 0.0
    %405 = vmatprep.subr.mxu0 0.0
    %406 = vmatpush1.msra.mxu0 0.0
    %407 = vmatprep.subr.mxu0 0.0
    %408 = vmatpush1.msra.mxu0 0.0
    %409 = vmatprep.subr.mxu0 0.0
    %410 = vmatpush1.msra.mxu0 0.0
    %411 = vmatprep.mubr.f32.mxu0 0.0
    %412 = vmatmul.mubr.f32.gmra.mrb[0].mxu0 %v342
    %v413 = vpop.f32.mrb[0].mxu0
    %v414 = vadd.f32 0.0, %v413
    %v415 = vpop.f32.mrb[0].mxu0
    %416 = vmatprep.mubr.f32.mxu0 0.0
    %417 = vmatmul.mubr.f32.gmra.mrb[0].mxu0 %v345
    %v418 = vpop.f32.mrb[0].mxu0
    %v419 = vadd.f32 0.0, %v418
    %v420 = vpop.f32.mrb[0].mxu0
    %421 = vdwg.mxu0
    %422 = vrot.lane.b32.xlu0 %v117, 96
    %v423 = vpop.permute.xlu0 %422
    %v426 = vsel %vm127, %v336, 0
    %v429 = vsel %vm127, %v337, 0
    %431 = vmatprep.subr.mxu0 0.0
    %432 = vmatpush1.msra.mxu0 %v423
    %433 = vmatprep.subr.mxu0 0.0
    %434 = vmatpush1.msra.mxu0 0.0
    %435 = vmatprep.subr.mxu0 0.0
    %436 = vmatpush1.msra.mxu0 0.0
    %437 = vmatprep.subr.mxu0 0.0
    %438 = vmatpush1.msra.mxu0 0.0
    %439 = vmatprep.subr.mxu0 0.0
    %440 = vmatpush1.msra.mxu0 0.0
    %441 = vmatprep.subr.mxu0 0.0
    %442 = vmatpush1.msra.mxu0 0.0
    %443 = vmatprep.subr.mxu0 0.0
    %444 = vmatpush1.msra.mxu0 0.0
    %445 = vmatprep.subr.mxu0 0.0
    %446 = vmatpush1.msra.mxu0 0.0
    %447 = vmatprep.subr.mxu0 0.0
    %448 = vmatpush1.msra.mxu0 0.0
    %449 = vmatprep.subr.mxu0 0.0
    %450 = vmatpush1.msra.mxu0 0.0
    %451 = vmatprep.subr.mxu0 0.0
    %452 = vmatpush1.msra.mxu0 0.0
    %453 = vmatprep.subr.mxu0 0.0
    %454 = vmatpush1.msra.mxu0 0.0
    %455 = vmatprep.subr.mxu0 0.0
    %456 = vmatpush1.msra.mxu0 0.0
    %457 = vmatprep.subr.mxu0 0.0
    %458 = vmatpush1.msra.mxu0 0.0
    %459 = vmatprep.subr.mxu0 0.0
    %460 = vmatpush1.msra.mxu0 0.0
    %461 = vmatprep.subr.mxu0 0.0
    %462 = vmatpush1.msra.mxu0 0.0
    %463 = vmatprep.subr.mxu0 0.0
    %464 = vmatpush1.msra.mxu0 0.0
    %465 = vmatprep.subr.mxu0 0.0
    %466 = vmatpush1.msra.mxu0 0.0
    %467 = vmatprep.subr.mxu0 0.0
    %468 = vmatpush1.msra.mxu0 0.0
    %469 = vmatprep.subr.mxu0 0.0
    %470 = vmatpush1.msra.mxu0 0.0
    %471 = vmatprep.subr.mxu0 0.0
    %472 = vmatpush1.msra.mxu0 0.0
    %473 = vmatprep.subr.mxu0 0.0
    %474 = vmatpush1.msra.mxu0 0.0
    %475 = vmatprep.subr.mxu0 0.0
    %476 = vmatpush1.msra.mxu0 0.0
    %477 = vmatprep.subr.mxu0 0.0
    %478 = vmatpush1.msra.mxu0 0.0
    %479 = vmatprep.subr.mxu0 0.0
    %480 = vmatpush1.msra.mxu0 0.0
    %481 = vmatprep.subr.mxu0 0.0
    %482 = vmatpush1.msra.mxu0 0.0
    %483 = vmatprep.subr.mxu0 0.0
    %484 = vmatpush1.msra.mxu0 0.0
    %485 = vmatprep.subr.mxu0 0.0
    %486 = vmatpush1.msra.mxu0 0.0
    %487 = vmatprep.subr.mxu0 0.0
    %488 = vmatpush1.msra.mxu0 0.0
    %489 = vmatprep.subr.mxu0 0.0
    %490 = vmatpush1.msra.mxu0 0.0
    %491 = vmatprep.subr.mxu0 0.0
    %492 = vmatpush1.msra.mxu0 0.0
    %493 = vmatprep.subr.mxu0 0.0
    %494 = vmatpush1.msra.mxu0 0.0
    %495 = vmatprep.mubr.f32.mxu0 0.0
    %496 = vmatmul.mubr.f32.gmra.mrb[0].mxu0 %v426
    %v497 = vpop.f32.mrb[0].mxu0
    %v498 = vadd.f32 0.0, %v497
    %v499 = vpop.f32.mrb[0].mxu0
    %500 = vmatprep.mubr.f32.mxu0 0.0
    %501 = vmatmul.mubr.f32.gmra.mrb[0].mxu0 %v429
    %v502 = vpop.f32.mrb[0].mxu0
    %v503 = vadd.f32 0.0, %v502
    %v504 = vpop.f32.mrb[0].mxu0
    %505 = vdwg.mxu0
    %v506 = vadd.f32 %v125, %v414
    %v507 = vadd.f32 %v126, %v419
    %v508 = vadd.f32 %v125, %v498
    %v509 = vadd.f32 %v126, %v503
    %510 = vrot.lane.b32.xlu0 %v125, 120
    %v511 = vpop.permute.xlu0 %510
    %512 = vrot.lane.b32.xlu0 %v126, 120
    %v513 = vpop.permute.xlu0 %512
    %514 = vrot.lane.b32.xlu0 %v112, 120
    %v515 = vpop.permute.xlu0 %514
    %v516 = vsel %vm127, %v511, 0
    %v518 = vsel %vm127, %v513, 0
    %v520 = vsel %vm127, %v515, 0
    %522 = vmatprep.subr.mxu0 0.0
    %523 = vmatpush1.xpose.msra.mxu0 %v520
    %524 = vmatprep.subr.mxu0 0.0
    %525 = vmatpush1.xpose.msra.mxu0 0.0
    %526 = vmatprep.subr.mxu0 0.0
    %527 = vmatpush1.xpose.msra.mxu0 0.0
    %528 = vmatprep.subr.mxu0 0.0
    %529 = vmatpush1.xpose.msra.mxu0 0.0
    %530 = vmatprep.subr.mxu0 0.0
    %531 = vmatpush1.xpose.msra.mxu0 0.0
    %532 = vmatprep.subr.mxu0 0.0
    %533 = vmatpush1.xpose.msra.mxu0 0.0
    %534 = vmatprep.subr.mxu0 0.0
    %535 = vmatpush1.xpose.msra.mxu0 0.0
    %536 = vmatprep.subr.mxu0 0.0
    %537 = vmatpush1.xpose.msra.mxu0 0.0
    %538 = vmatprep.subr.mxu0 0.0
    %539 = vmatpush1.xpose.msra.mxu0 0.0
    %540 = vmatprep.subr.mxu0 0.0
    %541 = vmatpush1.xpose.msra.mxu0 0.0
    %542 = vmatprep.subr.mxu0 0.0
    %543 = vmatpush1.xpose.msra.mxu0 0.0
    %544 = vmatprep.subr.mxu0 0.0
    %545 = vmatpush1.xpose.msra.mxu0 0.0
    %546 = vmatprep.subr.mxu0 0.0
    %547 = vmatpush1.xpose.msra.mxu0 0.0
    %548 = vmatprep.subr.mxu0 0.0
    %549 = vmatpush1.xpose.msra.mxu0 0.0
    %550 = vmatprep.subr.mxu0 0.0
    %551 = vmatpush1.xpose.msra.mxu0 0.0
    %552 = vmatprep.subr.mxu0 0.0
    %553 = vmatpush1.xpose.msra.mxu0 0.0
    %554 = vmatprep.subr.mxu0 0.0
    %555 = vmatpush1.xpose.msra.mxu0 0.0
    %556 = vmatprep.subr.mxu0 0.0
    %557 = vmatpush1.xpose.msra.mxu0 0.0
    %558 = vmatprep.subr.mxu0 0.0
    %559 = vmatpush1.xpose.msra.mxu0 0.0
    %560 = vmatprep.subr.mxu0 0.0
    %561 = vmatpush1.xpose.msra.mxu0 0.0
    %562 = vmatprep.subr.mxu0 0.0
    %563 = vmatpush1.xpose.msra.mxu0 0.0
    %564 = vmatprep.subr.mxu0 0.0
    %565 = vmatpush1.xpose.msra.mxu0 0.0
    %566 = vmatprep.subr.mxu0 0.0
    %567 = vmatpush1.xpose.msra.mxu0 0.0
    %568 = vmatprep.subr.mxu0 0.0
    %569 = vmatpush1.xpose.msra.mxu0 0.0
    %570 = vmatprep.subr.mxu0 0.0
    %571 = vmatpush1.xpose.msra.mxu0 0.0
    %572 = vmatprep.subr.mxu0 0.0
    %573 = vmatpush1.xpose.msra.mxu0 0.0
    %574 = vmatprep.subr.mxu0 0.0
    %575 = vmatpush1.xpose.msra.mxu0 0.0
    %576 = vmatprep.subr.mxu0 0.0
    %577 = vmatpush1.xpose.msra.mxu0 0.0
    %578 = vmatprep.subr.mxu0 0.0
    %579 = vmatpush1.xpose.msra.mxu0 0.0
    %580 = vmatprep.subr.mxu0 0.0
    %581 = vmatpush1.xpose.msra.mxu0 0.0
    %582 = vmatprep.subr.mxu0 0.0
    %583 = vmatpush1.xpose.msra.mxu0 0.0
    %584 = vmatprep.subr.mxu0 0.0
    %585 = vmatpush1.xpose.msra.mxu0 0.0
    %586 = vmatprep.mubr.f32.mxu0 0.0
    %587 = vmatmul.mubr.f32.gmra.mrb[0].mxu0 %v516
    %v588 = vpop.f32.mrb[0].mxu0
    %v589 = vadd.f32 0.0, %v588
    %v590 = vpop.f32.mrb[0].mxu0
    %591 = vmatprep.mubr.f32.mxu0 0.0
    %592 = vmatmul.mubr.f32.gmra.mrb[0].mxu0 %v518
    %v593 = vpop.f32.mrb[0].mxu0
    %v594 = vadd.f32 0.0, %v593
    %v595 = vpop.f32.mrb[0].mxu0
    %596 = vdwg.mxu0
    %597 = vrot.lane.b32.xlu0 %v117, 120
    %v598 = vpop.permute.xlu0 %597
    %v599 = vsel %vm127, %v598, 0
    %601 = vmatprep.subr.mxu0 0.0
    %602 = vmatpush1.xpose.msra.mxu0 %v599
    %603 = vmatprep.subr.mxu0 0.0
    %604 = vmatpush1.xpose.msra.mxu0 0.0
    %605 = vmatprep.subr.mxu0 0.0
    %606 = vmatpush1.xpose.msra.mxu0 0.0
    %607 = vmatprep.subr.mxu0 0.0
    %608 = vmatpush1.xpose.msra.mxu0 0.0
    %609 = vmatprep.subr.mxu0 0.0
    %610 = vmatpush1.xpose.msra.mxu0 0.0
    %611 = vmatprep.subr.mxu0 0.0
    %612 = vmatpush1.xpose.msra.mxu0 0.0
    %613 = vmatprep.subr.mxu0 0.0
    %614 = vmatpush1.xpose.msra.mxu0 0.0
    %615 = vmatprep.subr.mxu0 0.0
    %616 = vmatpush1.xpose.msra.mxu0 0.0
    %617 = vmatprep.subr.mxu0 0.0
    %618 = vmatpush1.xpose.msra.mxu0 0.0
    %619 = vmatprep.subr.mxu0 0.0
    %620 = vmatpush1.xpose.msra.mxu0 0.0
    %621 = vmatprep.subr.mxu0 0.0
    %622 = vmatpush1.xpose.msra.mxu0 0.0
    %623 = vmatprep.subr.mxu0 0.0
    %624 = vmatpush1.xpose.msra.mxu0 0.0
    %625 = vmatprep.subr.mxu0 0.0
    %626 = vmatpush1.xpose.msra.mxu0 0.0
    %627 = vmatprep.subr.mxu0 0.0
    %628 = vmatpush1.xpose.msra.mxu0 0.0
    %629 = vmatprep.subr.mxu0 0.0
    %630 = vmatpush1.xpose.msra.mxu0 0.0
    %631 = vmatprep.subr.mxu0 0.0
    %632 = vmatpush1.xpose.msra.mxu0 0.0
    %633 = vmatprep.subr.mxu0 0.0
    %634 = vmatpush1.xpose.msra.mxu0 0.0
    %635 = vmatprep.subr.mxu0 0.0
    %636 = vmatpush1.xpose.msra.mxu0 0.0
    %637 = vmatprep.subr.mxu0 0.0
    %638 = vmatpush1.xpose.msra.mxu0 0.0
    %639 = vmatprep.subr.mxu0 0.0
    %640 = vmatpush1.xpose.msra.mxu0 0.0
    %641 = vmatprep.subr.mxu0 0.0
    %642 = vmatpush1.xpose.msra.mxu0 0.0
    %643 = vmatprep.subr.mxu0 0.0
    %644 = vmatpush1.xpose.msra.mxu0 0.0
    %645 = vmatprep.subr.mxu0 0.0
    %646 = vmatpush1.xpose.msra.mxu0 0.0
    %647 = vmatprep.subr.mxu0 0.0
    %648 = vmatpush1.xpose.msra.mxu0 0.0
    %649 = vmatprep.subr.mxu0 0.0
    %650 = vmatpush1.xpose.msra.mxu0 0.0
    %651 = vmatprep.subr.mxu0 0.0
    %652 = vmatpush1.xpose.msra.mxu0 0.0
    %653 = vmatprep.subr.mxu0 0.0
    %654 = vmatpush1.xpose.msra.mxu0 0.0
    %655 = vmatprep.subr.mxu0 0.0
    %656 = vmatpush1.xpose.msra.mxu0 0.0
    %657 = vmatprep.subr.mxu0 0.0
    %658 = vmatpush1.xpose.msra.mxu0 0.0
    %659 = vmatprep.subr.mxu0 0.0
    %660 = vmatpush1.xpose.msra.mxu0 0.0
    %661 = vmatprep.subr.mxu0 0.0
    %662 = vmatpush1.xpose.msra.mxu0 0.0
    %663 = vmatprep.subr.mxu0 0.0
    %664 = vmatpush1.xpose.msra.mxu0 0.0
    %665 = vmatprep.mubr.f32.mxu0 0.0
    %666 = vmatmul.mubr.f32.gmra.mrb[0].mxu0 %v516
    %v667 = vpop.f32.mrb[0].mxu0
    %v668 = vadd.f32 0.0, %v667
    %v669 = vpop.f32.mrb[0].mxu0
    %670 = vmatprep.mubr.f32.mxu0 0.0
    %671 = vmatmul.mubr.f32.gmra.mrb[0].mxu0 %v518
    %v672 = vpop.f32.mrb[0].mxu0
    %v673 = vadd.f32 0.0, %v672
    %v674 = vpop.f32.mrb[0].mxu0
    %675 = vdwg.mxu0
    %v676 = vmul.f32 %v589, 0.17677669
    %v677 = vmul.f32 %v594, 0.17677669
    %v678 = vmul.f32 %v668, 0.17677669
    %v679 = vmul.f32 %v673, 0.17677669
    %v680 = vsel %vm127, %v676, -inf
    %681 = vmax.xlane.f32.xlu0 %v680
    %v682 = vpop.xlane.xlu0 %681
    %v683 = vsel %vm127, %v677, -inf
    %684 = vmax.xlane.f32.xlu0 %v683
    %v685 = vpop.xlane.xlu0 %684
    %v686 = vsel %vm127, %v678, -inf
    %687 = vmax.xlane.f32.xlu0 %v686
    %v688 = vpop.xlane.xlu0 %687
    %v689 = vsel %vm127, %v679, -inf
    %690 = vmax.xlane.f32.xlu0 %v689
    %v691 = vpop.xlane.xlu0 %690
    %v692 = vsub.f32 %v676, %v682
    %v693 = vsub.f32 %v677, %v685
    %v694 = vsub.f32 %v678, %v688
    %v695 = vsub.f32 %v679, %v691
    %v696 = vmul.f32 %v692, 1.442695
    %v697 = vpow.pop %v696
    %v698 = vmul.f32 %v693, 1.442695
    %v699 = vpow.pop %v698
    %v700 = vmul.f32 %v694, 1.442695
    %v701 = vpow.pop %v700
    %v702 = vmul.f32 %v695, 1.442695
    %v703 = vpow.pop %v702
    %v704 = vsel %vm127, %v697, 0.0
    %705 = vadd.xlane.f32.xlu0 %v704
    %v706 = vpop.xlane.xlu0 %705
    %v707 = vsel %vm127, %v699, 0.0
    %708 = vadd.xlane.f32.xlu0 %v707
    %v709 = vpop.xlane.xlu0 %708
    %v710 = vsel %vm127, %v701, 0.0
    %711 = vadd.xlane.f32.xlu0 %v710
    %v712 = vpop.xlane.xlu0 %711
    %v713 = vsel %vm127, %v703, 0.0
    %714 = vadd.xlane.f32.xlu0 %v713
    %v715 = vpop.xlane.xlu0 %714
    %v716 = vrcp.pop %v706
    %v717 = vrcp.pop %v709
    %v718 = vrcp.pop %v712
    %v719 = vrcp.pop %v715
    %v720 = vmul.f32 %v697, %v716
    %v721 = vmul.f32 %v699, %v717
    %v722 = vmul.f32 %v701, %v718
    %v723 = vmul.f32 %v703, %v719
    %724 = vrot.lane.b32.xlu0 %v112, 88
    %v725 = vpop.permute.xlu0 %724
    %v728 = vsel %vm127, %v720, 0
    %v731 = vsel %vm127, %v721, 0
    %733 = vmatprep.subr.mxu0 0.0
    %734 = vmatpush1.msra.mxu0 %v725
    %735 = vmatprep.subr.mxu0 0.0
    %736 = vmatpush1.msra.mxu0 0.0
    %737 = vmatprep.subr.mxu0 0.0
    %738 = vmatpush1.msra.mxu0 0.0
    %739 = vmatprep.subr.mxu0 0.0
    %740 = vmatpush1.msra.mxu0 0.0
    %741 = vmatprep.subr.mxu0 0.0
    %742 = vmatpush1.msra.mxu0 0.0
    %743 = vmatprep.subr.mxu0 0.0
    %744 = vmatpush1.msra.mxu0 0.0
    %745 = vmatprep.subr.mxu0 0.0
    %746 = vmatpush1.msra.mxu0 0.0
    %747 = vmatprep.subr.mxu0 0.0
    %748 = vmatpush1.msra.mxu0 0.0
    %749 = vmatprep.subr.mxu0 0.0
    %750 = vmatpush1.msra.mxu0 0.0
    %751 = vmatprep.subr.mxu0 0.0
    %752 = vmatpush1.msra.mxu0 0.0
    %753 = vmatprep.subr.mxu0 0.0
    %754 = vmatpush1.msra.mxu0 0.0
    %755 = vmatprep.subr.mxu0 0.0
    %756 = vmatpush1.msra.mxu0 0.0
    %757 = vmatprep.subr.mxu0 0.0
    %758 = vmatpush1.msra.mxu0 0.0
    %759 = vmatprep.subr.mxu0 0.0
    %760 = vmatpush1.msra.mxu0 0.0
    %761 = vmatprep.subr.mxu0 0.0
    %762 = vmatpush1.msra.mxu0 0.0
    %763 = vmatprep.subr.mxu0 0.0
    %764 = vmatpush1.msra.mxu0 0.0
    %765 = vmatprep.subr.mxu0 0.0
    %766 = vmatpush1.msra.mxu0 0.0
    %767 = vmatprep.subr.mxu0 0.0
    %768 = vmatpush1.msra.mxu0 0.0
    %769 = vmatprep.subr.mxu0 0.0
    %770 = vmatpush1.msra.mxu0 0.0
    %771 = vmatprep.subr.mxu0 0.0
    %772 = vmatpush1.msra.mxu0 0.0
    %773 = vmatprep.subr.mxu0 0.0
    %774 = vmatpush1.msra.mxu0 0.0
    %775 = vmatprep.subr.mxu0 0.0
    %776 = vmatpush1.msra.mxu0 0.0
    %777 = vmatprep.subr.mxu0 0.0
    %778 = vmatpush1.msra.mxu0 0.0
    %779 = vmatprep.subr.mxu0 0.0
    %780 = vmatpush1.msra.mxu0 0.0
    %781 = vmatprep.subr.mxu0 0.0
    %782 = vmatpush1.msra.mxu0 0.0
    %783 = vmatprep.subr.mxu0 0.0
    %784 = vmatpush1.msra.mxu0 0.0
    %785 = vmatprep.subr.mxu0 0.0
    %786 = vmatpush1.msra.mxu0 0.0
    %787 = vmatprep.subr.mxu0 0.0
    %788 = vmatpush1.msra.mxu0 0.0
    %789 = vmatprep.subr.mxu0 0.0
    %790 = vmatpush1.msra.mxu0 0.0
    %791 = vmatprep.subr.mxu0 0.0
    %792 = vmatpush1.msra.mxu0 0.0
    %793 = vmatprep.subr.mxu0 0.0
    %794 = vmatpush1.msra.mxu0 0.0
    %795 = vmatprep.subr.mxu0 0.0
    %796 = vmatpush1.msra.mxu0 0.0
    %797 = vmatprep.mubr.f32.mxu0 0.0
    %798 = vmatmul.mubr.f32.gmra.mrb[0].mxu0 %v728
    %v799 = vpop.f32.mrb[0].mxu0
    %v800 = vadd.f32 0.0, %v799
    %v801 = vpop.f32.mrb[0].mxu0
    %802 = vmatprep.mubr.f32.mxu0 0.0
    %803 = vmatmul.mubr.f32.gmra.mrb[0].mxu0 %v731
    %v804 = vpop.f32.mrb[0].mxu0
    %v805 = vadd.f32 0.0, %v804
    %v806 = vpop.f32.mrb[0].mxu0
    %807 = vdwg.mxu0
    %808 = vrot.lane.b32.xlu0 %v117, 88
    %v809 = vpop.permute.xlu0 %808
    %v812 = vsel %vm127, %v722, 0
    %v815 = vsel %vm127, %v723, 0
    %817 = vmatprep.subr.mxu0 0.0
    %818 = vmatpush1.msra.mxu0 %v809
    %819 = vmatprep.subr.mxu0 0.0
    %820 = vmatpush1.msra.mxu0 0.0
    %821 = vmatprep.subr.mxu0 0.0
    %822 = vmatpush1.msra.mxu0 0.0
    %823 = vmatprep.subr.mxu0 0.0
    %824 = vmatpush1.msra.mxu0 0.0
    %825 = vmatprep.subr.mxu0 0.0
    %826 = vmatpush1.msra.mxu0 0.0
    %827 = vmatprep.subr.mxu0 0.0
    %828 = vmatpush1.msra.mxu0 0.0
    %829 = vmatprep.subr.mxu0 0.0
    %830 = vmatpush1.msra.mxu0 0.0
    %831 = vmatprep.subr.mxu0 0.0
    %832 = vmatpush1.msra.mxu0 0.0
    %833 = vmatprep.subr.mxu0 0.0
    %834 = vmatpush1.msra.mxu0 0.0
    %835 = vmatprep.subr.mxu0 0.0
    %836 = vmatpush1.msra.mxu0 0.0
    %837 = vmatprep.subr.mxu0 0.0
    %838 = vmatpush1.msra.mxu0 0.0
    %839 = vmatprep.subr.mxu0 0.0
    %840 = vmatpush1.msra.mxu0 0.0
    %841 = vmatprep.subr.mxu0 0.0
    %842 = vmatpush1.msra.mxu0 0.0
    %843 = vmatprep.subr.mxu0 0.0
    %844 = vmatpush1.msra.mxu0 0.0
    %845 = vmatprep.subr.mxu0 0.0
    %846 = vmatpush1.msra.mxu0 0.0
    %847 = vmatprep.subr.mxu0 0.0
    %848 = vmatpush1.msra.mxu0 0.0
    %849 = vmatprep.subr.mxu0 0.0
    %850 = vmatpush1.msra.mxu0 0.0
    %851 = vmatprep.subr.mxu0 0.0
    %852 = vmatpush1.msra.mxu0 0.0
    %853 = vmatprep.subr.mxu0 0.0
    %854 = vmatpush1.msra.mxu0 0.0
    %855 = vmatprep.subr.mxu0 0.0
    %856 = vmatpush1.msra.mxu0 0.0
    %857 = vmatprep.subr.mxu0 0.0
    %858 = vmatpush1.msra.mxu0 0.0
    %859 = vmatprep.subr.mxu0 0.0
    %860 = vmatpush1.msra.mxu0 0.0
    %861 = vmatprep.subr.mxu0 0.0
    %862 = vmatpush1.msra.mxu0 0.0
    %863 = vmatprep.subr.mxu0 0.0
    %864 = vmatpush1.msra.mxu0 0.0
    %865 = vmatprep.subr.mxu0 0.0
    %866 = vmatpush1.msra.mxu0 0.0
    %867 = vmatprep.subr.mxu0 0.0
    %868 = vmatpush1.msra.mxu0 0.0
    %869 = vmatprep.subr.mxu0 0.0
    %870 = vmatpush1.msra.mxu0 0.0
    %871 = vmatprep.subr.mxu0 0.0
    %872 = vmatpush1.msra.mxu0 0.0
    %873 = vmatprep.subr.mxu0 0.0
    %874 = vmatpush1.msra.mxu0 0.0
    %875 = vmatprep.subr.mxu0 0.0
    %876 = vmatpush1.msra.mxu0 0.0
    %877 = vmatprep.subr.mxu0 0.0
    %878 = vmatpush1.msra.mxu0 0.0
    %879 = vmatprep.subr.mxu0 0.0
    %880 = vmatpush1.msra.mxu0 0.0
    %881 = vmatprep.mubr.f32.mxu0 0.0
    %882 = vmatmul.mubr.f32.gmra.mrb[0].mxu0 %v812
    %v883 = vpop.f32.mrb[0].mxu0
    %v884 = vadd.f32 0.0, %v883
    %v885 = vpop.f32.mrb[0].mxu0
    %886 = vmatprep.mubr.f32.mxu0 0.0
    %887 = vmatmul.mubr.f32.gmra.mrb[0].mxu0 %v815
    %v888 = vpop.f32.mrb[0].mxu0
    %v889 = vadd.f32 0.0, %v888
    %v890 = vpop.f32.mrb[0].mxu0
    %891 = vdwg.mxu0
    %896 = vrot.lane.b32.xlu0 %v800, 8
    %v897 = vpop.permute.xlu0 %896
    %898 = vrot.lane.b32.xlu0 %v805, 8
    %v899 = vpop.permute.xlu0 %898
    %900 = vrot.lane.b32.xlu0 %v884, 8
    %v901 = vpop.permute.xlu0 %900
    %902 = vrot.lane.b32.xlu0 %v889, 8
    %v903 = vpop.permute.xlu0 %902
    %v908 = vadd.f32 %v125, %v897
    %v909 = vadd.f32 %v126, %v899
    %v910 = vadd.f32 %v125, %v901
    %v911 = vadd.f32 %v126, %v903
    %912 = vrot.lane.b32.xlu0 %v125, 112
    %v913 = vpop.permute.xlu0 %912
    %914 = vrot.lane.b32.xlu0 %v126, 112
    %v915 = vpop.permute.xlu0 %914
    %916 = vrot.lane.b32.xlu0 %v112, 112
    %v917 = vpop.permute.xlu0 %916
    %v918 = vsel %vm127, %v913, 0
    %v920 = vsel %vm127, %v915, 0
    %v922 = vsel %vm127, %v917, 0
    %924 = vmatprep.subr.mxu0 0.0
    %925 = vmatpush1.xpose.msra.mxu0 %v922
    %926 = vmatprep.subr.mxu0 0.0
    %927 = vmatpush1.xpose.msra.mxu0 0.0
    %928 = vmatprep.subr.mxu0 0.0
    %929 = vmatpush1.xpose.msra.mxu0 0.0
    %930 = vmatprep.subr.mxu0 0.0
    %931 = vmatpush1.xpose.msra.mxu0 0.0
    %932 = vmatprep.subr.mxu0 0.0
    %933 = vmatpush1.xpose.msra.mxu0 0.0
    %934 = vmatprep.subr.mxu0 0.0
    %935 = vmatpush1.xpose.msra.mxu0 0.0
    %936 = vmatprep.subr.mxu0 0.0
    %937 = vmatpush1.xpose.msra.mxu0 0.0
    %938 = vmatprep.subr.mxu0 0.0
    %939 = vmatpush1.xpose.msra.mxu0 0.0
    %940 = vmatprep.subr.mxu0 0.0
    %941 = vmatpush1.xpose.msra.mxu0 0.0
    %942 = vmatprep.subr.mxu0 0.0
    %943 = vmatpush1.xpose.msra.mxu0 0.0
    %944 = vmatprep.subr.mxu0 0.0
    %945 = vmatpush1.xpose.msra.mxu0 0.0
    %946 = vmatprep.subr.mxu0 0.0
    %947 = vmatpush1.xpose.msra.mxu0 0.0
    %948 = vmatprep.subr.mxu0 0.0
    %949 = vmatpush1.xpose.msra.mxu0 0.0
    %950 = vmatprep.subr.mxu0 0.0
    %951 = vmatpush1.xpose.msra.mxu0 0.0
    %952 = vmatprep.subr.mxu0 0.0
    %953 = vmatpush1.xpose.msra.mxu0 0.0
    %954 = vmatprep.subr.mxu0 0.0
    %955 = vmatpush1.xpose.msra.mxu0 0.0
    %956 = vmatprep.subr.mxu0 0.0
    %957 = vmatpush1.xpose.msra.mxu0 0.0
    %958 = vmatprep.subr.mxu0 0.0
    %959 = vmatpush1.xpose.msra.mxu0 0.0
    %960 = vmatprep.subr.mxu0 0.0
    %961 = vmatpush1.xpose.msra.mxu0 0.0
    %962 = vmatprep.subr.mxu0 0.0
    %963 = vmatpush1.xpose.msra.mxu0 0.0
    %964 = vmatprep.subr.mxu0 0.0
    %965 = vmatpush1.xpose.msra.mxu0 0.0
    %966 = vmatprep.subr.mxu0 0.0
    %967 = vmatpush1.xpose.msra.mxu0 0.0
    %968 = vmatprep.subr.mxu0 0.0
    %969 = vmatpush1.xpose.msra.mxu0 0.0
    %970 = vmatprep.subr.mxu0 0.0
    %971 = vmatpush1.xpose.msra.mxu0 0.0
    %972 = vmatprep.subr.mxu0 0.0
    %973 = vmatpush1.xpose.msra.mxu0 0.0
    %974 = vmatprep.subr.mxu0 0.0
    %975 = vmatpush1.xpose.msra.mxu0 0.0
    %976 = vmatprep.subr.mxu0 0.0
    %977 = vmatpush1.xpose.msra.mxu0 0.0
    %978 = vmatprep.subr.mxu0 0.0
    %979 = vmatpush1.xpose.msra.mxu0 0.0
    %980 = vmatprep.subr.mxu0 0.0
    %981 = vmatpush1.xpose.msra.mxu0 0.0
    %982 = vmatprep.subr.mxu0 0.0
    %983 = vmatpush1.xpose.msra.mxu0 0.0
    %984 = vmatprep.subr.mxu0 0.0
    %985 = vmatpush1.xpose.msra.mxu0 0.0
    %986 = vmatprep.subr.mxu0 0.0
    %987 = vmatpush1.xpose.msra.mxu0 0.0
    %988 = vmatprep.mubr.f32.mxu0 0.0
    %989 = vmatmul.mubr.f32.gmra.mrb[0].mxu0 %v918
    %v990 = vpop.f32.mrb[0].mxu0
    %v991 = vadd.f32 0.0, %v990
    %v992 = vpop.f32.mrb[0].mxu0
    %993 = vmatprep.mubr.f32.mxu0 0.0
    %994 = vmatmul.mubr.f32.gmra.mrb[0].mxu0 %v920
    %v995 = vpop.f32.mrb[0].mxu0
    %v996 = vadd.f32 0.0, %v995
    %v997 = vpop.f32.mrb[0].mxu0
    %998 = vdwg.mxu0
    %999 = vrot.lane.b32.xlu0 %v117, 112
    %v1000 = vpop.permute.xlu0 %999
    %v1001 = vsel %vm127, %v1000, 0
    %1003 = vmatprep.subr.mxu0 0.0
    %1004 = vmatpush1.xpose.msra.mxu0 %v1001
    %1005 = vmatprep.subr.mxu0 0.0
    %1006 = vmatpush1.xpose.msra.mxu0 0.0
    %1007 = vmatprep.subr.mxu0 0.0
    %1008 = vmatpush1.xpose.msra.mxu0 0.0
    %1009 = vmatprep.subr.mxu0 0.0
    %1010 = vmatpush1.xpose.msra.mxu0 0.0
    %1011 = vmatprep.subr.mxu0 0.0
    %1012 = vmatpush1.xpose.msra.mxu0 0.0
    %1013 = vmatprep.subr.mxu0 0.0
    %1014 = vmatpush1.xpose.msra.mxu0 0.0
    %1015 = vmatprep.subr.mxu0 0.0
    %1016 = vmatpush1.xpose.msra.mxu0 0.0
    %1017 = vmatprep.subr.mxu0 0.0
    %1018 = vmatpush1.xpose.msra.mxu0 0.0
    %1019 = vmatprep.subr.mxu0 0.0
    %1020 = vmatpush1.xpose.msra.mxu0 0.0
    %1021 = vmatprep.subr.mxu0 0.0
    %1022 = vmatpush1.xpose.msra.mxu0 0.0
    %1023 = vmatprep.subr.mxu0 0.0
    %1024 = vmatpush1.xpose.msra.mxu0 0.0
    %1025 = vmatprep.subr.mxu0 0.0
    %1026 = vmatpush1.xpose.msra.mxu0 0.0
    %1027 = vmatprep.subr.mxu0 0.0
    %1028 = vmatpush1.xpose.msra.mxu0 0.0
    %1029 = vmatprep.subr.mxu0 0.0
    %1030 = vmatpush1.xpose.msra.mxu0 0.0
    %1031 = vmatprep.subr.mxu0 0.0
    %1032 = vmatpush1.xpose.msra.mxu0 0.0
    %1033 = vmatprep.subr.mxu0 0.0
    %1034 = vmatpush1.xpose.msra.mxu0 0.0
    %1035 = vmatprep.subr.mxu0 0.0
    %1036 = vmatpush1.xpose.msra.mxu0 0.0
    %1037 = vmatprep.subr.mxu0 0.0
    %1038 = vmatpush1.xpose.msra.mxu0 0.0
    %1039 = vmatprep.subr.mxu0 0.0
    %1040 = vmatpush1.xpose.msra.mxu0 0.0
    %1041 = vmatprep.subr.mxu0 0.0
    %1042 = vmatpush1.xpose.msra.mxu0 0.0
    %1043 = vmatprep.subr.mxu0 0.0
    %1044 = vmatpush1.xpose.msra.mxu0 0.0
    %1045 = vmatprep.subr.mxu0 0.0
    %1046 = vmatpush1.xpose.msra.mxu0 0.0
    %1047 = vmatprep.subr.mxu0 0.0
    %1048 = vmatpush1.xpose.msra.mxu0 0.0
    %1049 = vmatprep.subr.mxu0 0.0
    %1050 = vmatpush1.xpose.msra.mxu0 0.0
    %1051 = vmatprep.subr.mxu0 0.0
    %1052 = vmatpush1.xpose.msra.mxu0 0.0
    %1053 = vmatprep.subr.mxu0 0.0
    %1054 = vmatpush1.xpose.msra.mxu0 0.0
    %1055 = vmatprep.subr.mxu0 0.0
    %1056 = vmatpush1.xpose.msra.mxu0 0.0
    %1057 = vmatprep.subr.mxu0 0.0
    %1058 = vmatpush1.xpose.msra.mxu0 0.0
    %1059 = vmatprep.subr.mxu0 0.0
    %1060 = vmatpush1.xpose.msra.mxu0 0.0
    %1061 = vmatprep.subr.mxu0 0.0
    %1062 = vmatpush1.xpose.msra.mxu0 0.0
    %1063 = vmatprep.subr.mxu0 0.0
    %1064 = vmatpush1.xpose.msra.mxu0 0.0
    %1065 = vmatprep.subr.mxu0 0.0
    %1066 = vmatpush1.xpose.msra.mxu0 0.0
    %1067 = vmatprep.mubr.f32.mxu0 0.0
    %1068 = vmatmul.mubr.f32.gmra.mrb[0].mxu0 %v918
    %v1069 = vpop.f32.mrb[0].mxu0
    %v1070 = vadd.f32 0.0, %v1069
    %v1071 = vpop.f32.mrb[0].mxu0
    %1072 = vmatprep.mubr.f32.mxu0 0.0
    %1073 = vmatmul.mubr.f32.gmra.mrb[0].mxu0 %v920
    %v1074 = vpop.f32.mrb[0].mxu0
    %v1075 = vadd.f32 0.0, %v1074
    %v1076 = vpop.f32.mrb[0].mxu0
    %1077 = vdwg.mxu0
    %v1078 = vmul.f32 %v991, 0.17677669
    %v1079 = vmul.f32 %v996, 0.17677669
    %v1080 = vmul.f32 %v1070, 0.17677669
    %v1081 = vmul.f32 %v1075, 0.17677669
    %v1082 = vsel %vm127, %v1078, -inf
    %1083 = vmax.xlane.f32.xlu0 %v1082
    %v1084 = vpop.xlane.xlu0 %1083
    %v1085 = vsel %vm127, %v1079, -inf
    %1086 = vmax.xlane.f32.xlu0 %v1085
    %v1087 = vpop.xlane.xlu0 %1086
    %v1088 = vsel %vm127, %v1080, -inf
    %1089 = vmax.xlane.f32.xlu0 %v1088
    %v1090 = vpop.xlane.xlu0 %1089
    %v1091 = vsel %vm127, %v1081, -inf
    %1092 = vmax.xlane.f32.xlu0 %v1091
    %v1093 = vpop.xlane.xlu0 %1092
    %v1094 = vsub.f32 %v1078, %v1084
    %v1095 = vsub.f32 %v1079, %v1087
    %v1096 = vsub.f32 %v1080, %v1090
    %v1097 = vsub.f32 %v1081, %v1093
    %v1098 = vmul.f32 %v1094, 1.442695
    %v1099 = vpow.pop %v1098
    %v1100 = vmul.f32 %v1095, 1.442695
    %v1101 = vpow.pop %v1100
    %v1102 = vmul.f32 %v1096, 1.442695
    %v1103 = vpow.pop %v1102
    %v1104 = vmul.f32 %v1097, 1.442695
    %v1105 = vpow.pop %v1104
    %v1106 = vsel %vm127, %v1099, 0.0
    %1107 = vadd.xlane.f32.xlu0 %v1106
    %v1108 = vpop.xlane.xlu0 %1107
    %v1109 = vsel %vm127, %v1101, 0.0
    %1110 = vadd.xlane.f32.xlu0 %v1109
    %v1111 = vpop.xlane.xlu0 %1110
    %v1112 = vsel %vm127, %v1103, 0.0
    %1113 = vadd.xlane.f32.xlu0 %v1112
    %v1114 = vpop.xlane.xlu0 %1113
    %v1115 = vsel %vm127, %v1105, 0.0
    %1116 = vadd.xlane.f32.xlu0 %v1115
    %v1117 = vpop.xlane.xlu0 %1116
    %v1118 = vrcp.pop %v1108
    %v1119 = vrcp.pop %v1111
    %v1120 = vrcp.pop %v1114
    %v1121 = vrcp.pop %v1117
    %v1122 = vmul.f32 %v1099, %v1118
    %v1123 = vmul.f32 %v1101, %v1119
    %v1124 = vmul.f32 %v1103, %v1120
    %v1125 = vmul.f32 %v1105, %v1121
    %1126 = vrot.lane.b32.xlu0 %v112, 80
    %v1127 = vpop.permute.xlu0 %1126
    %v1130 = vsel %vm127, %v1122, 0
    %v1133 = vsel %vm127, %v1123, 0
    %1135 = vmatprep.subr.mxu0 0.0
    %1136 = vmatpush1.msra.mxu0 %v1127
    %1137 = vmatprep.subr.mxu0 0.0
    %1138 = vmatpush1.msra.mxu0 0.0
    %1139 = vmatprep.subr.mxu0 0.0
    %1140 = vmatpush1.msra.mxu0 0.0
    %1141 = vmatprep.subr.mxu0 0.0
    %1142 = vmatpush1.msra.mxu0 0.0
    %1143 = vmatprep.subr.mxu0 0.0
    %1144 = vmatpush1.msra.mxu0 0.0
    %1145 = vmatprep.subr.mxu0 0.0
    %1146 = vmatpush1.msra.mxu0 0.0
    %1147 = vmatprep.subr.mxu0 0.0
    %1148 = vmatpush1.msra.mxu0 0.0
    %1149 = vmatprep.subr.mxu0 0.0
    %1150 = vmatpush1.msra.mxu0 0.0
    %1151 = vmatprep.subr.mxu0 0.0
    %1152 = vmatpush1.msra.mxu0 0.0
    %1153 = vmatprep.subr.mxu0 0.0
    %1154 = vmatpush1.msra.mxu0 0.0
    %1155 = vmatprep.subr.mxu0 0.0
    %1156 = vmatpush1.msra.mxu0 0.0
    %1157 = vmatprep.subr.mxu0 0.0
    %1158 = vmatpush1.msra.mxu0 0.0
    %1159 = vmatprep.subr.mxu0 0.0
    %1160 = vmatpush1.msra.mxu0 0.0
    %1161 = vmatprep.subr.mxu0 0.0
    %1162 = vmatpush1.msra.mxu0 0.0
    %1163 = vmatprep.subr.mxu0 0.0
    %1164 = vmatpush1.msra.mxu0 0.0
    %1165 = vmatprep.subr.mxu0 0.0
    %1166 = vmatpush1.msra.mxu0 0.0
    %1167 = vmatprep.subr.mxu0 0.0
    %1168 = vmatpush1.msra.mxu0 0.0
    %1169 = vmatprep.subr.mxu0 0.0
    %1170 = vmatpush1.msra.mxu0 0.0
    %1171 = vmatprep.subr.mxu0 0.0
    %1172 = vmatpush1.msra.mxu0 0.0
    %1173 = vmatprep.subr.mxu0 0.0
    %1174 = vmatpush1.msra.mxu0 0.0
    %1175 = vmatprep.subr.mxu0 0.0
    %1176 = vmatpush1.msra.mxu0 0.0
    %1177 = vmatprep.subr.mxu0 0.0
    %1178 = vmatpush1.msra.mxu0 0.0
    %1179 = vmatprep.subr.mxu0 0.0
    %1180 = vmatpush1.msra.mxu0 0.0
    %1181 = vmatprep.subr.mxu0 0.0
    %1182 = vmatpush1.msra.mxu0 0.0
    %1183 = vmatprep.subr.mxu0 0.0
    %1184 = vmatpush1.msra.mxu0 0.0
    %1185 = vmatprep.subr.mxu0 0.0
    %1186 = vmatpush1.msra.mxu0 0.0
    %1187 = vmatprep.subr.mxu0 0.0
    %1188 = vmatpush1.msra.mxu0 0.0
    %1189 = vmatprep.subr.mxu0 0.0
    %1190 = vmatpush1.msra.mxu0 0.0
    %1191 = vmatprep.subr.mxu0 0.0
    %1192 = vmatpush1.msra.mxu0 0.0
    %1193 = vmatprep.subr.mxu0 0.0
    %1194 = vmatpush1.msra.mxu0 0.0
    %1195 = vmatprep.subr.mxu0 0.0
    %1196 = vmatpush1.msra.mxu0 0.0
    %1197 = vmatprep.subr.mxu0 0.0
    %1198 = vmatpush1.msra.mxu0 0.0
    %1199 = vmatprep.mubr.f32.mxu0 0.0
    %1200 = vmatmul.mubr.f32.gmra.mrb[0].mxu0 %v1130
    %v1201 = vpop.f32.mrb[0].mxu0
    %v1202 = vadd.f32 0.0, %v1201
    %v1203 = vpop.f32.mrb[0].mxu0
    %1204 = vmatprep.mubr.f32.mxu0 0.0
    %1205 = vmatmul.mubr.f32.gmra.mrb[0].mxu0 %v1133
    %v1206 = vpop.f32.mrb[0].mxu0
    %v1207 = vadd.f32 0.0, %v1206
    %v1208 = vpop.f32.mrb[0].mxu0
    %1209 = vdwg.mxu0
    %1210 = vrot.lane.b32.xlu0 %v117, 80
    %v1211 = vpop.permute.xlu0 %1210
    %v1214 = vsel %vm127, %v1124, 0
    %v1217 = vsel %vm127, %v1125, 0
    %1219 = vmatprep.subr.mxu0 0.0
    %1220 = vmatpush1.msra.mxu0 %v1211
    %1221 = vmatprep.subr.mxu0 0.0
    %1222 = vmatpush1.msra.mxu0 0.0
    %1223 = vmatprep.subr.mxu0 0.0
    %1224 = vmatpush1.msra.mxu0 0.0
    %1225 = vmatprep.subr.mxu0 0.0
    %1226 = vmatpush1.msra.mxu0 0.0
    %1227 = vmatprep.subr.mxu0 0.0
    %1228 = vmatpush1.msra.mxu0 0.0
    %1229 = vmatprep.subr.mxu0 0.0
    %1230 = vmatpush1.msra.mxu0 0.0
    %1231 = vmatprep.subr.mxu0 0.0
    %1232 = vmatpush1.msra.mxu0 0.0
    %1233 = vmatprep.subr.mxu0 0.0
    %1234 = vmatpush1.msra.mxu0 0.0
    %1235 = vmatprep.subr.mxu0 0.0
    %1236 = vmatpush1.msra.mxu0 0.0
    %1237 = vmatprep.subr.mxu0 0.0
    %1238 = vmatpush1.msra.mxu0 0.0
    %1239 = vmatprep.subr.mxu0 0.0
    %1240 = vmatpush1.msra.mxu0 0.0
    %1241 = vmatprep.subr.mxu0 0.0
    %1242 = vmatpush1.msra.mxu0 0.0
    %1243 = vmatprep.subr.mxu0 0.0
    %1244 = vmatpush1.msra.mxu0 0.0
    %1245 = vmatprep.subr.mxu0 0.0
    %1246 = vmatpush1.msra.mxu0 0.0
    %1247 = vmatprep.subr.mxu0 0.0
    %1248 = vmatpush1.msra.mxu0 0.0
    %1249 = vmatprep.subr.mxu0 0.0
    %1250 = vmatpush1.msra.mxu0 0.0
    %1251 = vmatprep.subr.mxu0 0.0
    %1252 = vmatpush1.msra.mxu0 0.0
    %1253 = vmatprep.subr.mxu0 0.0
    %1254 = vmatpush1.msra.mxu0 0.0
    %1255 = vmatprep.subr.mxu0 0.0
    %1256 = vmatpush1.msra.mxu0 0.0
    %1257 = vmatprep.subr.mxu0 0.0
    %1258 = vmatpush1.msra.mxu0 0.0
    %1259 = vmatprep.subr.mxu0 0.0
    %1260 = vmatpush1.msra.mxu0 0.0
    %1261 = vmatprep.subr.mxu0 0.0
    %1262 = vmatpush1.msra.mxu0 0.0
    %1263 = vmatprep.subr.mxu0 0.0
    %1264 = vmatpush1.msra.mxu0 0.0
    %1265 = vmatprep.subr.mxu0 0.0
    %1266 = vmatpush1.msra.mxu0 0.0
    %1267 = vmatprep.subr.mxu0 0.0
    %1268 = vmatpush1.msra.mxu0 0.0
    %1269 = vmatprep.subr.mxu0 0.0
    %1270 = vmatpush1.msra.mxu0 0.0
    %1271 = vmatprep.subr.mxu0 0.0
    %1272 = vmatpush1.msra.mxu0 0.0
    %1273 = vmatprep.subr.mxu0 0.0
    %1274 = vmatpush1.msra.mxu0 0.0
    %1275 = vmatprep.subr.mxu0 0.0
    %1276 = vmatpush1.msra.mxu0 0.0
    %1277 = vmatprep.subr.mxu0 0.0
    %1278 = vmatpush1.msra.mxu0 0.0
    %1279 = vmatprep.subr.mxu0 0.0
    %1280 = vmatpush1.msra.mxu0 0.0
    %1281 = vmatprep.subr.mxu0 0.0
    %1282 = vmatpush1.msra.mxu0 0.0
    %1283 = vmatprep.mubr.f32.mxu0 0.0
    %1284 = vmatmul.mubr.f32.gmra.mrb[0].mxu0 %v1214
    %v1285 = vpop.f32.mrb[0].mxu0
    %v1286 = vadd.f32 0.0, %v1285
    %v1287 = vpop.f32.mrb[0].mxu0
    %1288 = vmatprep.mubr.f32.mxu0 0.0
    %1289 = vmatmul.mubr.f32.gmra.mrb[0].mxu0 %v1217
    %v1290 = vpop.f32.mrb[0].mxu0
    %v1291 = vadd.f32 0.0, %v1290
    %v1292 = vpop.f32.mrb[0].mxu0
    %1293 = vdwg.mxu0
    %1298 = vrot.lane.b32.xlu0 %v1202, 16
    %v1299 = vpop.permute.xlu0 %1298
    %1300 = vrot.lane.b32.xlu0 %v1207, 16
    %v1301 = vpop.permute.xlu0 %1300
    %1302 = vrot.lane.b32.xlu0 %v1286, 16
    %v1303 = vpop.permute.xlu0 %1302
    %1304 = vrot.lane.b32.xlu0 %v1291, 16
    %v1305 = vpop.permute.xlu0 %1304
    %v1310 = vadd.f32 %v125, %v1299
    %v1311 = vadd.f32 %v126, %v1301
    %v1312 = vadd.f32 %v125, %v1303
    %v1313 = vadd.f32 %v126, %v1305
    %1314 = vrot.lane.b32.xlu0 %v125, 104
    %v1315 = vpop.permute.xlu0 %1314
    %1316 = vrot.lane.b32.xlu0 %v126, 104
    %v1317 = vpop.permute.xlu0 %1316
    %1318 = vrot.lane.b32.xlu0 %v112, 104
    %v1319 = vpop.permute.xlu0 %1318
    %v1320 = vsel %vm127, %v1315, 0
    %v1322 = vsel %vm127, %v1317, 0
    %v1324 = vsel %vm127, %v1319, 0
    %1326 = vmatprep.subr.mxu0 0.0
    %1327 = vmatpush1.xpose.msra.mxu0 %v1324
    %1328 = vmatprep.subr.mxu0 0.0
    %1329 = vmatpush1.xpose.msra.mxu0 0.0
    %1330 = vmatprep.subr.mxu0 0.0
    %1331 = vmatpush1.xpose.msra.mxu0 0.0
    %1332 = vmatprep.subr.mxu0 0.0
    %1333 = vmatpush1.xpose.msra.mxu0 0.0
    %1334 = vmatprep.subr.mxu0 0.0
    %1335 = vmatpush1.xpose.msra.mxu0 0.0
    %1336 = vmatprep.subr.mxu0 0.0
    %1337 = vmatpush1.xpose.msra.mxu0 0.0
    %1338 = vmatprep.subr.mxu0 0.0
    %1339 = vmatpush1.xpose.msra.mxu0 0.0
    %1340 = vmatprep.subr.mxu0 0.0
    %1341 = vmatpush1.xpose.msra.mxu0 0.0
    %1342 = vmatprep.subr.mxu0 0.0
    %1343 = vmatpush1.xpose.msra.mxu0 0.0
    %1344 = vmatprep.subr.mxu0 0.0
    %1345 = vmatpush1.xpose.msra.mxu0 0.0
    %1346 = vmatprep.subr.mxu0 0.0
    %1347 = vmatpush1.xpose.msra.mxu0 0.0
    %1348 = vmatprep.subr.mxu0 0.0
    %1349 = vmatpush1.xpose.msra.mxu0 0.0
    %1350 = vmatprep.subr.mxu0 0.0
    %1351 = vmatpush1.xpose.msra.mxu0 0.0
    %1352 = vmatprep.subr.mxu0 0.0
    %1353 = vmatpush1.xpose.msra.mxu0 0.0
    %1354 = vmatprep.subr.mxu0 0.0
    %1355 = vmatpush1.xpose.msra.mxu0 0.0
    %1356 = vmatprep.subr.mxu0 0.0
    %1357 = vmatpush1.xpose.msra.mxu0 0.0
    %1358 = vmatprep.subr.mxu0 0.0
    %1359 = vmatpush1.xpose.msra.mxu0 0.0
    %1360 = vmatprep.subr.mxu0 0.0
    %1361 = vmatpush1.xpose.msra.mxu0 0.0
    %1362 = vmatprep.subr.mxu0 0.0
    %1363 = vmatpush1.xpose.msra.mxu0 0.0
    %1364 = vmatprep.subr.mxu0 0.0
    %1365 = vmatpush1.xpose.msra.mxu0 0.0
    %1366 = vmatprep.subr.mxu0 0.0
    %1367 = vmatpush1.xpose.msra.mxu0 0.0
    %1368 = vmatprep.subr.mxu0 0.0
    %1369 = vmatpush1.xpose.msra.mxu0 0.0
    %1370 = vmatprep.subr.mxu0 0.0
    %1371 = vmatpush1.xpose.msra.mxu0 0.0
    %1372 = vmatprep.subr.mxu0 0.0
    %1373 = vmatpush1.xpose.msra.mxu0 0.0
    %1374 = vmatprep.subr.mxu0 0.0
    %1375 = vmatpush1.xpose.msra.mxu0 0.0
    %1376 = vmatprep.subr.mxu0 0.0
    %1377 = vmatpush1.xpose.msra.mxu0 0.0
    %1378 = vmatprep.subr.mxu0 0.0
    %1379 = vmatpush1.xpose.msra.mxu0 0.0
    %1380 = vmatprep.subr.mxu0 0.0
    %1381 = vmatpush1.xpose.msra.mxu0 0.0
    %1382 = vmatprep.subr.mxu0 0.0
    %1383 = vmatpush1.xpose.msra.mxu0 0.0
    %1384 = vmatprep.subr.mxu0 0.0
    %1385 = vmatpush1.xpose.msra.mxu0 0.0
    %1386 = vmatprep.subr.mxu0 0.0
    %1387 = vmatpush1.xpose.msra.mxu0 0.0
    %1388 = vmatprep.subr.mxu0 0.0
    %1389 = vmatpush1.xpose.msra.mxu0 0.0
    %1390 = vmatprep.mubr.f32.mxu0 0.0
    %1391 = vmatmul.mubr.f32.gmra.mrb[0].mxu0 %v1320
    %v1392 = vpop.f32.mrb[0].mxu0
    %v1393 = vadd.f32 0.0, %v1392
    %v1394 = vpop.f32.mrb[0].mxu0
    %1395 = vmatprep.mubr.f32.mxu0 0.0
    %1396 = vmatmul.mubr.f32.gmra.mrb[0].mxu0 %v1322
    %v1397 = vpop.f32.mrb[0].mxu0
    %v1398 = vadd.f32 0.0, %v1397
    %v1399 = vpop.f32.mrb[0].mxu0
    %1400 = vdwg.mxu0
    %1401 = vrot.lane.b32.xlu0 %v117, 104
    %v1402 = vpop.permute.xlu0 %1401
    %v1403 = vsel %vm127, %v1402, 0
    %1405 = vmatprep.subr.mxu0 0.0
    %1406 = vmatpush1.xpose.msra.mxu0 %v1403
    %1407 = vmatprep.subr.mxu0 0.0
    %1408 = vmatpush1.xpose.msra.mxu0 0.0
    %1409 = vmatprep.subr.mxu0 0.0
    %1410 = vmatpush1.xpose.msra.mxu0 0.0
    %1411 = vmatprep.subr.mxu0 0.0
    %1412 = vmatpush1.xpose.msra.mxu0 0.0
    %1413 = vmatprep.subr.mxu0 0.0
    %1414 = vmatpush1.xpose.msra.mxu0 0.0
    %1415 = vmatprep.subr.mxu0 0.0
    %1416 = vmatpush1.xpose.msra.mxu0 0.0
    %1417 = vmatprep.subr.mxu0 0.0
    %1418 = vmatpush1.xpose.msra.mxu0 0.0
    %1419 = vmatprep.subr.mxu0 0.0
    %1420 = vmatpush1.xpose.msra.mxu0 0.0
    %1421 = vmatprep.subr.mxu0 0.0
    %1422 = vmatpush1.xpose.msra.mxu0 0.0
    %1423 = vmatprep.subr.mxu0 0.0
    %1424 = vmatpush1.xpose.msra.mxu0 0.0
    %1425 = vmatprep.subr.mxu0 0.0
    %1426 = vmatpush1.xpose.msra.mxu0 0.0
    %1427 = vmatprep.subr.mxu0 0.0
    %1428 = vmatpush1.xpose.msra.mxu0 0.0
    %1429 = vmatprep.subr.mxu0 0.0
    %1430 = vmatpush1.xpose.msra.mxu0 0.0
    %1431 = vmatprep.subr.mxu0 0.0
    %1432 = vmatpush1.xpose.msra.mxu0 0.0
    %1433 = vmatprep.subr.mxu0 0.0
    %1434 = vmatpush1.xpose.msra.mxu0 0.0
    %1435 = vmatprep.subr.mxu0 0.0
    %1436 = vmatpush1.xpose.msra.mxu0 0.0
    %1437 = vmatprep.subr.mxu0 0.0
    %1438 = vmatpush1.xpose.msra.mxu0 0.0
    %1439 = vmatprep.subr.mxu0 0.0
    %1440 = vmatpush1.xpose.msra.mxu0 0.0
    %1441 = vmatprep.subr.mxu0 0.0
    %1442 = vmatpush1.xpose.msra.mxu0 0.0
    %1443 = vmatprep.subr.mxu0 0.0
    %1444 = vmatpush1.xpose.msra.mxu0 0.0
    %1445 = vmatprep.subr.mxu0 0.0
    %1446 = vmatpush1.xpose.msra.mxu0 0.0
    %1447 = vmatprep.subr.mxu0 0.0
    %1448 = vmatpush1.xpose.msra.mxu0 0.0
    %1449 = vmatprep.subr.mxu0 0.0
    %1450 = vmatpush1.xpose.msra.mxu0 0.0
    %1451 = vmatprep.subr.mxu0 0.0
    %1452 = vmatpush1.xpose.msra.mxu0 0.0
    %1453 = vmatprep.subr.mxu0 0.0
    %1454 = vmatpush1.xpose.msra.mxu0 0.0
    %1455 = vmatprep.subr.mxu0 0.0
    %1456 = vmatpush1.xpose.msra.mxu0 0.0
    %1457 = vmatprep.subr.mxu0 0.0
    %1458 = vmatpush1.xpose.msra.mxu0 0.0
    %1459 = vmatprep.subr.mxu0 0.0
    %1460 = vmatpush1.xpose.msra.mxu0 0.0
    %1461 = vmatprep.subr.mxu0 0.0
    %1462 = vmatpush1.xpose.msra.mxu0 0.0
    %1463 = vmatprep.subr.mxu0 0.0
    %1464 = vmatpush1.xpose.msra.mxu0 0.0
    %1465 = vmatprep.subr.mxu0 0.0
    %1466 = vmatpush1.xpose.msra.mxu0 0.0
    %1467 = vmatprep.subr.mxu0 0.0
    %1468 = vmatpush1.xpose.msra.mxu0 0.0
    %1469 = vmatprep.mubr.f32.mxu0 0.0
    %1470 = vmatmul.mubr.f32.gmra.mrb[0].mxu0 %v1320
    %v1471 = vpop.f32.mrb[0].mxu0
    %v1472 = vadd.f32 0.0, %v1471
    %v1473 = vpop.f32.mrb[0].mxu0
    %1474 = vmatprep.mubr.f32.mxu0 0.0
    %1475 = vmatmul.mubr.f32.gmra.mrb[0].mxu0 %v1322
    %v1476 = vpop.f32.mrb[0].mxu0
    %v1477 = vadd.f32 0.0, %v1476
    %v1478 = vpop.f32.mrb[0].mxu0
    %1479 = vdwg.mxu0
    %v1480 = vmul.f32 %v1393, 0.17677669
    %v1481 = vmul.f32 %v1398, 0.17677669
    %v1482 = vmul.f32 %v1472, 0.17677669
    %v1483 = vmul.f32 %v1477, 0.17677669
    %v1484 = vsel %vm127, %v1480, -inf
    %1485 = vmax.xlane.f32.xlu0 %v1484
    %v1486 = vpop.xlane.xlu0 %1485
    %v1487 = vsel %vm127, %v1481, -inf
    %1488 = vmax.xlane.f32.xlu0 %v1487
    %v1489 = vpop.xlane.xlu0 %1488
    %v1490 = vsel %vm127, %v1482, -inf
    %1491 = vmax.xlane.f32.xlu0 %v1490
    %v1492 = vpop.xlane.xlu0 %1491
    %v1493 = vsel %vm127, %v1483, -inf
    %1494 = vmax.xlane.f32.xlu0 %v1493
    %v1495 = vpop.xlane.xlu0 %1494
    %v1496 = vsub.f32 %v1480, %v1486
    %v1497 = vsub.f32 %v1481, %v1489
    %v1498 = vsub.f32 %v1482, %v1492
    %v1499 = vsub.f32 %v1483, %v1495
    %v1500 = vmul.f32 %v1496, 1.442695
    %v1501 = vpow.pop %v1500
    %v1502 = vmul.f32 %v1497, 1.442695
    %v1503 = vpow.pop %v1502
    %v1504 = vmul.f32 %v1498, 1.442695
    %v1505 = vpow.pop %v1504
    %v1506 = vmul.f32 %v1499, 1.442695
    %v1507 = vpow.pop %v1506
    %v1508 = vsel %vm127, %v1501, 0.0
    %1509 = vadd.xlane.f32.xlu0 %v1508
    %v1510 = vpop.xlane.xlu0 %1509
    %v1511 = vsel %vm127, %v1503, 0.0
    %1512 = vadd.xlane.f32.xlu0 %v1511
    %v1513 = vpop.xlane.xlu0 %1512
    %v1514 = vsel %vm127, %v1505, 0.0
    %1515 = vadd.xlane.f32.xlu0 %v1514
    %v1516 = vpop.xlane.xlu0 %1515
    %v1517 = vsel %vm127, %v1507, 0.0
    %1518 = vadd.xlane.f32.xlu0 %v1517
    %v1519 = vpop.xlane.xlu0 %1518
    %v1520 = vrcp.pop %v1510
    %v1521 = vrcp.pop %v1513
    %v1522 = vrcp.pop %v1516
    %v1523 = vrcp.pop %v1519
    %v1524 = vmul.f32 %v1501, %v1520
    %v1525 = vmul.f32 %v1503, %v1521
    %v1526 = vmul.f32 %v1505, %v1522
    %v1527 = vmul.f32 %v1507, %v1523
    %1528 = vrot.lane.b32.xlu0 %v112, 72
    %v1529 = vpop.permute.xlu0 %1528
    %v1532 = vsel %vm127, %v1524, 0
    %v1535 = vsel %vm127, %v1525, 0
    %1537 = vmatprep.subr.mxu0 0.0
    %1538 = vmatpush1.msra.mxu0 %v1529
    %1539 = vmatprep.subr.mxu0 0.0
    %1540 = vmatpush1.msra.mxu0 0.0
    %1541 = vmatprep.subr.mxu0 0.0
    %1542 = vmatpush1.msra.mxu0 0.0
    %1543 = vmatprep.subr.mxu0 0.0
    %1544 = vmatpush1.msra.mxu0 0.0
    %1545 = vmatprep.subr.mxu0 0.0
    %1546 = vmatpush1.msra.mxu0 0.0
    %1547 = vmatprep.subr.mxu0 0.0
    %1548 = vmatpush1.msra.mxu0 0.0
    %1549 = vmatprep.subr.mxu0 0.0
    %1550 = vmatpush1.msra.mxu0 0.0
    %1551 = vmatprep.subr.mxu0 0.0
    %1552 = vmatpush1.msra.mxu0 0.0
    %1553 = vmatprep.subr.mxu0 0.0
    %1554 = vmatpush1.msra.mxu0 0.0
    %1555 = vmatprep.subr.mxu0 0.0
    %1556 = vmatpush1.msra.mxu0 0.0
    %1557 = vmatprep.subr.mxu0 0.0
    %1558 = vmatpush1.msra.mxu0 0.0
    %1559 = vmatprep.subr.mxu0 0.0
    %1560 = vmatpush1.msra.mxu0 0.0
    %1561 = vmatprep.subr.mxu0 0.0
    %1562 = vmatpush1.msra.mxu0 0.0
    %1563 = vmatprep.subr.mxu0 0.0
    %1564 = vmatpush1.msra.mxu0 0.0
    %1565 = vmatprep.subr.mxu0 0.0
    %1566 = vmatpush1.msra.mxu0 0.0
    %1567 = vmatprep.subr.mxu0 0.0
    %1568 = vmatpush1.msra.mxu0 0.0
    %1569 = vmatprep.subr.mxu0 0.0
    %1570 = vmatpush1.msra.mxu0 0.0
    %1571 = vmatprep.subr.mxu0 0.0
    %1572 = vmatpush1.msra.mxu0 0.0
    %1573 = vmatprep.subr.mxu0 0.0
    %1574 = vmatpush1.msra.mxu0 0.0
    %1575 = vmatprep.subr.mxu0 0.0
    %1576 = vmatpush1.msra.mxu0 0.0
    %1577 = vmatprep.subr.mxu0 0.0
    %1578 = vmatpush1.msra.mxu0 0.0
    %1579 = vmatprep.subr.mxu0 0.0
    %1580 = vmatpush1.msra.mxu0 0.0
    %1581 = vmatprep.subr.mxu0 0.0
    %1582 = vmatpush1.msra.mxu0 0.0
    %1583 = vmatprep.subr.mxu0 0.0
    %1584 = vmatpush1.msra.mxu0 0.0
    %1585 = vmatprep.subr.mxu0 0.0
    %1586 = vmatpush1.msra.mxu0 0.0
    %1587 = vmatprep.subr.mxu0 0.0
    %1588 = vmatpush1.msra.mxu0 0.0
    %1589 = vmatprep.subr.mxu0 0.0
    %1590 = vmatpush1.msra.mxu0 0.0
    %1591 = vmatprep.subr.mxu0 0.0
    %1592 = vmatpush1.msra.mxu0 0.0
    %1593 = vmatprep.subr.mxu0 0.0
    %1594 = vmatpush1.msra.mxu0 0.0
    %1595 = vmatprep.subr.mxu0 0.0
    %1596 = vmatpush1.msra.mxu0 0.0
    %1597 = vmatprep.subr.mxu0 0.0
    %1598 = vmatpush1.msra.mxu0 0.0
    %1599 = vmatprep.subr.mxu0 0.0
    %1600 = vmatpush1.msra.mxu0 0.0
    %1601 = vmatprep.mubr.f32.mxu0 0.0
    %1602 = vmatmul.mubr.f32.gmra.mrb[0].mxu0 %v1532
    %v1603 = vpop.f32.mrb[0].mxu0
    %v1604 = vadd.f32 0.0, %v1603
    %v1605 = vpop.f32.mrb[0].mxu0
    %1606 = vmatprep.mubr.f32.mxu0 0.0
    %1607 = vmatmul.mubr.f32.gmra.mrb[0].mxu0 %v1535
    %v1608 = vpop.f32.mrb[0].mxu0
    %v1609 = vadd.f32 0.0, %v1608
    %v1610 = vpop.f32.mrb[0].mxu0
    %1611 = vdwg.mxu0
    %1612 = vrot.lane.b32.xlu0 %v117, 72
    %v1613 = vpop.permute.xlu0 %1612
    %v1616 = vsel %vm127, %v1526, 0
    %v1619 = vsel %vm127, %v1527, 0
    %1621 = vmatprep.subr.mxu0 0.0
    %1622 = vmatpush1.msra.mxu0 %v1613
    %1623 = vmatprep.subr.mxu0 0.0
    %1624 = vmatpush1.msra.mxu0 0.0
    %1625 = vmatprep.subr.mxu0 0.0
    %1626 = vmatpush1.msra.mxu0 0.0
    %1627 = vmatprep.subr.mxu0 0.0
    %1628 = vmatpush1.msra.mxu0 0.0
    %1629 = vmatprep.subr.mxu0 0.0
    %1630 = vmatpush1.msra.mxu0 0.0
    %1631 = vmatprep.subr.mxu0 0.0
    %1632 = vmatpush1.msra.mxu0 0.0
    %1633 = vmatprep.subr.mxu0 0.0
    %1634 = vmatpush1.msra.mxu0 0.0
    %1635 = vmatprep.subr.mxu0 0.0
    %1636 = vmatpush1.msra.mxu0 0.0
    %1637 = vmatprep.subr.mxu0 0.0
    %1638 = vmatpush1.msra.mxu0 0.0
    %1639 = vmatprep.subr.mxu0 0.0
    %1640 = vmatpush1.msra.mxu0 0.0
    %1641 = vmatprep.subr.mxu0 0.0
    %1642 = vmatpush1.msra.mxu0 0.0
    %1643 = vmatprep.subr.mxu0 0.0
    %1644 = vmatpush1.msra.mxu0 0.0
    %1645 = vmatprep.subr.mxu0 0.0
    %1646 = vmatpush1.msra.mxu0 0.0
    %1647 = vmatprep.subr.mxu0 0.0
    %1648 = vmatpush1.msra.mxu0 0.0
    %1649 = vmatprep.subr.mxu0 0.0
    %1650 = vmatpush1.msra.mxu0 0.0
    %1651 = vmatprep.subr.mxu0 0.0
    %1652 = vmatpush1.msra.mxu0 0.0
    %1653 = vmatprep.subr.mxu0 0.0
    %1654 = vmatpush1.msra.mxu0 0.0
    %1655 = vmatprep.subr.mxu0 0.0
    %1656 = vmatpush1.msra.mxu0 0.0
    %1657 = vmatprep.subr.mxu0 0.0
    %1658 = vmatpush1.msra.mxu0 0.0
    %1659 = vmatprep.subr.mxu0 0.0
    %1660 = vmatpush1.msra.mxu0 0.0
    %1661 = vmatprep.subr.mxu0 0.0
    %1662 = vmatpush1.msra.mxu0 0.0
    %1663 = vmatprep.subr.mxu0 0.0
    %1664 = vmatpush1.msra.mxu0 0.0
    %1665 = vmatprep.subr.mxu0 0.0
    %1666 = vmatpush1.msra.mxu0 0.0
    %1667 = vmatprep.subr.mxu0 0.0
    %1668 = vmatpush1.msra.mxu0 0.0
    %1669 = vmatprep.subr.mxu0 0.0
    %1670 = vmatpush1.msra.mxu0 0.0
    %1671 = vmatprep.subr.mxu0 0.0
    %1672 = vmatpush1.msra.mxu0 0.0
    %1673 = vmatprep.subr.mxu0 0.0
    %1674 = vmatpush1.msra.mxu0 0.0
    %1675 = vmatprep.subr.mxu0 0.0
    %1676 = vmatpush1.msra.mxu0 0.0
    %1677 = vmatprep.subr.mxu0 0.0
    %1678 = vmatpush1.msra.mxu0 0.0
    %1679 = vmatprep.subr.mxu0 0.0
    %1680 = vmatpush1.msra.mxu0 0.0
    %1681 = vmatprep.subr.mxu0 0.0
    %1682 = vmatpush1.msra.mxu0 0.0
    %1683 = vmatprep.subr.mxu0 0.0
    %1684 = vmatpush1.msra.mxu0 0.0
    %1685 = vmatprep.mubr.f32.mxu0 0.0
    %1686 = vmatmul.mubr.f32.gmra.mrb[0].mxu0 %v1616
    %v1687 = vpop.f32.mrb[0].mxu0
    %v1688 = vadd.f32 0.0, %v1687
    %v1689 = vpop.f32.mrb[0].mxu0
    %1690 = vmatprep.mubr.f32.mxu0 0.0
    %1691 = vmatmul.mubr.f32.gmra.mrb[0].mxu0 %v1619
    %v1692 = vpop.f32.mrb[0].mxu0
    %v1693 = vadd.f32 0.0, %v1692
    %v1694 = vpop.f32.mrb[0].mxu0
    %1695 = vdwg.mxu0
    %1700 = vrot.lane.b32.xlu0 %v1604, 24
    %v1701 = vpop.permute.xlu0 %1700
    %1702 = vrot.lane.b32.xlu0 %v1609, 24
    %v1703 = vpop.permute.xlu0 %1702
    %1704 = vrot.lane.b32.xlu0 %v1688, 24
    %v1705 = vpop.permute.xlu0 %1704
    %1706 = vrot.lane.b32.xlu0 %v1693, 24
    %v1707 = vpop.permute.xlu0 %1706
    %v1712 = vadd.f32 %v125, %v1701
    %v1713 = vadd.f32 %v126, %v1703
    %v1714 = vadd.f32 %v125, %v1705
    %v1715 = vadd.f32 %v126, %v1707
    %v1716 = vsel %vm127, %v506, %v908
    %v1717 = vsel %vm127, %v507, %v909
    %v1718 = vsel %vm127, %v508, %v910
    %v1719 = vsel %vm127, %v509, %v911
    %vm1720 = vcmask 130048
    %v1721 = vsel %vm1720, %v1716, %v1310
    %v1722 = vsel %vm1720, %v1717, %v1311
    %v1723 = vsel %vm1720, %v1718, %v1312
    %v1724 = vsel %vm1720, %v1719, %v1313
    %vm1725 = vcmask 195584
    %v1726 = vsel %vm1725, %v1721, %v1712
    %v1727 = vsel %vm1725, %v1722, %v1713
    %v1728 = vsel %vm1725, %v1723, %v1714
    %v1729 = vsel %vm1725, %v1724, %v1715
    %v1731 = vlaneseq
    %v1732 = vshrl.u32 %v1731, 7
    %v1733 = vsub.s32 0, %v1732
    %v1734 = vrot.slane %v124, %v1733
    %vm1736 = vcmask 261120
    %v1738 = vsel %vm1736, %v1726, 0
    %v1741 = vsel %vm1736, %v1727, 0
    %v1744 = vsel %vm1736, %v1728, 0
    %v1747 = vsel %vm1736, %v1729, 0
    %1749 = vmatprep.subr.mxu0 0.0
    %1750 = vmatpush1.msra.mxu0 %v120
    %1751 = vmatprep.subr.mxu0 0.0
    %1752 = vmatpush1.msra.mxu0 %v121
    %1753 = vmatprep.subr.mxu0 0.0
    %1754 = vmatpush1.msra.mxu0 %v122
    %1755 = vmatprep.subr.mxu0 0.0
    %1756 = vmatpush1.msra.mxu0 %v123
    %1757 = vmatprep.subr.mxu0 0.0
    %1758 = vmatpush1.msra.mxu0 0.0
    %1759 = vmatprep.subr.mxu0 0.0
    %1760 = vmatpush1.msra.mxu0 0.0
    %1761 = vmatprep.subr.mxu0 0.0
    %1762 = vmatpush1.msra.mxu0 0.0
    %1763 = vmatprep.subr.mxu0 0.0
    %1764 = vmatpush1.msra.mxu0 0.0
    %1765 = vmatprep.subr.mxu0 0.0
    %1766 = vmatpush1.msra.mxu0 0.0
    %1767 = vmatprep.subr.mxu0 0.0
    %1768 = vmatpush1.msra.mxu0 0.0
    %1769 = vmatprep.subr.mxu0 0.0
    %1770 = vmatpush1.msra.mxu0 0.0
    %1771 = vmatprep.subr.mxu0 0.0
    %1772 = vmatpush1.msra.mxu0 0.0
    %1773 = vmatprep.subr.mxu0 0.0
    %1774 = vmatpush1.msra.mxu0 0.0
    %1775 = vmatprep.subr.mxu0 0.0
    %1776 = vmatpush1.msra.mxu0 0.0
    %1777 = vmatprep.subr.mxu0 0.0
    %1778 = vmatpush1.msra.mxu0 0.0
    %1779 = vmatprep.subr.mxu0 0.0
    %1780 = vmatpush1.msra.mxu0 0.0
    %1781 = vmatprep.subr.mxu0 0.0
    %1782 = vmatpush1.msra.mxu0 0.0
    %1783 = vmatprep.subr.mxu0 0.0
    %1784 = vmatpush1.msra.mxu0 0.0
    %1785 = vmatprep.subr.mxu0 0.0
    %1786 = vmatpush1.msra.mxu0 0.0
    %1787 = vmatprep.subr.mxu0 0.0
    %1788 = vmatpush1.msra.mxu0 0.0
    %1789 = vmatprep.subr.mxu0 0.0
    %1790 = vmatpush1.msra.mxu0 0.0
    %1791 = vmatprep.subr.mxu0 0.0
    %1792 = vmatpush1.msra.mxu0 0.0
    %1793 = vmatprep.subr.mxu0 0.0
    %1794 = vmatpush1.msra.mxu0 0.0
    %1795 = vmatprep.subr.mxu0 0.0
    %1796 = vmatpush1.msra.mxu0 0.0
    %1797 = vmatprep.subr.mxu0 0.0
    %1798 = vmatpush1.msra.mxu0 0.0
    %1799 = vmatprep.subr.mxu0 0.0
    %1800 = vmatpush1.msra.mxu0 0.0
    %1801 = vmatprep.subr.mxu0 0.0
    %1802 = vmatpush1.msra.mxu0 0.0
    %1803 = vmatprep.subr.mxu0 0.0
    %1804 = vmatpush1.msra.mxu0 0.0
    %1805 = vmatprep.subr.mxu0 0.0
    %1806 = vmatpush1.msra.mxu0 0.0
    %1807 = vmatprep.subr.mxu0 0.0
    %1808 = vmatpush1.msra.mxu0 0.0
    %1809 = vmatprep.subr.mxu0 0.0
    %1810 = vmatpush1.msra.mxu0 0.0
    %1811 = vmatprep.subr.mxu0 0.0
    %1812 = vmatpush1.msra.mxu0 0.0
    %1813 = vmatprep.mubr.f32.mxu0 0.0
    %1814 = vmatmul.mubr.f32.gmra.mrb[0].mxu0 %v1738
    %v1815 = vpop.f32.mrb[0].mxu0
    %v1816 = vadd.f32 %v1734, %v1815
    %v1817 = vpop.f32.mrb[0].mxu0
    %1818 = vmatprep.mubr.f32.mxu0 0.0
    %1819 = vmatmul.mubr.f32.gmra.mrb[0].mxu0 %v1741
    %v1820 = vpop.f32.mrb[0].mxu0
    %v1821 = vadd.f32 %v1734, %v1820
    %v1822 = vpop.f32.mrb[0].mxu0
    %1823 = vmatprep.mubr.f32.mxu0 0.0
    %1824 = vmatmul.mubr.f32.gmra.mrb[0].mxu0 %v1744
    %v1825 = vpop.f32.mrb[0].mxu0
    %v1826 = vadd.f32 %v1734, %v1825
    %v1827 = vpop.f32.mrb[0].mxu0
    %1828 = vmatprep.mubr.f32.mxu0 0.0
    %1829 = vmatmul.mubr.f32.gmra.mrb[0].mxu0 %v1747
    %v1830 = vpop.f32.mrb[0].mxu0
    %v1831 = vadd.f32 %v1734, %v1830
    %v1832 = vpop.f32.mrb[0].mxu0
    %1833 = vdwg.mxu0
    %v1834 = vmax.f32 %v1816, 0.0
    %v1835 = vmax.f32 %v1821, 0.0
    %v1836 = vmax.f32 %v1826, 0.0
    %v1837 = vmax.f32 %v1831, 0.0
    %v1838 = vadd.f32 %v1726, %v1834
    %v1839 = vadd.f32 %v1727, %v1835
    %v1840 = vadd.f32 %v1728, %v1836
    %v1841 = vadd.f32 %v1729, %v1837
    %1846 = vrot.lane.b32.xlu0 %v120, 96
    %v1847 = vpop.permute.xlu0 %1846
    %1848 = vrot.lane.b32.xlu0 %v121, 96
    %v1849 = vpop.permute.xlu0 %1848
    %1850 = vrot.lane.b32.xlu0 %v122, 96
    %v1851 = vpop.permute.xlu0 %1850
    %1852 = vrot.lane.b32.xlu0 %v123, 96
    %v1853 = vpop.permute.xlu0 %1852
    %1858 = vrot.lane.b32.xlu0 %v1734, 96
    %v1859 = vpop.permute.xlu0 %1858
    %v1862 = vsel %vm1736, %v1838, 0
    %v1865 = vsel %vm1736, %v1839, 0
    %v1868 = vsel %vm1736, %v1840, 0
    %v1871 = vsel %vm1736, %v1841, 0
    %1873 = vmatprep.subr.mxu0 0.0
    %1874 = vmatpush1.msra.mxu0 %v1847
    %1875 = vmatprep.subr.mxu0 0.0
    %1876 = vmatpush1.msra.mxu0 %v1849
    %1877 = vmatprep.subr.mxu0 0.0
    %1878 = vmatpush1.msra.mxu0 %v1851
    %1879 = vmatprep.subr.mxu0 0.0
    %1880 = vmatpush1.msra.mxu0 %v1853
    %1881 = vmatprep.subr.mxu0 0.0
    %1882 = vmatpush1.msra.mxu0 0.0
    %1883 = vmatprep.subr.mxu0 0.0
    %1884 = vmatpush1.msra.mxu0 0.0
    %1885 = vmatprep.subr.mxu0 0.0
    %1886 = vmatpush1.msra.mxu0 0.0
    %1887 = vmatprep.subr.mxu0 0.0
    %1888 = vmatpush1.msra.mxu0 0.0
    %1889 = vmatprep.subr.mxu0 0.0
    %1890 = vmatpush1.msra.mxu0 0.0
    %1891 = vmatprep.subr.mxu0 0.0
    %1892 = vmatpush1.msra.mxu0 0.0
    %1893 = vmatprep.subr.mxu0 0.0
    %1894 = vmatpush1.msra.mxu0 0.0
    %1895 = vmatprep.subr.mxu0 0.0
    %1896 = vmatpush1.msra.mxu0 0.0
    %1897 = vmatprep.subr.mxu0 0.0
    %1898 = vmatpush1.msra.mxu0 0.0
    %1899 = vmatprep.subr.mxu0 0.0
    %1900 = vmatpush1.msra.mxu0 0.0
    %1901 = vmatprep.subr.mxu0 0.0
    %1902 = vmatpush1.msra.mxu0 0.0
    %1903 = vmatprep.subr.mxu0 0.0
    %1904 = vmatpush1.msra.mxu0 0.0
    %1905 = vmatprep.subr.mxu0 0.0
    %1906 = vmatpush1.msra.mxu0 0.0
    %1907 = vmatprep.subr.mxu0 0.0
    %1908 = vmatpush1.msra.mxu0 0.0
    %1909 = vmatprep.subr.mxu0 0.0
    %1910 = vmatpush1.msra.mxu0 0.0
    %1911 = vmatprep.subr.mxu0 0.0
    %1912 = vmatpush1.msra.mxu0 0.0
    %1913 = vmatprep.subr.mxu0 0.0
    %1914 = vmatpush1.msra.mxu0 0.0
    %1915 = vmatprep.subr.mxu0 0.0
    %1916 = vmatpush1.msra.mxu0 0.0
    %1917 = vmatprep.subr.mxu0 0.0
    %1918 = vmatpush1.msra.mxu0 0.0
    %1919 = vmatprep.subr.mxu0 0.0
    %1920 = vmatpush1.msra.mxu0 0.0
    %1921 = vmatprep.subr.mxu0 0.0
    %1922 = vmatpush1.msra.mxu0 0.0
    %1923 = vmatprep.subr.mxu0 0.0
    %1924 = vmatpush1.msra.mxu0 0.0
    %1925 = vmatprep.subr.mxu0 0.0
    %1926 = vmatpush1.msra.mxu0 0.0
    %1927 = vmatprep.subr.mxu0 0.0
    %1928 = vmatpush1.msra.mxu0 0.0
    %1929 = vmatprep.subr.mxu0 0.0
    %1930 = vmatpush1.msra.mxu0 0.0
    %1931 = vmatprep.subr.mxu0 0.0
    %1932 = vmatpush1.msra.mxu0 0.0
    %1933 = vmatprep.subr.mxu0 0.0
    %1934 = vmatpush1.msra.mxu0 0.0
    %1935 = vmatprep.subr.mxu0 0.0
    %1936 = vmatpush1.msra.mxu0 0.0
    %1937 = vmatprep.mubr.f32.mxu0 0.0
    %1938 = vmatmul.mubr.f32.gmra.mrb[0].mxu0 %v1862
    %v1939 = vpop.f32.mrb[0].mxu0
    %v1940 = vadd.f32 %v1859, %v1939
    %v1941 = vpop.f32.mrb[0].mxu0
    %1942 = vmatprep.mubr.f32.mxu0 0.0
    %1943 = vmatmul.mubr.f32.gmra.mrb[0].mxu0 %v1865
    %v1944 = vpop.f32.mrb[0].mxu0
    %v1945 = vadd.f32 %v1859, %v1944
    %v1946 = vpop.f32.mrb[0].mxu0
    %1947 = vmatprep.mubr.f32.mxu0 0.0
    %1948 = vmatmul.mubr.f32.gmra.mrb[0].mxu0 %v1868
    %v1949 = vpop.f32.mrb[0].mxu0
    %v1950 = vadd.f32 %v1859, %v1949
    %v1951 = vpop.f32.mrb[0].mxu0
    %1952 = vmatprep.mubr.f32.mxu0 0.0
    %1953 = vmatmul.mubr.f32.gmra.mrb[0].mxu0 %v1871
    %v1954 = vpop.f32.mrb[0].mxu0
    %v1955 = vadd.f32 %v1859, %v1954
    %v1956 = vpop.f32.mrb[0].mxu0
    %1957 = vdwg.mxu0
    %1958 = vrot.lane.b32.xlu0 %v112, 64
    %v1959 = vpop.permute.xlu0 %1958
    %v1960 = vsel %vm127, %v1959, 0
    %v1963 = vsel %vm127, %v1940, 0
    %v1966 = vsel %vm127, %v1945, 0
    %1968 = vmatprep.subr.mxu0 0.0
    %1969 = vmatpush1.xpose.msra.mxu0 %v1963
    %1970 = vmatprep.subr.mxu0 0.0
    %1971 = vmatpush1.xpose.msra.mxu0 %v1966
    %1972 = vmatprep.subr.mxu0 0.0
    %1973 = vmatpush1.xpose.msra.mxu0 0.0
    %1974 = vmatprep.subr.mxu0 0.0
    %1975 = vmatpush1.xpose.msra.mxu0 0.0
    %1976 = vmatprep.subr.mxu0 0.0
    %1977 = vmatpush1.xpose.msra.mxu0 0.0
    %1978 = vmatprep.subr.mxu0 0.0
    %1979 = vmatpush1.xpose.msra.mxu0 0.0
    %1980 = vmatprep.subr.mxu0 0.0
    %1981 = vmatpush1.xpose.msra.mxu0 0.0
    %1982 = vmatprep.subr.mxu0 0.0
    %1983 = vmatpush1.xpose.msra.mxu0 0.0
    %1984 = vmatprep.subr.mxu0 0.0
    %1985 = vmatpush1.xpose.msra.mxu0 0.0
    %1986 = vmatprep.subr.mxu0 0.0
    %1987 = vmatpush1.xpose.msra.mxu0 0.0
    %1988 = vmatprep.subr.mxu0 0.0
    %1989 = vmatpush1.xpose.msra.mxu0 0.0
    %1990 = vmatprep.subr.mxu0 0.0
    %1991 = vmatpush1.xpose.msra.mxu0 0.0
    %1992 = vmatprep.subr.mxu0 0.0
    %1993 = vmatpush1.xpose.msra.mxu0 0.0
    %1994 = vmatprep.subr.mxu0 0.0
    %1995 = vmatpush1.xpose.msra.mxu0 0.0
    %1996 = vmatprep.subr.mxu0 0.0
    %1997 = vmatpush1.xpose.msra.mxu0 0.0
    %1998 = vmatprep.subr.mxu0 0.0
    %1999 = vmatpush1.xpose.msra.mxu0 0.0
    %2000 = vmatprep.subr.mxu0 0.0
    %2001 = vmatpush1.xpose.msra.mxu0 0.0
    %2002 = vmatprep.subr.mxu0 0.0
    %2003 = vmatpush1.xpose.msra.mxu0 0.0
    %2004 = vmatprep.subr.mxu0 0.0
    %2005 = vmatpush1.xpose.msra.mxu0 0.0
    %2006 = vmatprep.subr.mxu0 0.0
    %2007 = vmatpush1.xpose.msra.mxu0 0.0
    %2008 = vmatprep.subr.mxu0 0.0
    %2009 = vmatpush1.xpose.msra.mxu0 0.0
    %2010 = vmatprep.subr.mxu0 0.0
    %2011 = vmatpush1.xpose.msra.mxu0 0.0
    %2012 = vmatprep.subr.mxu0 0.0
    %2013 = vmatpush1.xpose.msra.mxu0 0.0
    %2014 = vmatprep.subr.mxu0 0.0
    %2015 = vmatpush1.xpose.msra.mxu0 0.0
    %2016 = vmatprep.subr.mxu0 0.0
    %2017 = vmatpush1.xpose.msra.mxu0 0.0
    %2018 = vmatprep.subr.mxu0 0.0
    %2019 = vmatpush1.xpose.msra.mxu0 0.0
    %2020 = vmatprep.subr.mxu0 0.0
    %2021 = vmatpush1.xpose.msra.mxu0 0.0
    %2022 = vmatprep.subr.mxu0 0.0
    %2023 = vmatpush1.xpose.msra.mxu0 0.0
    %2024 = vmatprep.subr.mxu0 0.0
    %2025 = vmatpush1.xpose.msra.mxu0 0.0
    %2026 = vmatprep.subr.mxu0 0.0
    %2027 = vmatpush1.xpose.msra.mxu0 0.0
    %2028 = vmatprep.subr.mxu0 0.0
    %2029 = vmatpush1.xpose.msra.mxu0 0.0
    %2030 = vmatprep.subr.mxu0 0.0
    %2031 = vmatpush1.xpose.msra.mxu0 0.0
    %2032 = vmatprep.mubr.f32.mxu0 0.0
    %2033 = vmatmul.mubr.f32.gmra.mrb[0].mxu0 %v1960
    %v2034 = vpop.f32.mrb[0].mxu0
    %v2035 = vadd.f32 0.0, %v2034
    %v2036 = vpop.f32.mrb[0].mxu0
    %2037 = vdwg.mxu0
    %2038 = vrot.lane.b32.xlu0 %v117, 64
    %v2039 = vpop.permute.xlu0 %2038
    %v2040 = vsel %vm127, %v2039, 0
    %v2043 = vsel %vm127, %v1950, 0
    %v2046 = vsel %vm127, %v1955, 0
    %2048 = vmatprep.subr.mxu0 0.0
    %2049 = vmatpush1.xpose.msra.mxu0 %v2043
    %2050 = vmatprep.subr.mxu0 0.0
    %2051 = vmatpush1.xpose.msra.mxu0 %v2046
    %2052 = vmatprep.subr.mxu0 0.0
    %2053 = vmatpush1.xpose.msra.mxu0 0.0
    %2054 = vmatprep.subr.mxu0 0.0
    %2055 = vmatpush1.xpose.msra.mxu0 0.0
    %2056 = vmatprep.subr.mxu0 0.0
    %2057 = vmatpush1.xpose.msra.mxu0 0.0
    %2058 = vmatprep.subr.mxu0 0.0
    %2059 = vmatpush1.xpose.msra.mxu0 0.0
    %2060 = vmatprep.subr.mxu0 0.0
    %2061 = vmatpush1.xpose.msra.mxu0 0.0
    %2062 = vmatprep.subr.mxu0 0.0
    %2063 = vmatpush1.xpose.msra.mxu0 0.0
    %2064 = vmatprep.subr.mxu0 0.0
    %2065 = vmatpush1.xpose.msra.mxu0 0.0
    %2066 = vmatprep.subr.mxu0 0.0
    %2067 = vmatpush1.xpose.msra.mxu0 0.0
    %2068 = vmatprep.subr.mxu0 0.0
    %2069 = vmatpush1.xpose.msra.mxu0 0.0
    %2070 = vmatprep.subr.mxu0 0.0
    %2071 = vmatpush1.xpose.msra.mxu0 0.0
    %2072 = vmatprep.subr.mxu0 0.0
    %2073 = vmatpush1.xpose.msra.mxu0 0.0
    %2074 = vmatprep.subr.mxu0 0.0
    %2075 = vmatpush1.xpose.msra.mxu0 0.0
    %2076 = vmatprep.subr.mxu0 0.0
    %2077 = vmatpush1.xpose.msra.mxu0 0.0
    %2078 = vmatprep.subr.mxu0 0.0
    %2079 = vmatpush1.xpose.msra.mxu0 0.0
    %2080 = vmatprep.subr.mxu0 0.0
    %2081 = vmatpush1.xpose.msra.mxu0 0.0
    %2082 = vmatprep.subr.mxu0 0.0
    %2083 = vmatpush1.xpose.msra.mxu0 0.0
    %2084 = vmatprep.subr.mxu0 0.0
    %2085 = vmatpush1.xpose.msra.mxu0 0.0
    %2086 = vmatprep.subr.mxu0 0.0
    %2087 = vmatpush1.xpose.msra.mxu0 0.0
    %2088 = vmatprep.subr.mxu0 0.0
    %2089 = vmatpush1.xpose.msra.mxu0 0.0
    %2090 = vmatprep.subr.mxu0 0.0
    %2091 = vmatpush1.xpose.msra.mxu0 0.0
    %2092 = vmatprep.subr.mxu0 0.0
    %2093 = vmatpush1.xpose.msra.mxu0 0.0
    %2094 = vmatprep.subr.mxu0 0.0
    %2095 = vmatpush1.xpose.msra.mxu0 0.0
    %2096 = vmatprep.subr.mxu0 0.0
    %2097 = vmatpush1.xpose.msra.mxu0 0.0
    %2098 = vmatprep.subr.mxu0 0.0
    %2099 = vmatpush1.xpose.msra.mxu0 0.0
    %2100 = vmatprep.subr.mxu0 0.0
    %2101 = vmatpush1.xpose.msra.mxu0 0.0
    %2102 = vmatprep.subr.mxu0 0.0
    %2103 = vmatpush1.xpose.msra.mxu0 0.0
    %2104 = vmatprep.subr.mxu0 0.0
    %2105 = vmatpush1.xpose.msra.mxu0 0.0
    %2106 = vmatprep.subr.mxu0 0.0
    %2107 = vmatpush1.xpose.msra.mxu0 0.0
    %2108 = vmatprep.subr.mxu0 0.0
    %2109 = vmatpush1.xpose.msra.mxu0 0.0
    %2110 = vmatprep.subr.mxu0 0.0
    %2111 = vmatpush1.xpose.msra.mxu0 0.0
    %2112 = vmatprep.mubr.f32.mxu0 0.0
    %2113 = vmatmul.mubr.f32.gmra.mrb[0].mxu0 %v2040
    %v2114 = vpop.f32.mrb[0].mxu0
    %v2115 = vadd.f32 0.0, %v2114
    %v2116 = vpop.f32.mrb[0].mxu0
    %2117 = vdwg.mxu0
    %v2118 = vmul.f32 %v2035, 0.17677669
    %v2119 = vmul.f32 %v2115, 0.17677669
    %v2120 = vsel %vm1720, %v2118, -inf
    %2121 = vmax.xlane.f32.xlu0 %v2120
    %v2122 = vpop.xlane.xlu0 %2121
    %v2123 = vsel %vm1720, %v2119, -inf
    %2124 = vmax.xlane.f32.xlu0 %v2123
    %v2125 = vpop.xlane.xlu0 %2124
    %v2126 = vsub.f32 %v2118, %v2122
    %v2127 = vsub.f32 %v2119, %v2125
    %v2128 = vmul.f32 %v2126, 1.442695
    %v2129 = vpow.pop %v2128
    %v2130 = vmul.f32 %v2127, 1.442695
    %v2131 = vpow.pop %v2130
    %v2132 = vsel %vm1720, %v2129, 0.0
    %2133 = vadd.xlane.f32.xlu0 %v2132
    %v2134 = vpop.xlane.xlu0 %2133
    %v2135 = vsel %vm1720, %v2131, 0.0
    %2136 = vadd.xlane.f32.xlu0 %v2135
    %v2137 = vpop.xlane.xlu0 %2136
    %v2138 = vrcp.pop %v2134
    %v2139 = vrcp.pop %v2137
    %v2140 = vmul.f32 %v2129, %v2138
    %v2141 = vmul.f32 %v2131, %v2139
    %2142 = vrot.lane.b32.xlu0 %v1940, 96
    %v2143 = vpop.permute.xlu0 %2142
    %2144 = vrot.lane.b32.xlu0 %v1945, 96
    %v2145 = vpop.permute.xlu0 %2144
    %v2149 = vsel %vm1720, %v2140, 0
    %2151 = vmatprep.subr.mxu0 0.0
    %2152 = vmatpush1.msra.mxu0 %v2143
    %2153 = vmatprep.subr.mxu0 0.0
    %2154 = vmatpush1.msra.mxu0 %v2145
    %2155 = vmatprep.subr.mxu0 0.0
    %2156 = vmatpush1.msra.mxu0 0.0
    %2157 = vmatprep.subr.mxu0 0.0
    %2158 = vmatpush1.msra.mxu0 0.0
    %2159 = vmatprep.subr.mxu0 0.0
    %2160 = vmatpush1.msra.mxu0 0.0
    %2161 = vmatprep.subr.mxu0 0.0
    %2162 = vmatpush1.msra.mxu0 0.0
    %2163 = vmatprep.subr.mxu0 0.0
    %2164 = vmatpush1.msra.mxu0 0.0
    %2165 = vmatprep.subr.mxu0 0.0
    %2166 = vmatpush1.msra.mxu0 0.0
    %2167 = vmatprep.subr.mxu0 0.0
    %2168 = vmatpush1.msra.mxu0 0.0
    %2169 = vmatprep.subr.mxu0 0.0
    %2170 = vmatpush1.msra.mxu0 0.0
    %2171 = vmatprep.subr.mxu0 0.0
    %2172 = vmatpush1.msra.mxu0 0.0
    %2173 = vmatprep.subr.mxu0 0.0
    %2174 = vmatpush1.msra.mxu0 0.0
    %2175 = vmatprep.subr.mxu0 0.0
    %2176 = vmatpush1.msra.mxu0 0.0
    %2177 = vmatprep.subr.mxu0 0.0
    %2178 = vmatpush1.msra.mxu0 0.0
    %2179 = vmatprep.subr.mxu0 0.0
    %2180 = vmatpush1.msra.mxu0 0.0
    %2181 = vmatprep.subr.mxu0 0.0
    %2182 = vmatpush1.msra.mxu0 0.0
    %2183 = vmatprep.subr.mxu0 0.0
    %2184 = vmatpush1.msra.mxu0 0.0
    %2185 = vmatprep.subr.mxu0 0.0
    %2186 = vmatpush1.msra.mxu0 0.0
    %2187 = vmatprep.subr.mxu0 0.0
    %2188 = vmatpush1.msra.mxu0 0.0
    %2189 = vmatprep.subr.mxu0 0.0
    %2190 = vmatpush1.msra.mxu0 0.0
    %2191 = vmatprep.subr.mxu0 0.0
    %2192 = vmatpush1.msra.mxu0 0.0
    %2193 = vmatprep.subr.mxu0 0.0
    %2194 = vmatpush1.msra.mxu0 0.0
    %2195 = vmatprep.subr.mxu0 0.0
    %2196 = vmatpush1.msra.mxu0 0.0
    %2197 = vmatprep.subr.mxu0 0.0
    %2198 = vmatpush1.msra.mxu0 0.0
    %2199 = vmatprep.subr.mxu0 0.0
    %2200 = vmatpush1.msra.mxu0 0.0
    %2201 = vmatprep.subr.mxu0 0.0
    %2202 = vmatpush1.msra.mxu0 0.0
    %2203 = vmatprep.subr.mxu0 0.0
    %2204 = vmatpush1.msra.mxu0 0.0
    %2205 = vmatprep.subr.mxu0 0.0
    %2206 = vmatpush1.msra.mxu0 0.0
    %2207 = vmatprep.subr.mxu0 0.0
    %2208 = vmatpush1.msra.mxu0 0.0
    %2209 = vmatprep.subr.mxu0 0.0
    %2210 = vmatpush1.msra.mxu0 0.0
    %2211 = vmatprep.subr.mxu0 0.0
    %2212 = vmatpush1.msra.mxu0 0.0
    %2213 = vmatprep.subr.mxu0 0.0
    %2214 = vmatpush1.msra.mxu0 0.0
    %2215 = vmatprep.mubr.f32.mxu0 0.0
    %2216 = vmatmul.mubr.f32.gmra.mrb[0].mxu0 %v2149
    %v2217 = vpop.f32.mrb[0].mxu0
    %v2218 = vadd.f32 0.0, %v2217
    %v2219 = vpop.f32.mrb[0].mxu0
    %2220 = vdwg.mxu0
    %2221 = vrot.lane.b32.xlu0 %v1950, 96
    %v2222 = vpop.permute.xlu0 %2221
    %2223 = vrot.lane.b32.xlu0 %v1955, 96
    %v2224 = vpop.permute.xlu0 %2223
    %v2228 = vsel %vm1720, %v2141, 0
    %2230 = vmatprep.subr.mxu0 0.0
    %2231 = vmatpush1.msra.mxu0 %v2222
    %2232 = vmatprep.subr.mxu0 0.0
    %2233 = vmatpush1.msra.mxu0 %v2224
    %2234 = vmatprep.subr.mxu0 0.0
    %2235 = vmatpush1.msra.mxu0 0.0
    %2236 = vmatprep.subr.mxu0 0.0
    %2237 = vmatpush1.msra.mxu0 0.0
    %2238 = vmatprep.subr.mxu0 0.0
    %2239 = vmatpush1.msra.mxu0 0.0
    %2240 = vmatprep.subr.mxu0 0.0
    %2241 = vmatpush1.msra.mxu0 0.0
    %2242 = vmatprep.subr.mxu0 0.0
    %2243 = vmatpush1.msra.mxu0 0.0
    %2244 = vmatprep.subr.mxu0 0.0
    %2245 = vmatpush1.msra.mxu0 0.0
    %2246 = vmatprep.subr.mxu0 0.0
    %2247 = vmatpush1.msra.mxu0 0.0
    %2248 = vmatprep.subr.mxu0 0.0
    %2249 = vmatpush1.msra.mxu0 0.0
    %2250 = vmatprep.subr.mxu0 0.0
    %2251 = vmatpush1.msra.mxu0 0.0
    %2252 = vmatprep.subr.mxu0 0.0
    %2253 = vmatpush1.msra.mxu0 0.0
    %2254 = vmatprep.subr.mxu0 0.0
    %2255 = vmatpush1.msra.mxu0 0.0
    %2256 = vmatprep.subr.mxu0 0.0
    %2257 = vmatpush1.msra.mxu0 0.0
    %2258 = vmatprep.subr.mxu0 0.0
    %2259 = vmatpush1.msra.mxu0 0.0
    %2260 = vmatprep.subr.mxu0 0.0
    %2261 = vmatpush1.msra.mxu0 0.0
    %2262 = vmatprep.subr.mxu0 0.0
    %2263 = vmatpush1.msra.mxu0 0.0
    %2264 = vmatprep.subr.mxu0 0.0
    %2265 = vmatpush1.msra.mxu0 0.0
    %2266 = vmatprep.subr.mxu0 0.0
    %2267 = vmatpush1.msra.mxu0 0.0
    %2268 = vmatprep.subr.mxu0 0.0
    %2269 = vmatpush1.msra.mxu0 0.0
    %2270 = vmatprep.subr.mxu0 0.0
    %2271 = vmatpush1.msra.mxu0 0.0
    %2272 = vmatprep.subr.mxu0 0.0
    %2273 = vmatpush1.msra.mxu0 0.0
    %2274 = vmatprep.subr.mxu0 0.0
    %2275 = vmatpush1.msra.mxu0 0.0
    %2276 = vmatprep.subr.mxu0 0.0
    %2277 = vmatpush1.msra.mxu0 0.0
    %2278 = vmatprep.subr.mxu0 0.0
    %2279 = vmatpush1.msra.mxu0 0.0
    %2280 = vmatprep.subr.mxu0 0.0
    %2281 = vmatpush1.msra.mxu0 0.0
    %2282 = vmatprep.subr.mxu0 0.0
    %2283 = vmatpush1.msra.mxu0 0.0
    %2284 = vmatprep.subr.mxu0 0.0
    %2285 = vmatpush1.msra.mxu0 0.0
    %2286 = vmatprep.subr.mxu0 0.0
    %2287 = vmatpush1.msra.mxu0 0.0
    %2288 = vmatprep.subr.mxu0 0.0
    %2289 = vmatpush1.msra.mxu0 0.0
    %2290 = vmatprep.subr.mxu0 0.0
    %2291 = vmatpush1.msra.mxu0 0.0
    %2292 = vmatprep.subr.mxu0 0.0
    %2293 = vmatpush1.msra.mxu0 0.0
    %2294 = vmatprep.mubr.f32.mxu0 0.0
    %2295 = vmatmul.mubr.f32.gmra.mrb[0].mxu0 %v2228
    %v2296 = vpop.f32.mrb[0].mxu0
    %v2297 = vadd.f32 0.0, %v2296
    %v2298 = vpop.f32.mrb[0].mxu0
    %2299 = vdwg.mxu0
    %2302 = vrot.lane.b32.xlu0 %v2218, 64
    %v2303 = vpop.permute.xlu0 %2302
    %2304 = vrot.lane.b32.xlu0 %v2297, 64
    %v2305 = vpop.permute.xlu0 %2304
    %v2308 = vadd.f32 %v112, %v2303
    %v2309 = vadd.f32 %v117, %v2305
    %2310 = vrot.lane.b32.xlu0 %v112, 56
    %v2311 = vpop.permute.xlu0 %2310
    %2312 = vrot.lane.b32.xlu0 %v1940, 120
    %v2313 = vpop.permute.xlu0 %2312
    %2314 = vrot.lane.b32.xlu0 %v1945, 120
    %v2315 = vpop.permute.xlu0 %2314
    %v2316 = vsel %vm127, %v2311, 0
    %v2318 = vsel %vm127, %v2313, 0
    %v2320 = vsel %vm127, %v2315, 0
    %2322 = vmatprep.subr.mxu0 0.0
    %2323 = vmatpush1.xpose.msra.mxu0 %v2318
    %2324 = vmatprep.subr.mxu0 0.0
    %2325 = vmatpush1.xpose.msra.mxu0 %v2320
    %2326 = vmatprep.subr.mxu0 0.0
    %2327 = vmatpush1.xpose.msra.mxu0 0.0
    %2328 = vmatprep.subr.mxu0 0.0
    %2329 = vmatpush1.xpose.msra.mxu0 0.0
    %2330 = vmatprep.subr.mxu0 0.0
    %2331 = vmatpush1.xpose.msra.mxu0 0.0
    %2332 = vmatprep.subr.mxu0 0.0
    %2333 = vmatpush1.xpose.msra.mxu0 0.0
    %2334 = vmatprep.subr.mxu0 0.0
    %2335 = vmatpush1.xpose.msra.mxu0 0.0
    %2336 = vmatprep.subr.mxu0 0.0
    %2337 = vmatpush1.xpose.msra.mxu0 0.0
    %2338 = vmatprep.subr.mxu0 0.0
    %2339 = vmatpush1.xpose.msra.mxu0 0.0
    %2340 = vmatprep.subr.mxu0 0.0
    %2341 = vmatpush1.xpose.msra.mxu0 0.0
    %2342 = vmatprep.subr.mxu0 0.0
    %2343 = vmatpush1.xpose.msra.mxu0 0.0
    %2344 = vmatprep.subr.mxu0 0.0
    %2345 = vmatpush1.xpose.msra.mxu0 0.0
    %2346 = vmatprep.subr.mxu0 0.0
    %2347 = vmatpush1.xpose.msra.mxu0 0.0
    %2348 = vmatprep.subr.mxu0 0.0
    %2349 = vmatpush1.xpose.msra.mxu0 0.0
    %2350 = vmatprep.subr.mxu0 0.0
    %2351 = vmatpush1.xpose.msra.mxu0 0.0
    %2352 = vmatprep.subr.mxu0 0.0
    %2353 = vmatpush1.xpose.msra.mxu0 0.0
    %2354 = vmatprep.subr.mxu0 0.0
    %2355 = vmatpush1.xpose.msra.mxu0 0.0
    %2356 = vmatprep.subr.mxu0 0.0
    %2357 = vmatpush1.xpose.msra.mxu0 0.0
    %2358 = vmatprep.subr.mxu0 0.0
    %2359 = vmatpush1.xpose.msra.mxu0 0.0
    %2360 = vmatprep.subr.mxu0 0.0
    %2361 = vmatpush1.xpose.msra.mxu0 0.0
    %2362 = vmatprep.subr.mxu0 0.0
    %2363 = vmatpush1.xpose.msra.mxu0 0.0
    %2364 = vmatprep.subr.mxu0 0.0
    %2365 = vmatpush1.xpose.msra.mxu0 0.0
    %2366 = vmatprep.subr.mxu0 0.0
    %2367 = vmatpush1.xpose.msra.mxu0 0.0
    %2368 = vmatprep.subr.mxu0 0.0
    %2369 = vmatpush1.xpose.msra.mxu0 0.0
    %2370 = vmatprep.subr.mxu0 0.0
    %2371 = vmatpush1.xpose.msra.mxu0 0.0
    %2372 = vmatprep.subr.mxu0 0.0
    %2373 = vmatpush1.xpose.msra.mxu0 0.0
    %2374 = vmatprep.subr.mxu0 0.0
    %2375 = vmatpush1.xpose.msra.mxu0 0.0
    %2376 = vmatprep.subr.mxu0 0.0
    %2377 = vmatpush1.xpose.msra.mxu0 0.0
    %2378 = vmatprep.subr.mxu0 0.0
    %2379 = vmatpush1.xpose.msra.mxu0 0.0
    %2380 = vmatprep.subr.mxu0 0.0
    %2381 = vmatpush1.xpose.msra.mxu0 0.0
    %2382 = vmatprep.subr.mxu0 0.0
    %2383 = vmatpush1.xpose.msra.mxu0 0.0
    %2384 = vmatprep.subr.mxu0 0.0
    %2385 = vmatpush1.xpose.msra.mxu0 0.0
    %2386 = vmatprep.mubr.f32.mxu0 0.0
    %2387 = vmatmul.mubr.f32.gmra.mrb[0].mxu0 %v2316
    %v2388 = vpop.f32.mrb[0].mxu0
    %v2389 = vadd.f32 0.0, %v2388
    %v2390 = vpop.f32.mrb[0].mxu0
    %2391 = vdwg.mxu0
    %2392 = vrot.lane.b32.xlu0 %v117, 56
    %v2393 = vpop.permute.xlu0 %2392
    %2394 = vrot.lane.b32.xlu0 %v1950, 120
    %v2395 = vpop.permute.xlu0 %2394
    %2396 = vrot.lane.b32.xlu0 %v1955, 120
    %v2397 = vpop.permute.xlu0 %2396
    %v2398 = vsel %vm127, %v2393, 0
    %v2400 = vsel %vm127, %v2395, 0
    %v2402 = vsel %vm127, %v2397, 0
    %2404 = vmatprep.subr.mxu0 0.0
    %2405 = vmatpush1.xpose.msra.mxu0 %v2400
    %2406 = vmatprep.subr.mxu0 0.0
    %2407 = vmatpush1.xpose.msra.mxu0 %v2402
    %2408 = vmatprep.subr.mxu0 0.0
    %2409 = vmatpush1.xpose.msra.mxu0 0.0
    %2410 = vmatprep.subr.mxu0 0.0
    %2411 = vmatpush1.xpose.msra.mxu0 0.0
    %2412 = vmatprep.subr.mxu0 0.0
    %2413 = vmatpush1.xpose.msra.mxu0 0.0
    %2414 = vmatprep.subr.mxu0 0.0
    %2415 = vmatpush1.xpose.msra.mxu0 0.0
    %2416 = vmatprep.subr.mxu0 0.0
    %2417 = vmatpush1.xpose.msra.mxu0 0.0
    %2418 = vmatprep.subr.mxu0 0.0
    %2419 = vmatpush1.xpose.msra.mxu0 0.0
    %2420 = vmatprep.subr.mxu0 0.0
    %2421 = vmatpush1.xpose.msra.mxu0 0.0
    %2422 = vmatprep.subr.mxu0 0.0
    %2423 = vmatpush1.xpose.msra.mxu0 0.0
    %2424 = vmatprep.subr.mxu0 0.0
    %2425 = vmatpush1.xpose.msra.mxu0 0.0
    %2426 = vmatprep.subr.mxu0 0.0
    %2427 = vmatpush1.xpose.msra.mxu0 0.0
    %2428 = vmatprep.subr.mxu0 0.0
    %2429 = vmatpush1.xpose.msra.mxu0 0.0
    %2430 = vmatprep.subr.mxu0 0.0
    %2431 = vmatpush1.xpose.msra.mxu0 0.0
    %2432 = vmatprep.subr.mxu0 0.0
    %2433 = vmatpush1.xpose.msra.mxu0 0.0
    %2434 = vmatprep.subr.mxu0 0.0
    %2435 = vmatpush1.xpose.msra.mxu0 0.0
    %2436 = vmatprep.subr.mxu0 0.0
    %2437 = vmatpush1.xpose.msra.mxu0 0.0
    %2438 = vmatprep.subr.mxu0 0.0
    %2439 = vmatpush1.xpose.msra.mxu0 0.0
    %2440 = vmatprep.subr.mxu0 0.0
    %2441 = vmatpush1.xpose.msra.mxu0 0.0
    %2442 = vmatprep.subr.mxu0 0.0
    %2443 = vmatpush1.xpose.msra.mxu0 0.0
    %2444 = vmatprep.subr.mxu0 0.0
    %2445 = vmatpush1.xpose.msra.mxu0 0.0
    %2446 = vmatprep.subr.mxu0 0.0
    %2447 = vmatpush1.xpose.msra.mxu0 0.0
    %2448 = vmatprep.subr.mxu0 0.0
    %2449 = vmatpush1.xpose.msra.mxu0 0.0
    %2450 = vmatprep.subr.mxu0 0.0
    %2451 = vmatpush1.xpose.msra.mxu0 0.0
    %2452 = vmatprep.subr.mxu0 0.0
    %2453 = vmatpush1.xpose.msra.mxu0 0.0
    %2454 = vmatprep.subr.mxu0 0.0
    %2455 = vmatpush1.xpose.msra.mxu0 0.0
    %2456 = vmatprep.subr.mxu0 0.0
    %2457 = vmatpush1.xpose.msra.mxu0 0.0
    %2458 = vmatprep.subr.mxu0 0.0
    %2459 = vmatpush1.xpose.msra.mxu0 0.0
    %2460 = vmatprep.subr.mxu0 0.0
    %2461 = vmatpush1.xpose.msra.mxu0 0.0
    %2462 = vmatprep.subr.mxu0 0.0
    %2463 = vmatpush1.xpose.msra.mxu0 0.0
    %2464 = vmatprep.subr.mxu0 0.0
    %2465 = vmatpush1.xpose.msra.mxu0 0.0
    %2466 = vmatprep.subr.mxu0 0.0
    %2467 = vmatpush1.xpose.msra.mxu0 0.0
    %2468 = vmatprep.mubr.f32.mxu0 0.0
    %2469 = vmatmul.mubr.f32.gmra.mrb[0].mxu0 %v2398
    %v2470 = vpop.f32.mrb[0].mxu0
    %v2471 = vadd.f32 0.0, %v2470
    %v2472 = vpop.f32.mrb[0].mxu0
    %2473 = vdwg.mxu0
    %v2474 = vmul.f32 %v2389, 0.17677669
    %v2475 = vmul.f32 %v2471, 0.17677669
    %v2476 = vsel %vm1720, %v2474, -inf
    %2477 = vmax.xlane.f32.xlu0 %v2476
    %v2478 = vpop.xlane.xlu0 %2477
    %v2479 = vsel %vm1720, %v2475, -inf
    %2480 = vmax.xlane.f32.xlu0 %v2479
    %v2481 = vpop.xlane.xlu0 %2480
    %v2482 = vsub.f32 %v2474, %v2478
    %v2483 = vsub.f32 %v2475, %v2481
    %v2484 = vmul.f32 %v2482, 1.442695
    %v2485 = vpow.pop %v2484
    %v2486 = vmul.f32 %v2483, 1.442695
    %v2487 = vpow.pop %v2486
    %v2488 = vsel %vm1720, %v2485, 0.0
    %2489 = vadd.xlane.f32.xlu0 %v2488
    %v2490 = vpop.xlane.xlu0 %2489
    %v2491 = vsel %vm1720, %v2487, 0.0
    %2492 = vadd.xlane.f32.xlu0 %v2491
    %v2493 = vpop.xlane.xlu0 %2492
    %v2494 = vrcp.pop %v2490
    %v2495 = vrcp.pop %v2493
    %v2496 = vmul.f32 %v2485, %v2494
    %v2497 = vmul.f32 %v2487, %v2495
    %2498 = vrot.lane.b32.xlu0 %v1940, 88
    %v2499 = vpop.permute.xlu0 %2498
    %2500 = vrot.lane.b32.xlu0 %v1945, 88
    %v2501 = vpop.permute.xlu0 %2500
    %v2505 = vsel %vm1720, %v2496, 0
    %2507 = vmatprep.subr.mxu0 0.0
    %2508 = vmatpush1.msra.mxu0 %v2499
    %2509 = vmatprep.subr.mxu0 0.0
    %2510 = vmatpush1.msra.mxu0 %v2501
    %2511 = vmatprep.subr.mxu0 0.0
    %2512 = vmatpush1.msra.mxu0 0.0
    %2513 = vmatprep.subr.mxu0 0.0
    %2514 = vmatpush1.msra.mxu0 0.0
    %2515 = vmatprep.subr.mxu0 0.0
    %2516 = vmatpush1.msra.mxu0 0.0
    %2517 = vmatprep.subr.mxu0 0.0
    %2518 = vmatpush1.msra.mxu0 0.0
    %2519 = vmatprep.subr.mxu0 0.0
    %2520 = vmatpush1.msra.mxu0 0.0
    %2521 = vmatprep.subr.mxu0 0.0
    %2522 = vmatpush1.msra.mxu0 0.0
    %2523 = vmatprep.subr.mxu0 0.0
    %2524 = vmatpush1.msra.mxu0 0.0
    %2525 = vmatprep.subr.mxu0 0.0
    %2526 = vmatpush1.msra.mxu0 0.0
    %2527 = vmatprep.subr.mxu0 0.0
    %2528 = vmatpush1.msra.mxu0 0.0
    %2529 = vmatprep.subr.mxu0 0.0
    %2530 = vmatpush1.msra.mxu0 0.0
    %2531 = vmatprep.subr.mxu0 0.0
    %2532 = vmatpush1.msra.mxu0 0.0
    %2533 = vmatprep.subr.mxu0 0.0
    %2534 = vmatpush1.msra.mxu0 0.0
    %2535 = vmatprep.subr.mxu0 0.0
    %2536 = vmatpush1.msra.mxu0 0.0
    %2537 = vmatprep.subr.mxu0 0.0
    %2538 = vmatpush1.msra.mxu0 0.0
    %2539 = vmatprep.subr.mxu0 0.0
    %2540 = vmatpush1.msra.mxu0 0.0
    %2541 = vmatprep.subr.mxu0 0.0
    %2542 = vmatpush1.msra.mxu0 0.0
    %2543 = vmatprep.subr.mxu0 0.0
    %2544 = vmatpush1.msra.mxu0 0.0
    %2545 = vmatprep.subr.mxu0 0.0
    %2546 = vmatpush1.msra.mxu0 0.0
    %2547 = vmatprep.subr.mxu0 0.0
    %2548 = vmatpush1.msra.mxu0 0.0
    %2549 = vmatprep.subr.mxu0 0.0
    %2550 = vmatpush1.msra.mxu0 0.0
    %2551 = vmatprep.subr.mxu0 0.0
    %2552 = vmatpush1.msra.mxu0 0.0
    %2553 = vmatprep.subr.mxu0 0.0
    %2554 = vmatpush1.msra.mxu0 0.0
    %2555 = vmatprep.subr.mxu0 0.0
    %2556 = vmatpush1.msra.mxu0 0.0
    %2557 = vmatprep.subr.mxu0 0.0
    %2558 = vmatpush1.msra.mxu0 0.0
    %2559 = vmatprep.subr.mxu0 0.0
    %2560 = vmatpush1.msra.mxu0 0.0
    %2561 = vmatprep.subr.mxu0 0.0
    %2562 = vmatpush1.msra.mxu0 0.0
    %2563 = vmatprep.subr.mxu0 0.0
    %2564 = vmatpush1.msra.mxu0 0.0
    %2565 = vmatprep.subr.mxu0 0.0
    %2566 = vmatpush1.msra.mxu0 0.0
    %2567 = vmatprep.subr.mxu0 0.0
    %2568 = vmatpush1.msra.mxu0 0.0
    %2569 = vmatprep.subr.mxu0 0.0
    %2570 = vmatpush1.msra.mxu0 0.0
    %2571 = vmatprep.mubr.f32.mxu0 0.0
    %2572 = vmatmul.mubr.f32.gmra.mrb[0].mxu0 %v2505
    %v2573 = vpop.f32.mrb[0].mxu0
    %v2574 = vadd.f32 0.0, %v2573
    %v2575 = vpop.f32.mrb[0].mxu0
    %2576 = vdwg.mxu0
    %2577 = vrot.lane.b32.xlu0 %v1950, 88
    %v2578 = vpop.permute.xlu0 %2577
    %2579 = vrot.lane.b32.xlu0 %v1955, 88
    %v2580 = vpop.permute.xlu0 %2579
    %v2584 = vsel %vm1720, %v2497, 0
    %2586 = vmatprep.subr.mxu0 0.0
    %2587 = vmatpush1.msra.mxu0 %v2578
    %2588 = vmatprep.subr.mxu0 0.0
    %2589 = vmatpush1.msra.mxu0 %v2580
    %2590 = vmatprep.subr.mxu0 0.0
    %2591 = vmatpush1.msra.mxu0 0.0
    %2592 = vmatprep.subr.mxu0 0.0
    %2593 = vmatpush1.msra.mxu0 0.0
    %2594 = vmatprep.subr.mxu0 0.0
    %2595 = vmatpush1.msra.mxu0 0.0
    %2596 = vmatprep.subr.mxu0 0.0
    %2597 = vmatpush1.msra.mxu0 0.0
    %2598 = vmatprep.subr.mxu0 0.0
    %2599 = vmatpush1.msra.mxu0 0.0
    %2600 = vmatprep.subr.mxu0 0.0
    %2601 = vmatpush1.msra.mxu0 0.0
    %2602 = vmatprep.subr.mxu0 0.0
    %2603 = vmatpush1.msra.mxu0 0.0
    %2604 = vmatprep.subr.mxu0 0.0
    %2605 = vmatpush1.msra.mxu0 0.0
    %2606 = vmatprep.subr.mxu0 0.0
    %2607 = vmatpush1.msra.mxu0 0.0
    %2608 = vmatprep.subr.mxu0 0.0
    %2609 = vmatpush1.msra.mxu0 0.0
    %2610 = vmatprep.subr.mxu0 0.0
    %2611 = vmatpush1.msra.mxu0 0.0
    %2612 = vmatprep.subr.mxu0 0.0
    %2613 = vmatpush1.msra.mxu0 0.0
    %2614 = vmatprep.subr.mxu0 0.0
    %2615 = vmatpush1.msra.mxu0 0.0
    %2616 = vmatprep.subr.mxu0 0.0
    %2617 = vmatpush1.msra.mxu0 0.0
    %2618 = vmatprep.subr.mxu0 0.0
    %2619 = vmatpush1.msra.mxu0 0.0
    %2620 = vmatprep.subr.mxu0 0.0
    %2621 = vmatpush1.msra.mxu0 0.0
    %2622 = vmatprep.subr.mxu0 0.0
    %2623 = vmatpush1.msra.mxu0 0.0
    %2624 = vmatprep.subr.mxu0 0.0
    %2625 = vmatpush1.msra.mxu0 0.0
    %2626 = vmatprep.subr.mxu0 0.0
    %2627 = vmatpush1.msra.mxu0 0.0
    %2628 = vmatprep.subr.mxu0 0.0
    %2629 = vmatpush1.msra.mxu0 0.0
    %2630 = vmatprep.subr.mxu0 0.0
    %2631 = vmatpush1.msra.mxu0 0.0
    %2632 = vmatprep.subr.mxu0 0.0
    %2633 = vmatpush1.msra.mxu0 0.0
    %2634 = vmatprep.subr.mxu0 0.0
    %2635 = vmatpush1.msra.mxu0 0.0
    %2636 = vmatprep.subr.mxu0 0.0
    %2637 = vmatpush1.msra.mxu0 0.0
    %2638 = vmatprep.subr.mxu0 0.0
    %2639 = vmatpush1.msra.mxu0 0.0
    %2640 = vmatprep.subr.mxu0 0.0
    %2641 = vmatpush1.msra.mxu0 0.0
    %2642 = vmatprep.subr.mxu0 0.0
    %2643 = vmatpush1.msra.mxu0 0.0
    %2644 = vmatprep.subr.mxu0 0.0
    %2645 = vmatpush1.msra.mxu0 0.0
    %2646 = vmatprep.subr.mxu0 0.0
    %2647 = vmatpush1.msra.mxu0 0.0
    %2648 = vmatprep.subr.mxu0 0.0
    %2649 = vmatpush1.msra.mxu0 0.0
    %2650 = vmatprep.mubr.f32.mxu0 0.0
    %2651 = vmatmul.mubr.f32.gmra.mrb[0].mxu0 %v2584
    %v2652 = vpop.f32.mrb[0].mxu0
    %v2653 = vadd.f32 0.0, %v2652
    %v2654 = vpop.f32.mrb[0].mxu0
    %2655 = vdwg.mxu0
    %2658 = vrot.lane.b32.xlu0 %v2574, 72
    %v2659 = vpop.permute.xlu0 %2658
    %2660 = vrot.lane.b32.xlu0 %v2653, 72
    %v2661 = vpop.permute.xlu0 %2660
    %v2664 = vadd.f32 %v112, %v2659
    %v2665 = vadd.f32 %v117, %v2661
    %2666 = vrot.lane.b32.xlu0 %v112, 48
    %v2667 = vpop.permute.xlu0 %2666
    %2668 = vrot.lane.b32.xlu0 %v1940, 112
    %v2669 = vpop.permute.xlu0 %2668
    %2670 = vrot.lane.b32.xlu0 %v1945, 112
    %v2671 = vpop.permute.xlu0 %2670
    %v2672 = vsel %vm127, %v2667, 0
    %v2674 = vsel %vm127, %v2669, 0
    %v2676 = vsel %vm127, %v2671, 0
    %2678 = vmatprep.subr.mxu0 0.0
    %2679 = vmatpush1.xpose.msra.mxu0 %v2674
    %2680 = vmatprep.subr.mxu0 0.0
    %2681 = vmatpush1.xpose.msra.mxu0 %v2676
    %2682 = vmatprep.subr.mxu0 0.0
    %2683 = vmatpush1.xpose.msra.mxu0 0.0
    %2684 = vmatprep.subr.mxu0 0.0
    %2685 = vmatpush1.xpose.msra.mxu0 0.0
    %2686 = vmatprep.subr.mxu0 0.0
    %2687 = vmatpush1.xpose.msra.mxu0 0.0
    %2688 = vmatprep.subr.mxu0 0.0
    %2689 = vmatpush1.xpose.msra.mxu0 0.0
    %2690 = vmatprep.subr.mxu0 0.0
    %2691 = vmatpush1.xpose.msra.mxu0 0.0
    %2692 = vmatprep.subr.mxu0 0.0
    %2693 = vmatpush1.xpose.msra.mxu0 0.0
    %2694 = vmatprep.subr.mxu0 0.0
    %2695 = vmatpush1.xpose.msra.mxu0 0.0
    %2696 = vmatprep.subr.mxu0 0.0
    %2697 = vmatpush1.xpose.msra.mxu0 0.0
    %2698 = vmatprep.subr.mxu0 0.0
    %2699 = vmatpush1.xpose.msra.mxu0 0.0
    %2700 = vmatprep.subr.mxu0 0.0
    %2701 = vmatpush1.xpose.msra.mxu0 0.0
    %2702 = vmatprep.subr.mxu0 0.0
    %2703 = vmatpush1.xpose.msra.mxu0 0.0
    %2704 = vmatprep.subr.mxu0 0.0
    %2705 = vmatpush1.xpose.msra.mxu0 0.0
    %2706 = vmatprep.subr.mxu0 0.0
    %2707 = vmatpush1.xpose.msra.mxu0 0.0
    %2708 = vmatprep.subr.mxu0 0.0
    %2709 = vmatpush1.xpose.msra.mxu0 0.0
    %2710 = vmatprep.subr.mxu0 0.0
    %2711 = vmatpush1.xpose.msra.mxu0 0.0
    %2712 = vmatprep.subr.mxu0 0.0
    %2713 = vmatpush1.xpose.msra.mxu0 0.0
    %2714 = vmatprep.subr.mxu0 0.0
    %2715 = vmatpush1.xpose.msra.mxu0 0.0
    %2716 = vmatprep.subr.mxu0 0.0
    %2717 = vmatpush1.xpose.msra.mxu0 0.0
    %2718 = vmatprep.subr.mxu0 0.0
    %2719 = vmatpush1.xpose.msra.mxu0 0.0
    %2720 = vmatprep.subr.mxu0 0.0
    %2721 = vmatpush1.xpose.msra.mxu0 0.0
    %2722 = vmatprep.subr.mxu0 0.0
    %2723 = vmatpush1.xpose.msra.mxu0 0.0
    %2724 = vmatprep.subr.mxu0 0.0
    %2725 = vmatpush1.xpose.msra.mxu0 0.0
    %2726 = vmatprep.subr.mxu0 0.0
    %2727 = vmatpush1.xpose.msra.mxu0 0.0
    %2728 = vmatprep.subr.mxu0 0.0
    %2729 = vmatpush1.xpose.msra.mxu0 0.0
    %2730 = vmatprep.subr.mxu0 0.0
    %2731 = vmatpush1.xpose.msra.mxu0 0.0
    %2732 = vmatprep.subr.mxu0 0.0
    %2733 = vmatpush1.xpose.msra.mxu0 0.0
    %2734 = vmatprep.subr.mxu0 0.0
    %2735 = vmatpush1.xpose.msra.mxu0 0.0
    %2736 = vmatprep.subr.mxu0 0.0
    %2737 = vmatpush1.xpose.msra.mxu0 0.0
    %2738 = vmatprep.subr.mxu0 0.0
    %2739 = vmatpush1.xpose.msra.mxu0 0.0
    %2740 = vmatprep.subr.mxu0 0.0
    %2741 = vmatpush1.xpose.msra.mxu0 0.0
    %2742 = vmatprep.mubr.f32.mxu0 0.0
    %2743 = vmatmul.mubr.f32.gmra.mrb[0].mxu0 %v2672
    %v2744 = vpop.f32.mrb[0].mxu0
    %v2745 = vadd.f32 0.0, %v2744
    %v2746 = vpop.f32.mrb[0].mxu0
    %2747 = vdwg.mxu0
    %2748 = vrot.lane.b32.xlu0 %v117, 48
    %v2749 = vpop.permute.xlu0 %2748
    %2750 = vrot.lane.b32.xlu0 %v1950, 112
    %v2751 = vpop.permute.xlu0 %2750
    %2752 = vrot.lane.b32.xlu0 %v1955, 112
    %v2753 = vpop.permute.xlu0 %2752
    %v2754 = vsel %vm127, %v2749, 0
    %v2756 = vsel %vm127, %v2751, 0
    %v2758 = vsel %vm127, %v2753, 0
    %2760 = vmatprep.subr.mxu0 0.0
    %2761 = vmatpush1.xpose.msra.mxu0 %v2756
    %2762 = vmatprep.subr.mxu0 0.0
    %2763 = vmatpush1.xpose.msra.mxu0 %v2758
    %2764 = vmatprep.subr.mxu0 0.0
    %2765 = vmatpush1.xpose.msra.mxu0 0.0
    %2766 = vmatprep.subr.mxu0 0.0
    %2767 = vmatpush1.xpose.msra.mxu0 0.0
    %2768 = vmatprep.subr.mxu0 0.0
    %2769 = vmatpush1.xpose.msra.mxu0 0.0
    %2770 = vmatprep.subr.mxu0 0.0
    %2771 = vmatpush1.xpose.msra.mxu0 0.0
    %2772 = vmatprep.subr.mxu0 0.0
    %2773 = vmatpush1.xpose.msra.mxu0 0.0
    %2774 = vmatprep.subr.mxu0 0.0
    %2775 = vmatpush1.xpose.msra.mxu0 0.0
    %2776 = vmatprep.subr.mxu0 0.0
    %2777 = vmatpush1.xpose.msra.mxu0 0.0
    %2778 = vmatprep.subr.mxu0 0.0
    %2779 = vmatpush1.xpose.msra.mxu0 0.0
    %2780 = vmatprep.subr.mxu0 0.0
    %2781 = vmatpush1.xpose.msra.mxu0 0.0
    %2782 = vmatprep.subr.mxu0 0.0
    %2783 = vmatpush1.xpose.msra.mxu0 0.0
    %2784 = vmatprep.subr.mxu0 0.0
    %2785 = vmatpush1.xpose.msra.mxu0 0.0
    %2786 = vmatprep.subr.mxu0 0.0
    %2787 = vmatpush1.xpose.msra.mxu0 0.0
    %2788 = vmatprep.subr.mxu0 0.0
    %2789 = vmatpush1.xpose.msra.mxu0 0.0
    %2790 = vmatprep.subr.mxu0 0.0
    %2791 = vmatpush1.xpose.msra.mxu0 0.0
    %2792 = vmatprep.subr.mxu0 0.0
    %2793 = vmatpush1.xpose.msra.mxu0 0.0
    %2794 = vmatprep.subr.mxu0 0.0
    %2795 = vmatpush1.xpose.msra.mxu0 0.0
    %2796 = vmatprep.subr.mxu0 0.0
    %2797 = vmatpush1.xpose.msra.mxu0 0.0
    %2798 = vmatprep.subr.mxu0 0.0
    %2799 = vmatpush1.xpose.msra.mxu0 0.0
    %2800 = vmatprep.subr.mxu0 0.0
    %2801 = vmatpush1.xpose.msra.mxu0 0.0
    %2802 = vmatprep.subr.mxu0 0.0
    %2803 = vmatpush1.xpose.msra.mxu0 0.0
    %2804 = vmatprep.subr.mxu0 0.0
    %2805 = vmatpush1.xpose.msra.mxu0 0.0
    %2806 = vmatprep.subr.mxu0 0.0
    %2807 = vmatpush1.xpose.msra.mxu0 0.0
    %2808 = vmatprep.subr.mxu0 0.0
    %2809 = vmatpush1.xpose.msra.mxu0 0.0
    %2810 = vmatprep.subr.mxu0 0.0
    %2811 = vmatpush1.xpose.msra.mxu0 0.0
    %2812 = vmatprep.subr.mxu0 0.0
    %2813 = vmatpush1.xpose.msra.mxu0 0.0
    %2814 = vmatprep.subr.mxu0 0.0
    %2815 = vmatpush1.xpose.msra.mxu0 0.0
    %2816 = vmatprep.subr.mxu0 0.0
    %2817 = vmatpush1.xpose.msra.mxu0 0.0
    %2818 = vmatprep.subr.mxu0 0.0
    %2819 = vmatpush1.xpose.msra.mxu0 0.0
    %2820 = vmatprep.subr.mxu0 0.0
    %2821 = vmatpush1.xpose.msra.mxu0 0.0
    %2822 = vmatprep.subr.mxu0 0.0
    %2823 = vmatpush1.xpose.msra.mxu0 0.0
    %2824 = vmatprep.mubr.f32.mxu0 0.0
    %2825 = vmatmul.mubr.f32.gmra.mrb[0].mxu0 %v2754
    %v2826 = vpop.f32.mrb[0].mxu0
    %v2827 = vadd.f32 0.0, %v2826
    %v2828 = vpop.f32.mrb[0].mxu0
    %2829 = vdwg.mxu0
    %v2830 = vmul.f32 %v2745, 0.17677669
    %v2831 = vmul.f32 %v2827, 0.17677669
    %v2832 = vsel %vm1720, %v2830, -inf
    %2833 = vmax.xlane.f32.xlu0 %v2832
    %v2834 = vpop.xlane.xlu0 %2833
    %v2835 = vsel %vm1720, %v2831, -inf
    %2836 = vmax.xlane.f32.xlu0 %v2835
    %v2837 = vpop.xlane.xlu0 %2836
    %v2838 = vsub.f32 %v2830, %v2834
    %v2839 = vsub.f32 %v2831, %v2837
    %v2840 = vmul.f32 %v2838, 1.442695
    %v2841 = vpow.pop %v2840
    %v2842 = vmul.f32 %v2839, 1.442695
    %v2843 = vpow.pop %v2842
    %v2844 = vsel %vm1720, %v2841, 0.0
    %2845 = vadd.xlane.f32.xlu0 %v2844
    %v2846 = vpop.xlane.xlu0 %2845
    %v2847 = vsel %vm1720, %v2843, 0.0
    %2848 = vadd.xlane.f32.xlu0 %v2847
    %v2849 = vpop.xlane.xlu0 %2848
    %v2850 = vrcp.pop %v2846
    %v2851 = vrcp.pop %v2849
    %v2852 = vmul.f32 %v2841, %v2850
    %v2853 = vmul.f32 %v2843, %v2851
    %2854 = vrot.lane.b32.xlu0 %v1940, 80
    %v2855 = vpop.permute.xlu0 %2854
    %2856 = vrot.lane.b32.xlu0 %v1945, 80
    %v2857 = vpop.permute.xlu0 %2856
    %v2861 = vsel %vm1720, %v2852, 0
    %2863 = vmatprep.subr.mxu0 0.0
    %2864 = vmatpush1.msra.mxu0 %v2855
    %2865 = vmatprep.subr.mxu0 0.0
    %2866 = vmatpush1.msra.mxu0 %v2857
    %2867 = vmatprep.subr.mxu0 0.0
    %2868 = vmatpush1.msra.mxu0 0.0
    %2869 = vmatprep.subr.mxu0 0.0
    %2870 = vmatpush1.msra.mxu0 0.0
    %2871 = vmatprep.subr.mxu0 0.0
    %2872 = vmatpush1.msra.mxu0 0.0
    %2873 = vmatprep.subr.mxu0 0.0
    %2874 = vmatpush1.msra.mxu0 0.0
    %2875 = vmatprep.subr.mxu0 0.0
    %2876 = vmatpush1.msra.mxu0 0.0
    %2877 = vmatprep.subr.mxu0 0.0
    %2878 = vmatpush1.msra.mxu0 0.0
    %2879 = vmatprep.subr.mxu0 0.0
    %2880 = vmatpush1.msra.mxu0 0.0
    %2881 = vmatprep.subr.mxu0 0.0
    %2882 = vmatpush1.msra.mxu0 0.0
    %2883 = vmatprep.subr.mxu0 0.0
    %2884 = vmatpush1.msra.mxu0 0.0
    %2885 = vmatprep.subr.mxu0 0.0
    %2886 = vmatpush1.msra.mxu0 0.0
    %2887 = vmatprep.subr.mxu0 0.0
    %2888 = vmatpush1.msra.mxu0 0.0
    %2889 = vmatprep.subr.mxu0 0.0
    %2890 = vmatpush1.msra.mxu0 0.0
    %2891 = vmatprep.subr.mxu0 0.0
    %2892 = vmatpush1.msra.mxu0 0.0
    %2893 = vmatprep.subr.mxu0 0.0
    %2894 = vmatpush1.msra.mxu0 0.0
    %2895 = vmatprep.subr.mxu0 0.0
    %2896 = vmatpush1.msra.mxu0 0.0
    %2897 = vmatprep.subr.mxu0 0.0
    %2898 = vmatpush1.msra.mxu0 0.0
    %2899 = vmatprep.subr.mxu0 0.0
    %2900 = vmatpush1.msra.mxu0 0.0
    %2901 = vmatprep.subr.mxu0 0.0
    %2902 = vmatpush1.msra.mxu0 0.0
    %2903 = vmatprep.subr.mxu0 0.0
    %2904 = vmatpush1.msra.mxu0 0.0
    %2905 = vmatprep.subr.mxu0 0.0
    %2906 = vmatpush1.msra.mxu0 0.0
    %2907 = vmatprep.subr.mxu0 0.0
    %2908 = vmatpush1.msra.mxu0 0.0
    %2909 = vmatprep.subr.mxu0 0.0
    %2910 = vmatpush1.msra.mxu0 0.0
    %2911 = vmatprep.subr.mxu0 0.0
    %2912 = vmatpush1.msra.mxu0 0.0
    %2913 = vmatprep.subr.mxu0 0.0
    %2914 = vmatpush1.msra.mxu0 0.0
    %2915 = vmatprep.subr.mxu0 0.0
    %2916 = vmatpush1.msra.mxu0 0.0
    %2917 = vmatprep.subr.mxu0 0.0
    %2918 = vmatpush1.msra.mxu0 0.0
    %2919 = vmatprep.subr.mxu0 0.0
    %2920 = vmatpush1.msra.mxu0 0.0
    %2921 = vmatprep.subr.mxu0 0.0
    %2922 = vmatpush1.msra.mxu0 0.0
    %2923 = vmatprep.subr.mxu0 0.0
    %2924 = vmatpush1.msra.mxu0 0.0
    %2925 = vmatprep.subr.mxu0 0.0
    %2926 = vmatpush1.msra.mxu0 0.0
    %2927 = vmatprep.mubr.f32.mxu0 0.0
    %2928 = vmatmul.mubr.f32.gmra.mrb[0].mxu0 %v2861
    %v2929 = vpop.f32.mrb[0].mxu0
    %v2930 = vadd.f32 0.0, %v2929
    %v2931 = vpop.f32.mrb[0].mxu0
    %2932 = vdwg.mxu0
    %2933 = vrot.lane.b32.xlu0 %v1950, 80
    %v2934 = vpop.permute.xlu0 %2933
    %2935 = vrot.lane.b32.xlu0 %v1955, 80
    %v2936 = vpop.permute.xlu0 %2935
    %v2940 = vsel %vm1720, %v2853, 0
    %2942 = vmatprep.subr.mxu0 0.0
    %2943 = vmatpush1.msra.mxu0 %v2934
    %2944 = vmatprep.subr.mxu0 0.0
    %2945 = vmatpush1.msra.mxu0 %v2936
    %2946 = vmatprep.subr.mxu0 0.0
    %2947 = vmatpush1.msra.mxu0 0.0
    %2948 = vmatprep.subr.mxu0 0.0
    %2949 = vmatpush1.msra.mxu0 0.0
    %2950 = vmatprep.subr.mxu0 0.0
    %2951 = vmatpush1.msra.mxu0 0.0
    %2952 = vmatprep.subr.mxu0 0.0
    %2953 = vmatpush1.msra.mxu0 0.0
    %2954 = vmatprep.subr.mxu0 0.0
    %2955 = vmatpush1.msra.mxu0 0.0
    %2956 = vmatprep.subr.mxu0 0.0
    %2957 = vmatpush1.msra.mxu0 0.0
    %2958 = vmatprep.subr.mxu0 0.0
    %2959 = vmatpush1.msra.mxu0 0.0
    %2960 = vmatprep.subr.mxu0 0.0
    %2961 = vmatpush1.msra.mxu0 0.0
    %2962 = vmatprep.subr.mxu0 0.0
    %2963 = vmatpush1.msra.mxu0 0.0
    %2964 = vmatprep.subr.mxu0 0.0
    %2965 = vmatpush1.msra.mxu0 0.0
    %2966 = vmatprep.subr.mxu0 0.0
    %2967 = vmatpush1.msra.mxu0 0.0
    %2968 = vmatprep.subr.mxu0 0.0
    %2969 = vmatpush1.msra.mxu0 0.0
    %2970 = vmatprep.subr.mxu0 0.0
    %2971 = vmatpush1.msra.mxu0 0.0
    %2972 = vmatprep.subr.mxu0 0.0
    %2973 = vmatpush1.msra.mxu0 0.0
    %2974 = vmatprep.subr.mxu0 0.0
    %2975 = vmatpush1.msra.mxu0 0.0
    %2976 = vmatprep.subr.mxu0 0.0
    %2977 = vmatpush1.msra.mxu0 0.0
    %2978 = vmatprep.subr.mxu0 0.0
    %2979 = vmatpush1.msra.mxu0 0.0
    %2980 = vmatprep.subr.mxu0 0.0
    %2981 = vmatpush1.msra.mxu0 0.0
    %2982 = vmatprep.subr.mxu0 0.0
    %2983 = vmatpush1.msra.mxu0 0.0
    %2984 = vmatprep.subr.mxu0 0.0
    %2985 = vmatpush1.msra.mxu0 0.0
    %2986 = vmatprep.subr.mxu0 0.0
    %2987 = vmatpush1.msra.mxu0 0.0
    %2988 = vmatprep.subr.mxu0 0.0
    %2989 = vmatpush1.msra.mxu0 0.0
    %2990 = vmatprep.subr.mxu0 0.0
    %2991 = vmatpush1.msra.mxu0 0.0
    %2992 = vmatprep.subr.mxu0 0.0
    %2993 = vmatpush1.msra.mxu0 0.0
    %2994 = vmatprep.subr.mxu0 0.0
    %2995 = vmatpush1.msra.mxu0 0.0
    %2996 = vmatprep.subr.mxu0 0.0
    %2997 = vmatpush1.msra.mxu0 0.0
    %2998 = vmatprep.subr.mxu0 0.0
    %2999 = vmatpush1.msra.mxu0 0.0
    %3000 = vmatprep.subr.mxu0 0.0
    %3001 = vmatpush1.msra.mxu0 0.0
    %3002 = vmatprep.subr.mxu0 0.0
    %3003 = vmatpush1.msra.mxu0 0.0
    %3004 = vmatprep.subr.mxu0 0.0
    %3005 = vmatpush1.msra.mxu0 0.0
    %3006 = vmatprep.mubr.f32.mxu0 0.0
    %3007 = vmatmul.mubr.f32.gmra.mrb[0].mxu0 %v2940
    %v3008 = vpop.f32.mrb[0].mxu0
    %v3009 = vadd.f32 0.0, %v3008
    %v3010 = vpop.f32.mrb[0].mxu0
    %3011 = vdwg.mxu0
    %3014 = vrot.lane.b32.xlu0 %v2930, 80
    %v3015 = vpop.permute.xlu0 %3014
    %3016 = vrot.lane.b32.xlu0 %v3009, 80
    %v3017 = vpop.permute.xlu0 %3016
    %v3020 = vadd.f32 %v112, %v3015
    %v3021 = vadd.f32 %v117, %v3017
    %3022 = vrot.lane.b32.xlu0 %v112, 40
    %v3023 = vpop.permute.xlu0 %3022
    %3024 = vrot.lane.b32.xlu0 %v1940, 104
    %v3025 = vpop.permute.xlu0 %3024
    %3026 = vrot.lane.b32.xlu0 %v1945, 104
    %v3027 = vpop.permute.xlu0 %3026
    %v3028 = vsel %vm127, %v3023, 0
    %v3030 = vsel %vm127, %v3025, 0
    %v3032 = vsel %vm127, %v3027, 0
    %3034 = vmatprep.subr.mxu0 0.0
    %3035 = vmatpush1.xpose.msra.mxu0 %v3030
    %3036 = vmatprep.subr.mxu0 0.0
    %3037 = vmatpush1.xpose.msra.mxu0 %v3032
    %3038 = vmatprep.subr.mxu0 0.0
    %3039 = vmatpush1.xpose.msra.mxu0 0.0
    %3040 = vmatprep.subr.mxu0 0.0
    %3041 = vmatpush1.xpose.msra.mxu0 0.0
    %3042 = vmatprep.subr.mxu0 0.0
    %3043 = vmatpush1.xpose.msra.mxu0 0.0
    %3044 = vmatprep.subr.mxu0 0.0
    %3045 = vmatpush1.xpose.msra.mxu0 0.0
    %3046 = vmatprep.subr.mxu0 0.0
    %3047 = vmatpush1.xpose.msra.mxu0 0.0
    %3048 = vmatprep.subr.mxu0 0.0
    %3049 = vmatpush1.xpose.msra.mxu0 0.0
    %3050 = vmatprep.subr.mxu0 0.0
    %3051 = vmatpush1.xpose.msra.mxu0 0.0
    %3052 = vmatprep.subr.mxu0 0.0
    %3053 = vmatpush1.xpose.msra.mxu0 0.0
    %3054 = vmatprep.subr.mxu0 0.0
    %3055 = vmatpush1.xpose.msra.mxu0 0.0
    %3056 = vmatprep.subr.mxu0 0.0
    %3057 = vmatpush1.xpose.msra.mxu0 0.0
    %3058 = vmatprep.subr.mxu0 0.0
    %3059 = vmatpush1.xpose.msra.mxu0 0.0
    %3060 = vmatprep.subr.mxu0 0.0
    %3061 = vmatpush1.xpose.msra.mxu0 0.0
    %3062 = vmatprep.subr.mxu0 0.0
    %3063 = vmatpush1.xpose.msra.mxu0 0.0
    %3064 = vmatprep.subr.mxu0 0.0
    %3065 = vmatpush1.xpose.msra.mxu0 0.0
    %3066 = vmatprep.subr.mxu0 0.0
    %3067 = vmatpush1.xpose.msra.mxu0 0.0
    %3068 = vmatprep.subr.mxu0 0.0
    %3069 = vmatpush1.xpose.msra.mxu0 0.0
    %3070 = vmatprep.subr.mxu0 0.0
    %3071 = vmatpush1.xpose.msra.mxu0 0.0
    %3072 = vmatprep.subr.mxu0 0.0
    %3073 = vmatpush1.xpose.msra.mxu0 0.0
    %3074 = vmatprep.subr.mxu0 0.0
    %3075 = vmatpush1.xpose.msra.mxu0 0.0
    %3076 = vmatprep.subr.mxu0 0.0
    %3077 = vmatpush1.xpose.msra.mxu0 0.0
    %3078 = vmatprep.subr.mxu0 0.0
    %3079 = vmatpush1.xpose.msra.mxu0 0.0
    %3080 = vmatprep.subr.mxu0 0.0
    %3081 = vmatpush1.xpose.msra.mxu0 0.0
    %3082 = vmatprep.subr.mxu0 0.0
    %3083 = vmatpush1.xpose.msra.mxu0 0.0
    %3084 = vmatprep.subr.mxu0 0.0
    %3085 = vmatpush1.xpose.msra.mxu0 0.0
    %3086 = vmatprep.subr.mxu0 0.0
    %3087 = vmatpush1.xpose.msra.mxu0 0.0
    %3088 = vmatprep.subr.mxu0 0.0
    %3089 = vmatpush1.xpose.msra.mxu0 0.0
    %3090 = vmatprep.subr.mxu0 0.0
    %3091 = vmatpush1.xpose.msra.mxu0 0.0
    %3092 = vmatprep.subr.mxu0 0.0
    %3093 = vmatpush1.xpose.msra.mxu0 0.0
    %3094 = vmatprep.subr.mxu0 0.0
    %3095 = vmatpush1.xpose.msra.mxu0 0.0
    %3096 = vmatprep.subr.mxu0 0.0
    %3097 = vmatpush1.xpose.msra.mxu0 0.0
    %3098 = vmatprep.mubr.f32.mxu0 0.0
    %3099 = vmatmul.mubr.f32.gmra.mrb[0].mxu0 %v3028
    %v3100 = vpop.f32.mrb[0].mxu0
    %v3101 = vadd.f32 0.0, %v3100
    %v3102 = vpop.f32.mrb[0].mxu0
    %3103 = vdwg.mxu0
    %3104 = vrot.lane.b32.xlu0 %v117, 40
    %v3105 = vpop.permute.xlu0 %3104
    %3106 = vrot.lane.b32.xlu0 %v1950, 104
    %v3107 = vpop.permute.xlu0 %3106
    %3108 = vrot.lane.b32.xlu0 %v1955, 104
    %v3109 = vpop.permute.xlu0 %3108
    %v3110 = vsel %vm127, %v3105, 0
    %v3112 = vsel %vm127, %v3107, 0
    %v3114 = vsel %vm127, %v3109, 0
    %3116 = vmatprep.subr.mxu0 0.0
    %3117 = vmatpush1.xpose.msra.mxu0 %v3112
    %3118 = vmatprep.subr.mxu0 0.0
    %3119 = vmatpush1.xpose.msra.mxu0 %v3114
    %3120 = vmatprep.subr.mxu0 0.0
    %3121 = vmatpush1.xpose.msra.mxu0 0.0
    %3122 = vmatprep.subr.mxu0 0.0
    %3123 = vmatpush1.xpose.msra.mxu0 0.0
    %3124 = vmatprep.subr.mxu0 0.0
    %3125 = vmatpush1.xpose.msra.mxu0 0.0
    %3126 = vmatprep.subr.mxu0 0.0
    %3127 = vmatpush1.xpose.msra.mxu0 0.0
    %3128 = vmatprep.subr.mxu0 0.0
    %3129 = vmatpush1.xpose.msra.mxu0 0.0
    %3130 = vmatprep.subr.mxu0 0.0
    %3131 = vmatpush1.xpose.msra.mxu0 0.0
    %3132 = vmatprep.subr.mxu0 0.0
    %3133 = vmatpush1.xpose.msra.mxu0 0.0
    %3134 = vmatprep.subr.mxu0 0.0
    %3135 = vmatpush1.xpose.msra.mxu0 0.0
    %3136 = vmatprep.subr.mxu0 0.0
    %3137 = vmatpush1.xpose.msra.mxu0 0.0
    %3138 = vmatprep.subr.mxu0 0.0
    %3139 = vmatpush1.xpose.msra.mxu0 0.0
    %3140 = vmatprep.subr.mxu0 0.0
    %3141 = vmatpush1.xpose.msra.mxu0 0.0
    %3142 = vmatprep.subr.mxu0 0.0
    %3143 = vmatpush1.xpose.msra.mxu0 0.0
    %3144 = vmatprep.subr.mxu0 0.0
    %3145 = vmatpush1.xpose.msra.mxu0 0.0
    %3146 = vmatprep.subr.mxu0 0.0
    %3147 = vmatpush1.xpose.msra.mxu0 0.0
    %3148 = vmatprep.subr.mxu0 0.0
    %3149 = vmatpush1.xpose.msra.mxu0 0.0
    %3150 = vmatprep.subr.mxu0 0.0
    %3151 = vmatpush1.xpose.msra.mxu0 0.0
    %3152 = vmatprep.subr.mxu0 0.0
    %3153 = vmatpush1.xpose.msra.mxu0 0.0
    %3154 = vmatprep.subr.mxu0 0.0
    %3155 = vmatpush1.xpose.msra.mxu0 0.0
    %3156 = vmatprep.subr.mxu0 0.0
    %3157 = vmatpush1.xpose.msra.mxu0 0.0
    %3158 = vmatprep.subr.mxu0 0.0
    %3159 = vmatpush1.xpose.msra.mxu0 0.0
    %3160 = vmatprep.subr.mxu0 0.0
    %3161 = vmatpush1.xpose.msra.mxu0 0.0
    %3162 = vmatprep.subr.mxu0 0.0
    %3163 = vmatpush1.xpose.msra.mxu0 0.0
    %3164 = vmatprep.subr.mxu0 0.0
    %3165 = vmatpush1.xpose.msra.mxu0 0.0
    %3166 = vmatprep.subr.mxu0 0.0
    %3167 = vmatpush1.xpose.msra.mxu0 0.0
    %3168 = vmatprep.subr.mxu0 0.0
    %3169 = vmatpush1.xpose.msra.mxu0 0.0
    %3170 = vmatprep.subr.mxu0 0.0
    %3171 = vmatpush1.xpose.msra.mxu0 0.0
    %3172 = vmatprep.subr.mxu0 0.0
    %3173 = vmatpush1.xpose.msra.mxu0 0.0
    %3174 = vmatprep.subr.mxu0 0.0
    %3175 = vmatpush1.xpose.msra.mxu0 0.0
    %3176 = vmatprep.subr.mxu0 0.0
    %3177 = vmatpush1.xpose.msra.mxu0 0.0
    %3178 = vmatprep.subr.mxu0 0.0
    %3179 = vmatpush1.xpose.msra.mxu0 0.0
    %3180 = vmatprep.mubr.f32.mxu0 0.0
    %3181 = vmatmul.mubr.f32.gmra.mrb[0].mxu0 %v3110
    %v3182 = vpop.f32.mrb[0].mxu0
    %v3183 = vadd.f32 0.0, %v3182
    %v3184 = vpop.f32.mrb[0].mxu0
    %3185 = vdwg.mxu0
    %v3186 = vmul.f32 %v3101, 0.17677669
    %v3187 = vmul.f32 %v3183, 0.17677669
    %v3188 = vsel %vm1720, %v3186, -inf
    %3189 = vmax.xlane.f32.xlu0 %v3188
    %v3190 = vpop.xlane.xlu0 %3189
    %v3191 = vsel %vm1720, %v3187, -inf
    %3192 = vmax.xlane.f32.xlu0 %v3191
    %v3193 = vpop.xlane.xlu0 %3192
    %v3194 = vsub.f32 %v3186, %v3190
    %v3195 = vsub.f32 %v3187, %v3193
    %v3196 = vmul.f32 %v3194, 1.442695
    %v3197 = vpow.pop %v3196
    %v3198 = vmul.f32 %v3195, 1.442695
    %v3199 = vpow.pop %v3198
    %v3200 = vsel %vm1720, %v3197, 0.0
    %3201 = vadd.xlane.f32.xlu0 %v3200
    %v3202 = vpop.xlane.xlu0 %3201
    %v3203 = vsel %vm1720, %v3199, 0.0
    %3204 = vadd.xlane.f32.xlu0 %v3203
    %v3205 = vpop.xlane.xlu0 %3204
    %v3206 = vrcp.pop %v3202
    %v3207 = vrcp.pop %v3205
    %v3208 = vmul.f32 %v3197, %v3206
    %v3209 = vmul.f32 %v3199, %v3207
    %3210 = vrot.lane.b32.xlu0 %v1940, 72
    %v3211 = vpop.permute.xlu0 %3210
    %3212 = vrot.lane.b32.xlu0 %v1945, 72
    %v3213 = vpop.permute.xlu0 %3212
    %v3217 = vsel %vm1720, %v3208, 0
    %3219 = vmatprep.subr.mxu0 0.0
    %3220 = vmatpush1.msra.mxu0 %v3211
    %3221 = vmatprep.subr.mxu0 0.0
    %3222 = vmatpush1.msra.mxu0 %v3213
    %3223 = vmatprep.subr.mxu0 0.0
    %3224 = vmatpush1.msra.mxu0 0.0
    %3225 = vmatprep.subr.mxu0 0.0
    %3226 = vmatpush1.msra.mxu0 0.0
    %3227 = vmatprep.subr.mxu0 0.0
    %3228 = vmatpush1.msra.mxu0 0.0
    %3229 = vmatprep.subr.mxu0 0.0
    %3230 = vmatpush1.msra.mxu0 0.0
    %3231 = vmatprep.subr.mxu0 0.0
    %3232 = vmatpush1.msra.mxu0 0.0
    %3233 = vmatprep.subr.mxu0 0.0
    %3234 = vmatpush1.msra.mxu0 0.0
    %3235 = vmatprep.subr.mxu0 0.0
    %3236 = vmatpush1.msra.mxu0 0.0
    %3237 = vmatprep.subr.mxu0 0.0
    %3238 = vmatpush1.msra.mxu0 0.0
    %3239 = vmatprep.subr.mxu0 0.0
    %3240 = vmatpush1.msra.mxu0 0.0
    %3241 = vmatprep.subr.mxu0 0.0
    %3242 = vmatpush1.msra.mxu0 0.0
    %3243 = vmatprep.subr.mxu0 0.0
    %3244 = vmatpush1.msra.mxu0 0.0
    %3245 = vmatprep.subr.mxu0 0.0
    %3246 = vmatpush1.msra.mxu0 0.0
    %3247 = vmatprep.subr.mxu0 0.0
    %3248 = vmatpush1.msra.mxu0 0.0
    %3249 = vmatprep.subr.mxu0 0.0
    %3250 = vmatpush1.msra.mxu0 0.0
    %3251 = vmatprep.subr.mxu0 0.0
    %3252 = vmatpush1.msra.mxu0 0.0
    %3253 = vmatprep.subr.mxu0 0.0
    %3254 = vmatpush1.msra.mxu0 0.0
    %3255 = vmatprep.subr.mxu0 0.0
    %3256 = vmatpush1.msra.mxu0 0.0
    %3257 = vmatprep.subr.mxu0 0.0
    %3258 = vmatpush1.msra.mxu0 0.0
    %3259 = vmatprep.subr.mxu0 0.0
    %3260 = vmatpush1.msra.mxu0 0.0
    %3261 = vmatprep.subr.mxu0 0.0
    %3262 = vmatpush1.msra.mxu0 0.0
    %3263 = vmatprep.subr.mxu0 0.0
    %3264 = vmatpush1.msra.mxu0 0.0
    %3265 = vmatprep.subr.mxu0 0.0
    %3266 = vmatpush1.msra.mxu0 0.0
    %3267 = vmatprep.subr.mxu0 0.0
    %3268 = vmatpush1.msra.mxu0 0.0
    %3269 = vmatprep.subr.mxu0 0.0
    %3270 = vmatpush1.msra.mxu0 0.0
    %3271 = vmatprep.subr.mxu0 0.0
    %3272 = vmatpush1.msra.mxu0 0.0
    %3273 = vmatprep.subr.mxu0 0.0
    %3274 = vmatpush1.msra.mxu0 0.0
    %3275 = vmatprep.subr.mxu0 0.0
    %3276 = vmatpush1.msra.mxu0 0.0
    %3277 = vmatprep.subr.mxu0 0.0
    %3278 = vmatpush1.msra.mxu0 0.0
    %3279 = vmatprep.subr.mxu0 0.0
    %3280 = vmatpush1.msra.mxu0 0.0
    %3281 = vmatprep.subr.mxu0 0.0
    %3282 = vmatpush1.msra.mxu0 0.0
    %3283 = vmatprep.mubr.f32.mxu0 0.0
    %3284 = vmatmul.mubr.f32.gmra.mrb[0].mxu0 %v3217
    %v3285 = vpop.f32.mrb[0].mxu0
    %v3286 = vadd.f32 0.0, %v3285
    %v3287 = vpop.f32.mrb[0].mxu0
    %3288 = vdwg.mxu0
    %3289 = vrot.lane.b32.xlu0 %v1950, 72
    %v3290 = vpop.permute.xlu0 %3289
    %3291 = vrot.lane.b32.xlu0 %v1955, 72
    %v3292 = vpop.permute.xlu0 %3291
    %v3296 = vsel %vm1720, %v3209, 0
    %3298 = vmatprep.subr.mxu0 0.0
    %3299 = vmatpush1.msra.mxu0 %v3290
    %3300 = vmatprep.subr.mxu0 0.0
    %3301 = vmatpush1.msra.mxu0 %v3292
    %3302 = vmatprep.subr.mxu0 0.0
    %3303 = vmatpush1.msra.mxu0 0.0
    %3304 = vmatprep.subr.mxu0 0.0
    %3305 = vmatpush1.msra.mxu0 0.0
    %3306 = vmatprep.subr.mxu0 0.0
    %3307 = vmatpush1.msra.mxu0 0.0
    %3308 = vmatprep.subr.mxu0 0.0
    %3309 = vmatpush1.msra.mxu0 0.0
    %3310 = vmatprep.subr.mxu0 0.0
    %3311 = vmatpush1.msra.mxu0 0.0
    %3312 = vmatprep.subr.mxu0 0.0
    %3313 = vmatpush1.msra.mxu0 0.0
    %3314 = vmatprep.subr.mxu0 0.0
    %3315 = vmatpush1.msra.mxu0 0.0
    %3316 = vmatprep.subr.mxu0 0.0
    %3317 = vmatpush1.msra.mxu0 0.0
    %3318 = vmatprep.subr.mxu0 0.0
    %3319 = vmatpush1.msra.mxu0 0.0
    %3320 = vmatprep.subr.mxu0 0.0
    %3321 = vmatpush1.msra.mxu0 0.0
    %3322 = vmatprep.subr.mxu0 0.0
    %3323 = vmatpush1.msra.mxu0 0.0
    %3324 = vmatprep.subr.mxu0 0.0
    %3325 = vmatpush1.msra.mxu0 0.0
    %3326 = vmatprep.subr.mxu0 0.0
    %3327 = vmatpush1.msra.mxu0 0.0
    %3328 = vmatprep.subr.mxu0 0.0
    %3329 = vmatpush1.msra.mxu0 0.0
    %3330 = vmatprep.subr.mxu0 0.0
    %3331 = vmatpush1.msra.mxu0 0.0
    %3332 = vmatprep.subr.mxu0 0.0
    %3333 = vmatpush1.msra.mxu0 0.0
    %3334 = vmatprep.subr.mxu0 0.0
    %3335 = vmatpush1.msra.mxu0 0.0
    %3336 = vmatprep.subr.mxu0 0.0
    %3337 = vmatpush1.msra.mxu0 0.0
    %3338 = vmatprep.subr.mxu0 0.0
    %3339 = vmatpush1.msra.mxu0 0.0
    %3340 = vmatprep.subr.mxu0 0.0
    %3341 = vmatpush1.msra.mxu0 0.0
    %3342 = vmatprep.subr.mxu0 0.0
    %3343 = vmatpush1.msra.mxu0 0.0
    %3344 = vmatprep.subr.mxu0 0.0
    %3345 = vmatpush1.msra.mxu0 0.0
    %3346 = vmatprep.subr.mxu0 0.0
    %3347 = vmatpush1.msra.mxu0 0.0
    %3348 = vmatprep.subr.mxu0 0.0
    %3349 = vmatpush1.msra.mxu0 0.0
    %3350 = vmatprep.subr.mxu0 0.0
    %3351 = vmatpush1.msra.mxu0 0.0
    %3352 = vmatprep.subr.mxu0 0.0
    %3353 = vmatpush1.msra.mxu0 0.0
    %3354 = vmatprep.subr.mxu0 0.0
    %3355 = vmatpush1.msra.mxu0 0.0
    %3356 = vmatprep.subr.mxu0 0.0
    %3357 = vmatpush1.msra.mxu0 0.0
    %3358 = vmatprep.subr.mxu0 0.0
    %3359 = vmatpush1.msra.mxu0 0.0
    %3360 = vmatprep.subr.mxu0 0.0
    %3361 = vmatpush1.msra.mxu0 0.0
    %3362 = vmatprep.mubr.f32.mxu0 0.0
    %3363 = vmatmul.mubr.f32.gmra.mrb[0].mxu0 %v3296
    %v3364 = vpop.f32.mrb[0].mxu0
    %v3365 = vadd.f32 0.0, %v3364
    %v3366 = vpop.f32.mrb[0].mxu0
    %3367 = vdwg.mxu0
    %3370 = vrot.lane.b32.xlu0 %v3286, 88
    %v3371 = vpop.permute.xlu0 %3370
    %3372 = vrot.lane.b32.xlu0 %v3365, 88
    %v3373 = vpop.permute.xlu0 %3372
    %v3376 = vadd.f32 %v112, %v3371
    %v3377 = vadd.f32 %v117, %v3373
    %3380 = vrot.lane.b32.xlu0 %v2308, 64
    %v3381 = vpop.permute.xlu0 %3380
    %3382 = vrot.lane.b32.xlu0 %v2309, 64
    %v3383 = vpop.permute.xlu0 %3382
    %3388 = vrot.lane.b32.xlu0 %v2664, 64
    %v3389 = vpop.permute.xlu0 %3388
    %3390 = vrot.lane.b32.xlu0 %v2665, 64
    %v3391 = vpop.permute.xlu0 %3390
    %3396 = vrot.lane.b32.xlu0 %v3020, 64
    %v3397 = vpop.permute.xlu0 %3396
    %3398 = vrot.lane.b32.xlu0 %v3021, 64
    %v3399 = vpop.permute.xlu0 %3398
    %3404 = vrot.lane.b32.xlu0 %v3376, 64
    %v3405 = vpop.permute.xlu0 %3404
    %3406 = vrot.lane.b32.xlu0 %v3377, 64
    %v3407 = vpop.permute.xlu0 %3406
    %v3410 = vsel %vm127, %v3381, %v3389
    %v3411 = vsel %vm127, %v3383, %v3391
    %v3412 = vsel %vm1720, %v3410, %v3397
    %v3413 = vsel %vm1720, %v3411, %v3399
    %v3414 = vsel %vm1725, %v3412, %v3405
    %v3415 = vsel %vm1725, %v3413, %v3407
    %3416 = vrot.lane.b32.xlu0 %v120, 32
    %v3417 = vpop.permute.xlu0 %3416
    %3418 = vrot.lane.b32.xlu0 %v121, 32
    %v3419 = vpop.permute.xlu0 %3418
    %3420 = vrot.lane.b32.xlu0 %v122, 32
    %v3421 = vpop.permute.xlu0 %3420
    %3422 = vrot.lane.b32.xlu0 %v123, 32
    %v3423 = vpop.permute.xlu0 %3422
    %3428 = vrot.lane.b32.xlu0 %v1734, 32
    %v3429 = vpop.permute.xlu0 %3428
    %v3432 = vsel %vm1736, %v3414, 0
    %v3435 = vsel %vm1736, %v3415, 0
    %3437 = vmatprep.subr.mxu0 0.0
    %3438 = vmatpush1.msra.mxu0 %v3417
    %3439 = vmatprep.subr.mxu0 0.0
    %3440 = vmatpush1.msra.mxu0 %v3419
    %3441 = vmatprep.subr.mxu0 0.0
    %3442 = vmatpush1.msra.mxu0 %v3421
    %3443 = vmatprep.subr.mxu0 0.0
    %3444 = vmatpush1.msra.mxu0 %v3423
    %3445 = vmatprep.subr.mxu0 0.0
    %3446 = vmatpush1.msra.mxu0 0.0
    %3447 = vmatprep.subr.mxu0 0.0
    %3448 = vmatpush1.msra.mxu0 0.0
    %3449 = vmatprep.subr.mxu0 0.0
    %3450 = vmatpush1.msra.mxu0 0.0
    %3451 = vmatprep.subr.mxu0 0.0
    %3452 = vmatpush1.msra.mxu0 0.0
    %3453 = vmatprep.subr.mxu0 0.0
    %3454 = vmatpush1.msra.mxu0 0.0
    %3455 = vmatprep.subr.mxu0 0.0
    %3456 = vmatpush1.msra.mxu0 0.0
    %3457 = vmatprep.subr.mxu0 0.0
    %3458 = vmatpush1.msra.mxu0 0.0
    %3459 = vmatprep.subr.mxu0 0.0
    %3460 = vmatpush1.msra.mxu0 0.0
    %3461 = vmatprep.subr.mxu0 0.0
    %3462 = vmatpush1.msra.mxu0 0.0
    %3463 = vmatprep.subr.mxu0 0.0
    %3464 = vmatpush1.msra.mxu0 0.0
    %3465 = vmatprep.subr.mxu0 0.0
    %3466 = vmatpush1.msra.mxu0 0.0
    %3467 = vmatprep.subr.mxu0 0.0
    %3468 = vmatpush1.msra.mxu0 0.0
    %3469 = vmatprep.subr.mxu0 0.0
    %3470 = vmatpush1.msra.mxu0 0.0
    %3471 = vmatprep.subr.mxu0 0.0
    %3472 = vmatpush1.msra.mxu0 0.0
    %3473 = vmatprep.subr.mxu0 0.0
    %3474 = vmatpush1.msra.mxu0 0.0
    %3475 = vmatprep.subr.mxu0 0.0
    %3476 = vmatpush1.msra.mxu0 0.0
    %3477 = vmatprep.subr.mxu0 0.0
    %3478 = vmatpush1.msra.mxu0 0.0
    %3479 = vmatprep.subr.mxu0 0.0
    %3480 = vmatpush1.msra.mxu0 0.0
    %3481 = vmatprep.subr.mxu0 0.0
    %3482 = vmatpush1.msra.mxu0 0.0
    %3483 = vmatprep.subr.mxu0 0.0
    %3484 = vmatpush1.msra.mxu0 0.0
    %3485 = vmatprep.subr.mxu0 0.0
    %3486 = vmatpush1.msra.mxu0 0.0
    %3487 = vmatprep.subr.mxu0 0.0
    %3488 = vmatpush1.msra.mxu0 0.0
    %3489 = vmatprep.subr.mxu0 0.0
    %3490 = vmatpush1.msra.mxu0 0.0
    %3491 = vmatprep.subr.mxu0 0.0
    %3492 = vmatpush1.msra.mxu0 0.0
    %3493 = vmatprep.subr.mxu0 0.0
    %3494 = vmatpush1.msra.mxu0 0.0
    %3495 = vmatprep.subr.mxu0 0.0
    %3496 = vmatpush1.msra.mxu0 0.0
    %3497 = vmatprep.subr.mxu0 0.0
    %3498 = vmatpush1.msra.mxu0 0.0
    %3499 = vmatprep.subr.mxu0 0.0
    %3500 = vmatpush1.msra.mxu0 0.0
    %3501 = vmatprep.mubr.f32.mxu0 0.0
    %3502 = vmatmul.mubr.f32.gmra.mrb[0].mxu0 %v3432
    %v3503 = vpop.f32.mrb[0].mxu0
    %v3504 = vadd.f32 %v3429, %v3503
    %v3505 = vpop.f32.mrb[0].mxu0
    %3506 = vmatprep.mubr.f32.mxu0 0.0
    %3507 = vmatmul.mubr.f32.gmra.mrb[0].mxu0 %v3435
    %v3508 = vpop.f32.mrb[0].mxu0
    %v3509 = vadd.f32 %v3429, %v3508
    %v3510 = vpop.f32.mrb[0].mxu0
    %3511 = vdwg.mxu0
    %v3512 = vmax.f32 %v3504, 0.0
    %v3513 = vmax.f32 %v3509, 0.0
    %v3514 = vadd.f32 %v3414, %v3512
    %v3515 = vadd.f32 %v3415, %v3513
    %3516 = vst.msk [vmem:[#allocation2] sm:$0xff] %vm1736, %v3514
    %3517 = vst.msk [vmem:[#allocation2 + $0x8] sm:$0xff] %vm1736, %v3515
    // Predicated region
    $region26: #{isab_forward.1} parent=1 // pred_check
      _
    $region27: #{isab_forward.1} parent=1 // pred_check_branch
      %3519 = sbr.rel (0) target = $region29
    $region28: #{isab_forward.1} parent=1 // pred_region
      %s3521 = ssub.s32 256, 256
      %3522 = vsyncadd [#allocation3], %s3521
      %s3523 = sshll.u32 [#allocation2], 4
      %s3524 = int_to_ptr.vmem [resolvable:$true] %s3523
      %3529 = dma.vmem_to_hbm [thread:$0]  %s3524, 256, %s6, [#allocation3], 128, 128, 8
    $region29: #{isab_forward.1} parent=1 // pred_fallthru
      _
    // Predicated region
    $region30: #{isab_forward.1} parent=1 // pred_check
      _
    $region31: #{isab_forward.1} parent=1 // pred_check_branch
      %3531 = sbr.rel (0) target = $region33
    $region32: #{isab_forward.1} parent=1 // pred_region
      %3532 = dma.done [#allocation3], 256
    $region33: #{isab_forward.1} parent=1 // pred_fallthru
      _
    %3533 = vsyncpa [#allocation3], 1

</llo_original>
